<compile_context>
chip_gen: v6e
topology: v6e:2x2x1
jax: 0.10.0
libtpu: 0.0.40
codegen_flags: <defaults>
</compile_context>

<pallas_src>
import math

import jax
import jax.numpy as jnp
from jax.experimental import pallas as pl
from jax.experimental.pallas import tpu as pltpu

IN_DIM = 32 * 32 * 3     # 3072
HID = 100                # logical hidden width (PyTorch model)
HID_PAD = 128            # lane-padded hidden width (zero-padded, math-identical)
EPS = 1e-8               # PyTorch cosine_similarity default eps

PRINT_LOSS = False       # flag-gate the reference's print() (host callback)

_FLOPS_PER_ROW = 2 * (IN_DIM * HID_PAD + 2 * HID_PAD * HID_PAD + HID_PAD * IN_DIM)


def _weight_bytes():
    bf16 = 2 * (IN_DIM * HID_PAD + 2 * HID_PAD * HID_PAD + HID_PAD * IN_DIM)
    f32_bias = 4 * (3 * HID_PAD + IN_DIM)
    return bf16 + f32_bias


def _batch_tile(batch):
    """Largest preferred tile that divides the batch (falls back to full batch)."""
    for t in (256, 128, 64, 32, 16, 8):
        if batch % t == 0:
            return t
    return batch


def _weight_specs():
    # Constant index_map -> weights fetched once per call, resident across grid.
    shapes = [(IN_DIM, HID_PAD), (1, HID_PAD),
              (HID_PAD, HID_PAD), (1, HID_PAD),
              (HID_PAD, HID_PAD), (1, HID_PAD),
              (HID_PAD, IN_DIM), (1, IN_DIM)]
    return [pl.BlockSpec(s, lambda i: (0, 0)) for s in shapes]


# ---------------------------------------------------------------------------
# Shared MLP body: (Linear->ReLU) x3, Linear->Sigmoid.
# bf16 activations/weights into the MXU, f32 accumulation, f32 output.
# ---------------------------------------------------------------------------
def _mlp_body(x_bf16, w1, b1, w2, b2, w3, b3, w4, b4):
    h = jnp.dot(x_bf16, w1, preferred_element_type=jnp.float32) + b1
    h = jnp.maximum(h, 0.0).astype(jnp.bfloat16)
    h = jnp.dot(h, w2, preferred_element_type=jnp.float32) + b2
    h = jnp.maximum(h, 0.0).astype(jnp.bfloat16)
    h = jnp.dot(h, w3, preferred_element_type=jnp.float32) + b3
    h = jnp.maximum(h, 0.0).astype(jnp.bfloat16)
    y = jnp.dot(h, w4, preferred_element_type=jnp.float32) + b4
    return jax.nn.sigmoid(y)                                   # f32


# ---------------------------------------------------------------------------
# Kernel 1 (predict=True): the prep MLP on one batch tile.
# ---------------------------------------------------------------------------
def prep_kernel(x_ref, w1_ref, b1_ref, w2_ref, b2_ref, w3_ref, b3_ref,
                w4_ref, b4_ref, out_ref):
    out_ref[...] = _mlp_body(
        x_ref[...], w1_ref[...], b1_ref[...], w2_ref[...], b2_ref[...],
        w3_ref[...], b3_ref[...], w4_ref[...], b4_ref[...])


# ---------------------------------------------------------------------------
# Kernel 2 (predict=False): fused MLP + loss reductions, accumulated per
# batch tile in (1, D) scratch rows; pred never leaves VMEM.
# ---------------------------------------------------------------------------
def _make_loss_kernel(total_rows):
    inv_count = 1.0 / float(total_rows * IN_DIM)

    def loss_kernel(x_ref, w1_ref, b1_ref, w2_ref, b2_ref, w3_ref, b3_ref,
                    w4_ref, b4_ref, loss_ref, mse_ref,
                    px_acc, pp_acc, xx_acc, sq_acc):
        i = pl.program_id(0)

        @pl.when(i == 0)
        def _():
            px_acc[...] = jnp.zeros_like(px_acc)
            pp_acc[...] = jnp.zeros_like(pp_acc)
            xx_acc[...] = jnp.zeros_like(xx_acc)
            sq_acc[...] = jnp.zeros_like(sq_acc)

        x = x_ref[...]                                          # (TB, D) f32
        p = _mlp_body(x.astype(jnp.bfloat16),
                      w1_ref[...], b1_ref[...], w2_ref[...], b2_ref[...],
                      w3_ref[...], b3_ref[...], w4_ref[...], b4_ref[...])

        # Single pass over the (TB, D) tile; only four (1, D) accumulator rows
        # stay live across tiles (no full-width temporaries kept around).
        px_acc[...] += jnp.sum(p * x, axis=0, keepdims=True)
        pp_acc[...] += jnp.sum(p * p, axis=0, keepdims=True)
        xx_acc[...] += jnp.sum(x * x, axis=0, keepdims=True)
        d = p - x
        sq_acc[...] += jnp.sum(d * d, axis=0, keepdims=True)

        @pl.when(i == pl.num_programs(0) - 1)
        def _():
            # PyTorch cosine_similarity clamps EACH norm to eps separately.
            n_p = jnp.maximum(jnp.sqrt(pp_acc[...]), EPS)
            n_x = jnp.maximum(jnp.sqrt(xx_acc[...]), EPS)
            loss_ref[...] = 1.0 - px_acc[...] / (n_p * n_x)     # (1, D)
            tot = jnp.sum(sq_acc[...], axis=1, keepdims=True)   # (1, 1)
            mse_ref[0, 0] = tot[0, 0] * inv_count

    return loss_kernel


# ---------------------------------------------------------------------------
# JIT'ed wrappers (one pallas_call each; no host sync inside).
# ---------------------------------------------------------------------------
@jax.jit
def prep_forward(x, params):
    B = x.shape[0]
    tb = _batch_tile(B)
    cost = pl.CostEstimate(
        flops=_FLOPS_PER_ROW * B,
        transcendentals=B * IN_DIM,
        bytes_accessed=_weight_bytes() + B * IN_DIM * (2 + 4))
    return pl.pallas_call(
        prep_kernel,
        out_shape=jax.ShapeDtypeStruct((B, IN_DIM), jnp.float32),
        grid_spec=pltpu.PrefetchScalarGridSpec(
            num_scalar_prefetch=0,
            grid=(B // tb,),
            in_specs=[pl.BlockSpec((tb, IN_DIM), lambda i: (i, 0))]
                     + _weight_specs(),
            out_specs=pl.BlockSpec((tb, IN_DIM), lambda i: (i, 0))),
        compiler_params=pltpu.CompilerParams(
            dimension_semantics=("parallel",)),
        cost_estimate=cost,
    )(x.astype(jnp.bfloat16), *params)


@jax.jit
def train_forward(x, params):
    B = x.shape[0]
    tb = _batch_tile(B)
    cost = pl.CostEstimate(
        flops=_FLOPS_PER_ROW * B + 8 * B * IN_DIM,
        transcendentals=B * IN_DIM,
        bytes_accessed=_weight_bytes() + B * IN_DIM * 4 + IN_DIM * 4 + 4)
    loss, mse = pl.pallas_call(
        _make_loss_kernel(B),
        out_shape=(jax.ShapeDtypeStruct((1, IN_DIM), jnp.float32),
                   jax.ShapeDtypeStruct((1, 1), jnp.float32)),
        grid_spec=pltpu.PrefetchScalarGridSpec(
            num_scalar_prefetch=0,
            grid=(B // tb,),
            in_specs=[pl.BlockSpec((tb, IN_DIM), lambda i: (i, 0))]
                     + _weight_specs(),
            out_specs=(pl.BlockSpec((1, IN_DIM), lambda i: (0, 0)),
                       pl.BlockSpec((1, 1), lambda i: (0, 0),
                                    memory_space=pltpu.MemorySpace.SMEM)),
            scratch_shapes=[pltpu.VMEM((1, IN_DIM), jnp.float32)] * 4),
        compiler_params=pltpu.CompilerParams(
            dimension_semantics=("arbitrary",)),   # batch-dim reduction
        cost_estimate=cost,
    )(x, *params)
    loss = loss.reshape(IN_DIM)
    mse = mse.reshape(())
    if PRINT_LOSS:
        # Reference does print(f'CS-LOSS: {loss}\tMSE-LOSS: {mse}').
        jax.debug.print("CS-LOSS: {l}\tMSE-LOSS: {m}", l=loss, m=mse)
    # PSNR in the reference is computed but never used -> omitted.
    return jnp.abs(mse - 3e-05) + 3e-05


def net_forward(x, predict, params):
    if predict:
        return prep_forward(x, params)
    return train_forward(x, params)


# ---------------------------------------------------------------------------
# Parameter init: deterministic, mirroring PyTorch Linear default
# uniform(-1/sqrt(fan_in), 1/sqrt(fan_in)).  Weights stored (in, out),
# zero-padded to HID_PAD lanes, and cast to bf16 (biases stay f32).
# ---------------------------------------------------------------------------
def init_prep_params(key):
    shapes = [(IN_DIM, HID), (HID, HID), (HID, HID), (HID, IN_DIM)]
    padded = [(IN_DIM, HID_PAD), (HID_PAD, HID_PAD),
              (HID_PAD, HID_PAD), (HID_PAD, IN_DIM)]
    params = []
    for (fin, fout), (pin, pout) in zip(shapes, padded):
        key, kw, kb = jax.random.split(key, 3)
        bound = 1.0 / math.sqrt(fin)
        w = jax.random.uniform(kw, (fin, fout), jnp.float32, -bound, bound)
        b = jax.random.uniform(kb, (1, fout), jnp.float32, -bound, bound)
        w_pad = jnp.zeros((pin, pout), jnp.float32).at[:fin, :fout].set(w)
        b_pad = jnp.zeros((1, pout), jnp.float32).at[:, :fout].set(b)
        params += [w_pad.astype(jnp.bfloat16), b_pad]
    return params


if __name__ == "__main__":
    key = jax.random.PRNGKey(0)
    kx, kp = jax.random.split(key)
    params = init_prep_params(kp)

    # Small smoke test (B=8): single batch tile, grid=1.
    x_small = jax.random.uniform(kx, (8, IN_DIM), jnp.float32)
    out_loss = net_forward(x_small, False, params)
    jax.block_until_ready(out_loss)
    assert out_loss.shape == ()

    out_img = net_forward(x_small, True, params)
    jax.block_until_ready(out_img)
    assert out_img.shape == (8, IN_DIM)

    # Larger batch exercising the batch-tile grid (2 tiles of 256) on both paths,
    # per the perf feedback (weights resident, parallel/arbitrary grid axes).
    x_big = jax.random.uniform(kx, (512, IN_DIM), jnp.float32)
    out_loss_big = net_forward(x_big, False, params)
    out_img_big = net_forward(x_big, True, params)
    jax.block_until_ready((out_loss_big, out_img_big))
    assert out_loss_big.shape == ()
    assert out_img_big.shape == (512, IN_DIM)

    print("KERNEL_OK")
</pallas_src>

<mosaic_0001>
module attributes {stable_mosaic.version = 11 : i64} {
  func.func @loss_kernel(%arg0: i32, %arg1: memref<8x3072xf32, #tpu.memory_space<vmem>>, %arg2: memref<3072x128xbf16, #tpu.memory_space<vmem>>, %arg3: memref<1x128xf32, #tpu.memory_space<vmem>>, %arg4: memref<128x128xbf16, #tpu.memory_space<vmem>>, %arg5: memref<1x128xf32, #tpu.memory_space<vmem>>, %arg6: memref<128x128xbf16, #tpu.memory_space<vmem>>, %arg7: memref<1x128xf32, #tpu.memory_space<vmem>>, %arg8: memref<128x3072xbf16, #tpu.memory_space<vmem>>, %arg9: memref<1x3072xf32, #tpu.memory_space<vmem>>, %arg10: memref<1x3072xf32, #tpu.memory_space<vmem>>, %arg11: memref<1x1xf32, #tpu.memory_space<smem>>, %arg12: memref<1x3072xf32, #tpu.memory_space<vmem>>, %arg13: memref<1x3072xf32, #tpu.memory_space<vmem>>, %arg14: memref<1x3072xf32, #tpu.memory_space<vmem>>, %arg15: memref<1x3072xf32, #tpu.memory_space<vmem>>) attributes {dimension_semantics = [#tpu.dimension_semantics<arbitrary>], iteration_bounds = array<i64: 1>, scalar_prefetch = 0 : i64, scratch_operands = 4 : i64, tpu.core_type = #tpu.core_type<tc>, window_params = [{transform_indices = @transform_0, window_bounds = array<i64: 8, 3072>}, {pipeline_mode = #tpu.pipeline_mode<synchronous>, transform_indices = @transform_1, window_bounds = array<i64: 3072, 128>}, {pipeline_mode = #tpu.pipeline_mode<synchronous>, transform_indices = @transform_2, window_bounds = array<i64: 1, 128>}, {pipeline_mode = #tpu.pipeline_mode<synchronous>, transform_indices = @transform_3, window_bounds = array<i64: 128, 128>}, {pipeline_mode = #tpu.pipeline_mode<synchronous>, transform_indices = @transform_4, window_bounds = array<i64: 1, 128>}, {pipeline_mode = #tpu.pipeline_mode<synchronous>, transform_indices = @transform_5, window_bounds = array<i64: 128, 128>}, {pipeline_mode = #tpu.pipeline_mode<synchronous>, transform_indices = @transform_6, window_bounds = array<i64: 1, 128>}, {pipeline_mode = #tpu.pipeline_mode<synchronous>, transform_indices = @transform_7, window_bounds = array<i64: 128, 3072>}, {pipeline_mode = #tpu.pipeline_mode<synchronous>, transform_indices = @transform_8, window_bounds = array<i64: 1, 3072>}, {pipeline_mode = #tpu.pipeline_mode<synchronous>, transform_indices = @transform_9, window_bounds = array<i64: 1, 3072>}, {transform_indices = @transform_10, window_bounds = array<i64: 1, 1>}]} {
    %c0_i32 = arith.constant 0 : i32
    %0 = arith.cmpi eq, %arg0, %c0_i32 : i32
    %1 = arith.extui %0 : i1 to i32
    %c0_i32_0 = arith.constant 0 : i32
    %2 = arith.cmpi ne, %1, %c0_i32_0 : i32
    scf.if %2 {
      %cst_47 = arith.constant 0.000000e+00 : f32
      %67 = vector.broadcast %cst_47 : f32 to vector<1x3072xf32>
      %c0_48 = arith.constant 0 : index
      %c0_49 = arith.constant 0 : index
      %68 = vector.load %arg12[%c0_48, %c0_49] : memref<1x3072xf32, #tpu.memory_space<vmem>>, vector<1x3072xf32>
      tpu.vector_store %arg12[%c0_48, %c0_49], %67 {strides = array<i32>} : memref<1x3072xf32, #tpu.memory_space<vmem>>, vector<1x3072xf32>,
      %cst_50 = arith.constant 0.000000e+00 : f32
      %69 = vector.broadcast %cst_50 : f32 to vector<1x3072xf32>
      %c0_51 = arith.constant 0 : index
      %c0_52 = arith.constant 0 : index
      %70 = vector.load %arg13[%c0_51, %c0_52] : memref<1x3072xf32, #tpu.memory_space<vmem>>, vector<1x3072xf32>
      tpu.vector_store %arg13[%c0_51, %c0_52], %69 {strides = array<i32>} : memref<1x3072xf32, #tpu.memory_space<vmem>>, vector<1x3072xf32>,
      %cst_53 = arith.constant 0.000000e+00 : f32
      %71 = vector.broadcast %cst_53 : f32 to vector<1x3072xf32>
      %c0_54 = arith.constant 0 : index
      %c0_55 = arith.constant 0 : index
      %72 = vector.load %arg14[%c0_54, %c0_55] : memref<1x3072xf32, #tpu.memory_space<vmem>>, vector<1x3072xf32>
      tpu.vector_store %arg14[%c0_54, %c0_55], %71 {strides = array<i32>} : memref<1x3072xf32, #tpu.memory_space<vmem>>, vector<1x3072xf32>,
      %cst_56 = arith.constant 0.000000e+00 : f32
      %73 = vector.broadcast %cst_56 : f32 to vector<1x3072xf32>
      %c0_57 = arith.constant 0 : index
      %c0_58 = arith.constant 0 : index
      %74 = vector.load %arg15[%c0_57, %c0_58] : memref<1x3072xf32, #tpu.memory_space<vmem>>, vector<1x3072xf32>
      tpu.vector_store %arg15[%c0_57, %c0_58], %73 {strides = array<i32>} : memref<1x3072xf32, #tpu.memory_space<vmem>>, vector<1x3072xf32>,
    } else {
    }
    %c0 = arith.constant 0 : index
    %c0_1 = arith.constant 0 : index
    %3 = vector.load %arg1[%c0, %c0_1] : memref<8x3072xf32, #tpu.memory_space<vmem>>, vector<8x3072xf32>
    %4 = arith.truncf %3 : vector<8x3072xf32> to vector<8x3072xbf16>
    %c0_2 = arith.constant 0 : index
    %c0_3 = arith.constant 0 : index
    %5 = vector.load %arg2[%c0_2, %c0_3] : memref<3072x128xbf16, #tpu.memory_space<vmem>>, vector<3072x128xbf16>
    %c0_4 = arith.constant 0 : index
    %c0_5 = arith.constant 0 : index
    %6 = vector.load %arg3[%c0_4, %c0_5] : memref<1x128xf32, #tpu.memory_space<vmem>>, vector<1x128xf32>
    %c0_6 = arith.constant 0 : index
    %c0_7 = arith.constant 0 : index
    %7 = vector.load %arg4[%c0_6, %c0_7] : memref<128x128xbf16, #tpu.memory_space<vmem>>, vector<128x128xbf16>
    %c0_8 = arith.constant 0 : index
    %c0_9 = arith.constant 0 : index
    %8 = vector.load %arg5[%c0_8, %c0_9] : memref<1x128xf32, #tpu.memory_space<vmem>>, vector<1x128xf32>
    %c0_10 = arith.constant 0 : index
    %c0_11 = arith.constant 0 : index
    %9 = vector.load %arg6[%c0_10, %c0_11] : memref<128x128xbf16, #tpu.memory_space<vmem>>, vector<128x128xbf16>
    %c0_12 = arith.constant 0 : index
    %c0_13 = arith.constant 0 : index
    %10 = vector.load %arg7[%c0_12, %c0_13] : memref<1x128xf32, #tpu.memory_space<vmem>>, vector<1x128xf32>
    %c0_14 = arith.constant 0 : index
    %c0_15 = arith.constant 0 : index
    %11 = vector.load %arg8[%c0_14, %c0_15] : memref<128x3072xbf16, #tpu.memory_space<vmem>>, vector<128x3072xbf16>
    %c0_16 = arith.constant 0 : index
    %c0_17 = arith.constant 0 : index
    %12 = vector.load %arg9[%c0_16, %c0_17] : memref<1x3072xf32, #tpu.memory_space<vmem>>, vector<1x3072xf32>
    %cst = arith.constant dense<0.000000e+00> : vector<8x128xf32>
    %13 = tpu.matmul %4, %5, %cst {dimension_numbers = #tpu.dot_dimension_numbers<[1], [0], [0], [1], [0, 0, 1, 1], [], []>} : vector<8x3072xbf16>, vector<3072x128xbf16>, vector<8x128xf32> -> vector<8x128xf32>
    %14 = vector.broadcast %6 : vector<1x128xf32> to vector<8x128xf32>
    %15 = arith.addf %13, %14 : vector<8x128xf32>
    %cst_18 = arith.constant 0.000000e+00 : f32
    %16 = vector.broadcast %cst_18 : f32 to vector<8x128xf32>
    %17 = arith.maximumf %15, %16 : vector<8x128xf32>
    %18 = arith.truncf %17 : vector<8x128xf32> to vector<8x128xbf16>
    %cst_19 = arith.constant dense<0.000000e+00> : vector<8x128xf32>
    %19 = tpu.matmul %18, %7, %cst_19 {dimension_numbers = #tpu.dot_dimension_numbers<[1], [0], [0], [1], [0, 0, 1, 1], [], []>} : vector<8x128xbf16>, vector<128x128xbf16>, vector<8x128xf32> -> vector<8x128xf32>
    %20 = vector.broadcast %8 : vector<1x128xf32> to vector<8x128xf32>
    %21 = arith.addf %19, %20 : vector<8x128xf32>
    %cst_20 = arith.constant 0.000000e+00 : f32
    %22 = vector.broadcast %cst_20 : f32 to vector<8x128xf32>
    %23 = arith.maximumf %21, %22 : vector<8x128xf32>
    %24 = arith.truncf %23 : vector<8x128xf32> to vector<8x128xbf16>
    %cst_21 = arith.constant dense<0.000000e+00> : vector<8x128xf32>
    %25 = tpu.matmul %24, %9, %cst_21 {dimension_numbers = #tpu.dot_dimension_numbers<[1], [0], [0], [1], [0, 0, 1, 1], [], []>} : vector<8x128xbf16>, vector<128x128xbf16>, vector<8x128xf32> -> vector<8x128xf32>
    %26 = vector.broadcast %10 : vector<1x128xf32> to vector<8x128xf32>
    %27 = arith.addf %25, %26 : vector<8x128xf32>
    %cst_22 = arith.constant 0.000000e+00 : f32
    %28 = vector.broadcast %cst_22 : f32 to vector<8x128xf32>
    %29 = arith.maximumf %27, %28 : vector<8x128xf32>
    %30 = arith.truncf %29 : vector<8x128xf32> to vector<8x128xbf16>
    %cst_23 = arith.constant dense<0.000000e+00> : vector<8x3072xf32>
    %31 = tpu.matmul %30, %11, %cst_23 {dimension_numbers = #tpu.dot_dimension_numbers<[1], [0], [0], [1], [0, 0, 1, 1], [], []>} : vector<8x128xbf16>, vector<128x3072xbf16>, vector<8x3072xf32> -> vector<8x3072xf32>
    %32 = vector.broadcast %12 : vector<1x3072xf32> to vector<8x3072xf32>
    %33 = arith.addf %31, %32 : vector<8x3072xf32>
    %34 = arith.negf %33 : vector<8x3072xf32>
    %35 = math.exp %34 : vector<8x3072xf32>
    %cst_24 = arith.constant 1.000000e+00 : f32
    %36 = vector.broadcast %cst_24 : f32 to vector<8x3072xf32>
    %37 = arith.addf %36, %35 : vector<8x3072xf32>
    %38 = arith.divf %36, %37 : vector<8x3072xf32>
    %c0_25 = arith.constant 0 : index
    %c0_26 = arith.constant 0 : index
    %39 = vector.load %arg12[%c0_25, %c0_26] : memref<1x3072xf32, #tpu.memory_space<vmem>>, vector<1x3072xf32>
    %40 = arith.mulf %38, %3 : vector<8x3072xf32>
    %cst_27 = arith.constant dense<0.000000e+00> : vector<3072xf32>
    %41 = vector.multi_reduction <add>, %40, %cst_27 [0] : vector<8x3072xf32> to vector<3072xf32>
    %42 = vector.shape_cast %41 : vector<3072xf32> to vector<1x3072xf32>
    %43 = arith.addf %39, %42 : vector<1x3072xf32>
    %c0_28 = arith.constant 0 : index
    %c0_29 = arith.constant 0 : index
    %44 = vector.load %arg12[%c0_28, %c0_29] : memref<1x3072xf32, #tpu.memory_space<vmem>>, vector<1x3072xf32>
    tpu.vector_store %arg12[%c0_28, %c0_29], %43 {strides = array<i32>} : memref<1x3072xf32, #tpu.memory_space<vmem>>, vector<1x3072xf32>,
    %c0_30 = arith.constant 0 : index
    %c0_31 = arith.constant 0 : index
    %45 = vector.load %arg13[%c0_30, %c0_31] : memref<1x3072xf32, #tpu.memory_space<vmem>>, vector<1x3072xf32>
    %46 = arith.mulf %38, %38 : vector<8x3072xf32>
    %cst_32 = arith.constant dense<0.000000e+00> : vector<3072xf32>
    %47 = vector.multi_reduction <add>, %46, %cst_32 [0] : vector<8x3072xf32> to vector<3072xf32>
    %48 = vector.shape_cast %47 : vector<3072xf32> to vector<1x3072xf32>
    %49 = arith.addf %45, %48 : vector<1x3072xf32>
    %c0_33 = arith.constant 0 : index
    %c0_34 = arith.constant 0 : index
    %50 = vector.load %arg13[%c0_33, %c0_34] : memref<1x3072xf32, #tpu.memory_space<vmem>>, vector<1x3072xf32>
    tpu.vector_store %arg13[%c0_33, %c0_34], %49 {strides = array<i32>} : memref<1x3072xf32, #tpu.memory_space<vmem>>, vector<1x3072xf32>,
    %c0_35 = arith.constant 0 : index
    %c0_36 = arith.constant 0 : index
    %51 = vector.load %arg14[%c0_35, %c0_36] : memref<1x3072xf32, #tpu.memory_space<vmem>>, vector<1x3072xf32>
    %52 = arith.mulf %3, %3 : vector<8x3072xf32>
    %cst_37 = arith.constant dense<0.000000e+00> : vector<3072xf32>
    %53 = vector.multi_reduction <add>, %52, %cst_37 [0] : vector<8x3072xf32> to vector<3072xf32>
    %54 = vector.shape_cast %53 : vector<3072xf32> to vector<1x3072xf32>
    %55 = arith.addf %51, %54 : vector<1x3072xf32>
    %c0_38 = arith.constant 0 : index
    %c0_39 = arith.constant 0 : index
    %56 = vector.load %arg14[%c0_38, %c0_39] : memref<1x3072xf32, #tpu.memory_space<vmem>>, vector<1x3072xf32>
    tpu.vector_store %arg14[%c0_38, %c0_39], %55 {strides = array<i32>} : memref<1x3072xf32, #tpu.memory_space<vmem>>, vector<1x3072xf32>,
    %57 = arith.subf %38, %3 : vector<8x3072xf32>
    %c0_40 = arith.constant 0 : index
    %c0_41 = arith.constant 0 : index
    %58 = vector.load %arg15[%c0_40, %c0_41] : memref<1x3072xf32, #tpu.memory_space<vmem>>, vector<1x3072xf32>
    %59 = arith.mulf %57, %57 : vector<8x3072xf32>
    %cst_42 = arith.constant dense<0.000000e+00> : vector<3072xf32>
    %60 = vector.multi_reduction <add>, %59, %cst_42 [0] : vector<8x3072xf32> to vector<3072xf32>
    %61 = vector.shape_cast %60 : vector<3072xf32> to vector<1x3072xf32>
    %62 = arith.addf %58, %61 : vector<1x3072xf32>
    %c0_43 = arith.constant 0 : index
    %c0_44 = arith.constant 0 : index
    %63 = vector.load %arg15[%c0_43, %c0_44] : memref<1x3072xf32, #tpu.memory_space<vmem>>, vector<1x3072xf32>
    tpu.vector_store %arg15[%c0_43, %c0_44], %62 {strides = array<i32>} : memref<1x3072xf32, #tpu.memory_space<vmem>>, vector<1x3072xf32>,
    %c0_i32_45 = arith.constant 0 : i32
    %64 = arith.cmpi eq, %arg0, %c0_i32_45 : i32
    %65 = arith.extui %64 : i1 to i32
    %c0_i32_46 = arith.constant 0 : i32
    %66 = arith.cmpi ne, %65, %c0_i32_46 : i32
    scf.if %66 {
      %c0_47 = arith.constant 0 : index
      %c0_48 = arith.constant 0 : index
      %67 = vector.load %arg13[%c0_47, %c0_48] : memref<1x3072xf32, #tpu.memory_space<vmem>>, vector<1x3072xf32>
      %68 = math.sqrt %67 : vector<1x3072xf32>
      %cst_49 = arith.constant 9.99999993E-9 : f32
      %69 = vector.broadcast %cst_49 : f32 to vector<1x3072xf32>
      %70 = arith.maximumf %68, %69 : vector<1x3072xf32>
      %c0_50 = arith.constant 0 : index
      %c0_51 = arith.constant 0 : index
      %71 = vector.load %arg14[%c0_50, %c0_51] : memref<1x3072xf32, #tpu.memory_space<vmem>>, vector<1x3072xf32>
      %72 = math.sqrt %71 : vector<1x3072xf32>
      %cst_52 = arith.constant 9.99999993E-9 : f32
      %73 = vector.broadcast %cst_52 : f32 to vector<1x3072xf32>
      %74 = arith.maximumf %72, %73 : vector<1x3072xf32>
      %c0_53 = arith.constant 0 : index
      %c0_54 = arith.constant 0 : index
      %75 = vector.load %arg12[%c0_53, %c0_54] : memref<1x3072xf32, #tpu.memory_space<vmem>>, vector<1x3072xf32>
      %76 = arith.mulf %70, %74 : vector<1x3072xf32>
      %77 = arith.divf %75, %76 : vector<1x3072xf32>
      %cst_55 = arith.constant 1.000000e+00 : f32
      %78 = vector.broadcast %cst_55 : f32 to vector<1x3072xf32>
      %79 = arith.subf %78, %77 : vector<1x3072xf32>
      %c0_56 = arith.constant 0 : index
      %c0_57 = arith.constant 0 : index
      %80 = vector.load %arg10[%c0_56, %c0_57] : memref<1x3072xf32, #tpu.memory_space<vmem>>, vector<1x3072xf32>
      tpu.vector_store %arg10[%c0_56, %c0_57], %79 {strides = array<i32>} : memref<1x3072xf32, #tpu.memory_space<vmem>>, vector<1x3072xf32>,
      %c0_58 = arith.constant 0 : index
      %c0_59 = arith.constant 0 : index
      %81 = vector.load %arg15[%c0_58, %c0_59] : memref<1x3072xf32, #tpu.memory_space<vmem>>, vector<1x3072xf32>
      %cst_60 = arith.constant dense<0.000000e+00> : vector<1xf32>
      %82 = vector.multi_reduction <add>, %81, %cst_60 [1] : vector<1x3072xf32> to vector<1xf32>
      %83 = vector.shape_cast %82 : vector<1xf32> to vector<1x1xf32>
      %84 = vector.extract %83[0, 0] : f32 from vector<1x1xf32>
      %cst_61 = arith.constant 4.06901054E-5 : f32
      %85 = arith.mulf %84, %cst_61 : f32
      %c0_62 = arith.constant 0 : index
      %c0_63 = arith.constant 0 : index
      %86 = memref.load %arg11[%c0_62, %c0_63] : memref<1x1xf32, #tpu.memory_space<smem>>
      memref.store %85, %arg11[%c0_62, %c0_63] : memref<1x1xf32, #tpu.memory_space<smem>>
    } else {
    }
    return
  }
  func.func @transform_0(%arg0: i32) -> (i32, i32) {
    %c0_i32 = arith.constant 0 : i32
    %c0_i32_0 = arith.constant 0 : i32
    return %arg0, %c0_i32 : i32, i32
  }
  func.func @transform_1(%arg0: i32) -> (i32, i32) {
    %c0_i32 = arith.constant 0 : i32
    %c0_i32_0 = arith.constant 0 : i32
    %c0_i32_1 = arith.constant 0 : i32
    return %c0_i32, %c0_i32_0 : i32, i32
  }
  func.func @transform_2(%arg0: i32) -> (i32, i32) {
    %c0_i32 = arith.constant 0 : i32
    %c0_i32_0 = arith.constant 0 : i32
    %c0_i32_1 = arith.constant 0 : i32
    return %c0_i32, %c0_i32_0 : i32, i32
  }
  func.func @transform_3(%arg0: i32) -> (i32, i32) {
    %c0_i32 = arith.constant 0 : i32
    %c0_i32_0 = arith.constant 0 : i32
    %c0_i32_1 = arith.constant 0 : i32
    return %c0_i32, %c0_i32_0 : i32, i32
  }
  func.func @transform_4(%arg0: i32) -> (i32, i32) {
    %c0_i32 = arith.constant 0 : i32
    %c0_i32_0 = arith.constant 0 : i32
    %c0_i32_1 = arith.constant 0 : i32
    return %c0_i32, %c0_i32_0 : i32, i32
  }
  func.func @transform_5(%arg0: i32) -> (i32, i32) {
    %c0_i32 = arith.constant 0 : i32
    %c0_i32_0 = arith.constant 0 : i32
    %c0_i32_1 = arith.constant 0 : i32
    return %c0_i32, %c0_i32_0 : i32, i32
  }
  func.func @transform_6(%arg0: i32) -> (i32, i32) {
    %c0_i32 = arith.constant 0 : i32
    %c0_i32_0 = arith.constant 0 : i32
    %c0_i32_1 = arith.constant 0 : i32
    return %c0_i32, %c0_i32_0 : i32, i32
  }
  func.func @transform_7(%arg0: i32) -> (i32, i32) {
    %c0_i32 = arith.constant 0 : i32
    %c0_i32_0 = arith.constant 0 : i32
    %c0_i32_1 = arith.constant 0 : i32
    return %c0_i32, %c0_i32_0 : i32, i32
  }
  func.func @transform_8(%arg0: i32) -> (i32, i32) {
    %c0_i32 = arith.constant 0 : i32
    %c0_i32_0 = arith.constant 0 : i32
    %c0_i32_1 = arith.constant 0 : i32
    return %c0_i32, %c0_i32_0 : i32, i32
  }
  func.func @transform_9(%arg0: i32) -> (i32, i32) {
    %c0_i32 = arith.constant 0 : i32
    %c0_i32_0 = arith.constant 0 : i32
    %c0_i32_1 = arith.constant 0 : i32
    return %c0_i32, %c0_i32_0 : i32, i32
  }
  func.func @transform_10(%arg0: i32) -> (i32, i32) {
    %c0_i32 = arith.constant 0 : i32
    %c0_i32_0 = arith.constant 0 : i32
    %c0_i32_1 = arith.constant 0 : i32
    return %c0_i32, %c0_i32_0 : i32, i32
  }
}

</mosaic_0001>

<llo_original>
// kernel: train_forward.1
$region0: #{train_forward.1}
  #allocation0 [shape = 'u32[]', space=smem, size = 0x4, offset = 0x4, fixed_abs, tag = 'smem constant byte address 0x4 - core index']
  #allocation1 [shape = 'u32[144,128]{1,0:T(1,128)}', space=vmem, size = 0x12000, scoped, tag = 'internal scratch']
  #allocation2 [shape = 'f32[1,3072]{1,0:T(1,128)}', space=vmem, size = 0x3000, scoped, tag = 'scratch operand']
  #allocation3 [shape = 'f32[1,3072]{1,0:T(1,128)}', space=vmem, size = 0x3000, scoped, tag = 'scratch operand']
  #allocation4 [shape = 'f32[1,3072]{1,0:T(1,128)}', space=vmem, size = 0x3000, scoped, tag = 'scratch operand']
  #allocation5 [shape = 'f32[1,3072]{1,0:T(1,128)}', space=vmem, size = 0x3000, scoped, tag = 'scratch operand']
  %s0 = inlined_call_operand.hbm [shape: f32[8,3072], index: 0, kind: input, shape index: {}]
  %s1 = inlined_call_operand.hbm [shape: bf16[3072,128], index: 1, kind: input, shape index: {}]
  %s2 = inlined_call_operand.vmem [shape: f32[1,128], index: 2, kind: input, shape index: {}]
  %s3 = inlined_call_operand.hbm [shape: bf16[128,128], index: 3, kind: input, shape index: {}]
  %s4 = inlined_call_operand.vmem [shape: f32[1,128], index: 4, kind: input, shape index: {}]
  %s5 = inlined_call_operand.hbm [shape: bf16[128,128], index: 5, kind: input, shape index: {}]
  %s6 = inlined_call_operand.vmem [shape: f32[1,128], index: 6, kind: input, shape index: {}]
  %s7 = inlined_call_operand.hbm [shape: bf16[128,3072], index: 7, kind: input, shape index: {}]
  %s8 = inlined_call_operand.hbm [shape: f32[1,3072], index: 8, kind: input, shape index: {}]
  %s9 = inlined_call_operand.hbm [shape: f32[1,3072], index: 9, kind: output, shape index: {0}]
  %s10 = inlined_call_operand.hbm [shape: f32[1,1], index: 10, kind: output, shape index: {1}]
  %11 = xla_tuple %s9, %s10
  %s12 = sld [smem:[#allocation0]]
  $region86: #{train_forward.1} parent=0
    _
  %s14 = ssub.s32 1, %s12
  %s15 = scalar_select 0, %s14, %s12
  $region1: #{train_forward.1} parent=0
    #allocation6 [shape = 'u8[98304]{0}', space=vmem, size = 0x18000, scoped, tag = 'input window, operand 0, single buffered']
    #allocation7 [shape = 's32[1]{0}', space=sflag, size = 0x4, scoped, tag = 'scoped memory for train_forward.1']
    #allocation8 [shape = 's32[1]{0}', space=sflag, size = 0x4, scoped, tag = 'scoped memory for train_forward.1']
    #allocation9 [shape = 's32[1]{0}', space=sflag, size = 0x4, scoped, tag = 'scoped memory for train_forward.1']
    #allocation10 [shape = 'u8[786432]{0}', space=vmem, size = 0xc0000, scoped, tag = 'input window, operand 1, single buffered']
    #allocation11 [shape = 's32[1]{0}', space=sflag, size = 0x4, scoped, tag = 'scoped memory for train_forward.1']
    #allocation12 [shape = 'u8[32768]{0}', space=vmem, size = 0x8000, scoped, tag = 'input window, operand 3, single buffered']
    #allocation13 [shape = 'u8[32768]{0}', space=vmem, size = 0x8000, scoped, tag = 'input window, operand 5, single buffered']
    #allocation14 [shape = 's32[1]{0}', space=sflag, size = 0x4, scoped, tag = 'scoped memory for train_forward.1']
    #allocation15 [shape = 'u8[786432]{0}', space=vmem, size = 0xc0000, scoped, tag = 'input window, operand 7, single buffered']
    #allocation16 [shape = 'u8[12288]{0}', space=vmem, size = 0x3000, scoped, tag = 'input window, operand 8, single buffered']
    #allocation17 [shape = 's32[1]{0}', space=sflag, size = 0x4, scoped, tag = 'scoped memory for train_forward.1']
    #allocation18 [shape = 'u8[12288]{0}', space=vmem, size = 0x3000, scoped, tag = 'output window, operand 0, single buffered']
    #allocation19 [shape = 'u8[512]{0}', space=smem, size = 0x200, scoped, tag = 'output window, operand 1, single buffered']
    %16 = vsyncpa [#allocation7], 0
    %17 = vsyncpa [#allocation11], 0
    %18 = vsyncpa [#allocation14], 0
    %19 = vsyncpa [#allocation17], 0
    %20 = vsyncpa [#allocation8], 0
    %21 = vsyncpa [#allocation9], 0
    // Predicated region
    $region2: #{train_forward.1} parent=1 // pred_check
      _
    $region3: #{train_forward.1} parent=1 // pred_check_branch
      %23 = sbr.rel (0) target = $region5
    $region4: #{train_forward.1} parent=1 // pred_region
      %s25 = ssub.s32 3072, 3072
      %26 = vsyncadd [#allocation7], %s25
      %s28 = sshll.u32 [#allocation6], 4
      %s29 = int_to_ptr.vmem [resolvable:$true] %s28
      %31 = dma.hbm_to_vmem [thread:$0]  %s0, 3072, %s29, [#allocation7]
    $region5: #{train_forward.1} parent=1 // pred_fallthru
      _
    // Predicated region
    $region6: #{train_forward.1} parent=1 // pred_check
      _
    $region7: #{train_forward.1} parent=1 // pred_check_branch
      %33 = sbr.rel (0) target = $region9
    $region8: #{train_forward.1} parent=1 // pred_region
      %s35 = ssub.s32 24576, 24576
      %36 = vsyncadd [#allocation11], %s35
      %s37 = sshll.u32 [#allocation10], 4
      %s38 = int_to_ptr.vmem [resolvable:$true] %s37
      %43 = dma.hbm_to_vmem [thread:$0]  %s1, 24576, %s38, [#allocation11], 64, 64, 4
    $region9: #{train_forward.1} parent=1 // pred_fallthru
      _
    // Predicated region
    $region10: #{train_forward.1} parent=1 // pred_check
      _
    $region11: #{train_forward.1} parent=1 // pred_check_branch
      %45 = sbr.rel (0) target = $region13
    $region12: #{train_forward.1} parent=1 // pred_region
      _
    $region13: #{train_forward.1} parent=1 // pred_fallthru
      _
    // Predicated region
    $region14: #{train_forward.1} parent=1 // pred_check
      _
    $region15: #{train_forward.1} parent=1 // pred_check_branch
      %47 = sbr.rel (0) target = $region17
    $region16: #{train_forward.1} parent=1 // pred_region
      %s49 = ssub.s32 1024, 1024
      %50 = vsyncadd [#allocation11], %s49
      %s51 = sshll.u32 [#allocation12], 4
      %s52 = int_to_ptr.vmem [resolvable:$true] %s51
      %57 = dma.hbm_to_vmem [thread:$0]  %s3, 1024, %s52, [#allocation11], 64, 64, 4
    $region17: #{train_forward.1} parent=1 // pred_fallthru
      _
    // Predicated region
    $region18: #{train_forward.1} parent=1 // pred_check
      _
    $region19: #{train_forward.1} parent=1 // pred_check_branch
      %59 = sbr.rel (0) target = $region21
    $region20: #{train_forward.1} parent=1 // pred_region
      _
    $region21: #{train_forward.1} parent=1 // pred_fallthru
      _
    // Predicated region
    $region22: #{train_forward.1} parent=1 // pred_check
      _
    $region23: #{train_forward.1} parent=1 // pred_check_branch
      %61 = sbr.rel (0) target = $region25
    $region24: #{train_forward.1} parent=1 // pred_region
      %s63 = ssub.s32 1024, 1024
      %64 = vsyncadd [#allocation14], %s63
      %s65 = sshll.u32 [#allocation13], 4
      %s66 = int_to_ptr.vmem [resolvable:$true] %s65
      %71 = dma.hbm_to_vmem [thread:$0]  %s5, 1024, %s66, [#allocation14], 64, 64, 4
    $region25: #{train_forward.1} parent=1 // pred_fallthru
      _
    // Predicated region
    $region26: #{train_forward.1} parent=1 // pred_check
      _
    $region27: #{train_forward.1} parent=1 // pred_check_branch
      %73 = sbr.rel (0) target = $region29
    $region28: #{train_forward.1} parent=1 // pred_region
      _
    $region29: #{train_forward.1} parent=1 // pred_fallthru
      _
    // Predicated region
    $region30: #{train_forward.1} parent=1 // pred_check
      _
    $region31: #{train_forward.1} parent=1 // pred_check_branch
      %75 = sbr.rel (0) target = $region33
    $region32: #{train_forward.1} parent=1 // pred_region
      %s77 = ssub.s32 24576, 24576
      %78 = vsyncadd [#allocation14], %s77
      %s79 = sshll.u32 [#allocation15], 4
      %s80 = int_to_ptr.vmem [resolvable:$true] %s79
      %85 = dma.hbm_to_vmem [thread:$0]  %s7, 24576, %s80, [#allocation14], 1536, 1536, 96
    $region33: #{train_forward.1} parent=1 // pred_fallthru
      _
    // Predicated region
    $region34: #{train_forward.1} parent=1 // pred_check
      _
    $region35: #{train_forward.1} parent=1 // pred_check_branch
      %87 = sbr.rel (0) target = $region37
    $region36: #{train_forward.1} parent=1 // pred_region
      %s89 = ssub.s32 384, 384
      %90 = vsyncadd [#allocation17], %s89
      %s92 = sshll.u32 [#allocation16], 4
      %s93 = int_to_ptr.vmem [resolvable:$true] %s92
      %95 = dma.hbm_to_vmem [thread:$0]  %s8, 384, %s93, [#allocation17]
    $region37: #{train_forward.1} parent=1 // pred_fallthru
      _
    // Predicated region
    $region38: #{train_forward.1} parent=1 // pred_check
      _
    $region39: #{train_forward.1} parent=1 // pred_check_branch
      %97 = sbr.rel (0) target = $region41
    $region40: #{train_forward.1} parent=1 // pred_region
      %98 = dma.done [#allocation7], 3072
    $region41: #{train_forward.1} parent=1 // pred_fallthru
      _
    // Predicated region
    $region42: #{train_forward.1} parent=1 // pred_check
      _
    $region43: #{train_forward.1} parent=1 // pred_check_branch
      %100 = sbr.rel (0) target = $region45
    $region44: #{train_forward.1} parent=1 // pred_region
      %101 = dma.done [#allocation11], 24576
    $region45: #{train_forward.1} parent=1 // pred_fallthru
      _
    // Predicated region
    $region46: #{train_forward.1} parent=1 // pred_check
      _
    $region47: #{train_forward.1} parent=1 // pred_check_branch
      %103 = sbr.rel (0) target = $region49
    $region48: #{train_forward.1} parent=1 // pred_region
      %104 = dma.done [#allocation11], 1024
    $region49: #{train_forward.1} parent=1 // pred_fallthru
      _
    // Predicated region
    $region50: #{train_forward.1} parent=1 // pred_check
      _
    $region51: #{train_forward.1} parent=1 // pred_check_branch
      %106 = sbr.rel (0) target = $region53
    $region52: #{train_forward.1} parent=1 // pred_region
      %107 = dma.done [#allocation14], 1024
    $region53: #{train_forward.1} parent=1 // pred_fallthru
      _
    // Predicated region
    $region54: #{train_forward.1} parent=1 // pred_check
      _
    $region55: #{train_forward.1} parent=1 // pred_check_branch
      %109 = sbr.rel (0) target = $region57
    $region56: #{train_forward.1} parent=1 // pred_region
      %110 = dma.done [#allocation14], 24576
    $region57: #{train_forward.1} parent=1 // pred_fallthru
      _
    // Predicated region
    $region58: #{train_forward.1} parent=1 // pred_check
      _
    $region59: #{train_forward.1} parent=1 // pred_check_branch
      %112 = sbr.rel (0) target = $region61
    $region60: #{train_forward.1} parent=1 // pred_region
      %113 = dma.done [#allocation17], 384
    $region61: #{train_forward.1} parent=1 // pred_fallthru
      _
    %p115 = scmp.eq.s32.totalorder 0, 0
    // Predicated region
    $region62: #{train_forward.1} parent=1 // pred_check
      %p116 = pneg %p115
    $region63: #{train_forward.1} parent=1 // pred_check_branch
      %118 = sbr.rel (%p116) target = $region65
    $region64: #{train_forward.1} parent=1 // pred_region
      %119 = vst [vmem:[#allocation2] sm:$0xff] 0.0
      %120 = vst [vmem:[#allocation2 + $0x8] sm:$0xff] 0.0
      %121 = vst [vmem:[#allocation2 + $0x10] sm:$0xff] 0.0
      %122 = vst [vmem:[#allocation3] sm:$0xff] 0.0
      %123 = vst [vmem:[#allocation3 + $0x8] sm:$0xff] 0.0
      %124 = vst [vmem:[#allocation3 + $0x10] sm:$0xff] 0.0
      %125 = vst [vmem:[#allocation4] sm:$0xff] 0.0
      %126 = vst [vmem:[#allocation4 + $0x8] sm:$0xff] 0.0
      %127 = vst [vmem:[#allocation4 + $0x10] sm:$0xff] 0.0
      %128 = vst [vmem:[#allocation5] sm:$0xff] 0.0
      %129 = vst [vmem:[#allocation5 + $0x8] sm:$0xff] 0.0
      %130 = vst [vmem:[#allocation5 + $0x10] sm:$0xff] 0.0
    $region65: #{train_forward.1} parent=1 // pred_fallthru
      _
    %v131 = vld [vmem:[#allocation6] sm:$0xff]
    %v132 = vld [vmem:[#allocation6 + $0x8] sm:$0xff]
    %v133 = vld [vmem:[#allocation6 + $0x10] sm:$0xff]
    %v134 = vld [vmem:[#allocation6 + $0x18] sm:$0xff]
    %v135 = vld [vmem:[#allocation6 + $0x20] sm:$0xff]
    %v136 = vld [vmem:[#allocation6 + $0x28] sm:$0xff]
    %v137 = vld [vmem:[#allocation6 + $0x30] sm:$0xff]
    %v138 = vld [vmem:[#allocation6 + $0x38] sm:$0xff]
    %v139 = vld [vmem:[#allocation6 + $0x40] sm:$0xff]
    %v140 = vld [vmem:[#allocation6 + $0x48] sm:$0xff]
    %v141 = vld [vmem:[#allocation6 + $0x50] sm:$0xff]
    %v142 = vld [vmem:[#allocation6 + $0x58] sm:$0xff]
    %v143 = vld [vmem:[#allocation6 + $0x60] sm:$0xff]
    %v144 = vld [vmem:[#allocation6 + $0x68] sm:$0xff]
    %v145 = vld [vmem:[#allocation6 + $0x70] sm:$0xff]
    %v146 = vld [vmem:[#allocation6 + $0x78] sm:$0xff]
    %v147 = vld [vmem:[#allocation6 + $0x80] sm:$0xff]
    %v148 = vld [vmem:[#allocation6 + $0x88] sm:$0xff]
    %v149 = vld [vmem:[#allocation6 + $0x90] sm:$0xff]
    %v150 = vld [vmem:[#allocation6 + $0x98] sm:$0xff]
    %v151 = vld [vmem:[#allocation6 + $0xa0] sm:$0xff]
    %v152 = vld [vmem:[#allocation6 + $0xa8] sm:$0xff]
    %v153 = vld [vmem:[#allocation6 + $0xb0] sm:$0xff]
    %v154 = vld [vmem:[#allocation6 + $0xb8] sm:$0xff]
    %v155 = vpack.c.bf16 %v131, %v131
    %v156 = vpack.c.bf16 %v132, %v132
    %v157 = vpack.c.bf16 %v133, %v133
    %v158 = vpack.c.bf16 %v134, %v134
    %v159 = vpack.c.bf16 %v135, %v135
    %v160 = vpack.c.bf16 %v136, %v136
    %v161 = vpack.c.bf16 %v137, %v137
    %v162 = vpack.c.bf16 %v138, %v138
    %v163 = vpack.c.bf16 %v139, %v139
    %v164 = vpack.c.bf16 %v140, %v140
    %v165 = vpack.c.bf16 %v141, %v141
    %v166 = vpack.c.bf16 %v142, %v142
    %v167 = vpack.c.bf16 %v143, %v143
    %v168 = vpack.c.bf16 %v144, %v144
    %v169 = vpack.c.bf16 %v145, %v145
    %v170 = vpack.c.bf16 %v146, %v146
    %v171 = vpack.c.bf16 %v147, %v147
    %v172 = vpack.c.bf16 %v148, %v148
    %v173 = vpack.c.bf16 %v149, %v149
    %v174 = vpack.c.bf16 %v150, %v150
    %v175 = vpack.c.bf16 %v151, %v151
    %v176 = vpack.c.bf16 %v152, %v152
    %v177 = vpack.c.bf16 %v153, %v153
    %v178 = vpack.c.bf16 %v154, %v154
    %v179 = vld [vmem:[#allocation10] sm:$0xf]
    %v180 = vld [vmem:[#allocation10 + $0x4] sm:$0xf]
    %v181 = vld [vmem:[#allocation10 + $0x8] sm:$0xf]
    %v182 = vld [vmem:[#allocation10 + $0xc] sm:$0xf]
    %v183 = vld [vmem:[#allocation10 + $0x10] sm:$0xf]
    %v184 = vld [vmem:[#allocation10 + $0x14] sm:$0xf]
    %v185 = vld [vmem:[#allocation10 + $0x18] sm:$0xf]
    %v186 = vld [vmem:[#allocation10 + $0x1c] sm:$0xf]
    %v187 = vld [vmem:[#allocation10 + $0x20] sm:$0xf]
    %v188 = vld [vmem:[#allocation10 + $0x24] sm:$0xf]
    %v189 = vld [vmem:[#allocation10 + $0x28] sm:$0xf]
    %v190 = vld [vmem:[#allocation10 + $0x2c] sm:$0xf]
    %v191 = vld [vmem:[#allocation10 + $0x30] sm:$0xf]
    %v192 = vld [vmem:[#allocation10 + $0x34] sm:$0xf]
    %v193 = vld [vmem:[#allocation10 + $0x38] sm:$0xf]
    %v194 = vld [vmem:[#allocation10 + $0x3c] sm:$0xf]
    %v195 = vld [vmem:[#allocation10 + $0x40] sm:$0xf]
    %v196 = vld [vmem:[#allocation10 + $0x44] sm:$0xf]
    %v197 = vld [vmem:[#allocation10 + $0x48] sm:$0xf]
    %v198 = vld [vmem:[#allocation10 + $0x4c] sm:$0xf]
    %v199 = vld [vmem:[#allocation10 + $0x50] sm:$0xf]
    %v200 = vld [vmem:[#allocation10 + $0x54] sm:$0xf]
    %v201 = vld [vmem:[#allocation10 + $0x58] sm:$0xf]
    %v202 = vld [vmem:[#allocation10 + $0x5c] sm:$0xf]
    %v203 = vld [vmem:[#allocation10 + $0x60] sm:$0xf]
    %v204 = vld [vmem:[#allocation10 + $0x64] sm:$0xf]
    %v205 = vld [vmem:[#allocation10 + $0x68] sm:$0xf]
    %v206 = vld [vmem:[#allocation10 + $0x6c] sm:$0xf]
    %v207 = vld [vmem:[#allocation10 + $0x70] sm:$0xf]
    %v208 = vld [vmem:[#allocation10 + $0x74] sm:$0xf]
    %v209 = vld [vmem:[#allocation10 + $0x78] sm:$0xf]
    %v210 = vld [vmem:[#allocation10 + $0x7c] sm:$0xf]
    %v211 = vld [vmem:[#allocation10 + $0x80] sm:$0xf]
    %v212 = vld [vmem:[#allocation10 + $0x84] sm:$0xf]
    %v213 = vld [vmem:[#allocation10 + $0x88] sm:$0xf]
    %v214 = vld [vmem:[#allocation10 + $0x8c] sm:$0xf]
    %v215 = vld [vmem:[#allocation10 + $0x90] sm:$0xf]
    %v216 = vld [vmem:[#allocation10 + $0x94] sm:$0xf]
    %v217 = vld [vmem:[#allocation10 + $0x98] sm:$0xf]
    %v218 = vld [vmem:[#allocation10 + $0x9c] sm:$0xf]
    %v219 = vld [vmem:[#allocation10 + $0xa0] sm:$0xf]
    %v220 = vld [vmem:[#allocation10 + $0xa4] sm:$0xf]
    %v221 = vld [vmem:[#allocation10 + $0xa8] sm:$0xf]
    %v222 = vld [vmem:[#allocation10 + $0xac] sm:$0xf]
    %v223 = vld [vmem:[#allocation10 + $0xb0] sm:$0xf]
    %v224 = vld [vmem:[#allocation10 + $0xb4] sm:$0xf]
    %v225 = vld [vmem:[#allocation10 + $0xb8] sm:$0xf]
    %v226 = vld [vmem:[#allocation10 + $0xbc] sm:$0xf]
    %v227 = vld [vmem:[#allocation10 + $0xc0] sm:$0xf]
    %v228 = vld [vmem:[#allocation10 + $0xc4] sm:$0xf]
    %v229 = vld [vmem:[#allocation10 + $0xc8] sm:$0xf]
    %v230 = vld [vmem:[#allocation10 + $0xcc] sm:$0xf]
    %v231 = vld [vmem:[#allocation10 + $0xd0] sm:$0xf]
    %v232 = vld [vmem:[#allocation10 + $0xd4] sm:$0xf]
    %v233 = vld [vmem:[#allocation10 + $0xd8] sm:$0xf]
    %v234 = vld [vmem:[#allocation10 + $0xdc] sm:$0xf]
    %v235 = vld [vmem:[#allocation10 + $0xe0] sm:$0xf]
    %v236 = vld [vmem:[#allocation10 + $0xe4] sm:$0xf]
    %v237 = vld [vmem:[#allocation10 + $0xe8] sm:$0xf]
    %v238 = vld [vmem:[#allocation10 + $0xec] sm:$0xf]
    %v239 = vld [vmem:[#allocation10 + $0xf0] sm:$0xf]
    %v240 = vld [vmem:[#allocation10 + $0xf4] sm:$0xf]
    %v241 = vld [vmem:[#allocation10 + $0xf8] sm:$0xf]
    %v242 = vld [vmem:[#allocation10 + $0xfc] sm:$0xf]
    %v243 = vld [vmem:[#allocation10 + $0x100] sm:$0xf]
    %v244 = vld [vmem:[#allocation10 + $0x104] sm:$0xf]
    %v245 = vld [vmem:[#allocation10 + $0x108] sm:$0xf]
    %v246 = vld [vmem:[#allocation10 + $0x10c] sm:$0xf]
    %v247 = vld [vmem:[#allocation10 + $0x110] sm:$0xf]
    %v248 = vld [vmem:[#allocation10 + $0x114] sm:$0xf]
    %v249 = vld [vmem:[#allocation10 + $0x118] sm:$0xf]
    %v250 = vld [vmem:[#allocation10 + $0x11c] sm:$0xf]
    %v251 = vld [vmem:[#allocation10 + $0x120] sm:$0xf]
    %v252 = vld [vmem:[#allocation10 + $0x124] sm:$0xf]
    %v253 = vld [vmem:[#allocation10 + $0x128] sm:$0xf]
    %v254 = vld [vmem:[#allocation10 + $0x12c] sm:$0xf]
    %v255 = vld [vmem:[#allocation10 + $0x130] sm:$0xf]
    %v256 = vld [vmem:[#allocation10 + $0x134] sm:$0xf]
    %v257 = vld [vmem:[#allocation10 + $0x138] sm:$0xf]
    %v258 = vld [vmem:[#allocation10 + $0x13c] sm:$0xf]
    %v259 = vld [vmem:[#allocation10 + $0x140] sm:$0xf]
    %v260 = vld [vmem:[#allocation10 + $0x144] sm:$0xf]
    %v261 = vld [vmem:[#allocation10 + $0x148] sm:$0xf]
    %v262 = vld [vmem:[#allocation10 + $0x14c] sm:$0xf]
    %v263 = vld [vmem:[#allocation10 + $0x150] sm:$0xf]
    %v264 = vld [vmem:[#allocation10 + $0x154] sm:$0xf]
    %v265 = vld [vmem:[#allocation10 + $0x158] sm:$0xf]
    %v266 = vld [vmem:[#allocation10 + $0x15c] sm:$0xf]
    %v267 = vld [vmem:[#allocation10 + $0x160] sm:$0xf]
    %v268 = vld [vmem:[#allocation10 + $0x164] sm:$0xf]
    %v269 = vld [vmem:[#allocation10 + $0x168] sm:$0xf]
    %v270 = vld [vmem:[#allocation10 + $0x16c] sm:$0xf]
    %v271 = vld [vmem:[#allocation10 + $0x170] sm:$0xf]
    %v272 = vld [vmem:[#allocation10 + $0x174] sm:$0xf]
    %v273 = vld [vmem:[#allocation10 + $0x178] sm:$0xf]
    %v274 = vld [vmem:[#allocation10 + $0x17c] sm:$0xf]
    %v275 = vld [vmem:[#allocation10 + $0x180] sm:$0xf]
    %v276 = vld [vmem:[#allocation10 + $0x184] sm:$0xf]
    %v277 = vld [vmem:[#allocation10 + $0x188] sm:$0xf]
    %v278 = vld [vmem:[#allocation10 + $0x18c] sm:$0xf]
    %v279 = vld [vmem:[#allocation10 + $0x190] sm:$0xf]
    %v280 = vld [vmem:[#allocation10 + $0x194] sm:$0xf]
    %v281 = vld [vmem:[#allocation10 + $0x198] sm:$0xf]
    %v282 = vld [vmem:[#allocation10 + $0x19c] sm:$0xf]
    %v283 = vld [vmem:[#allocation10 + $0x1a0] sm:$0xf]
    %v284 = vld [vmem:[#allocation10 + $0x1a4] sm:$0xf]
    %v285 = vld [vmem:[#allocation10 + $0x1a8] sm:$0xf]
    %v286 = vld [vmem:[#allocation10 + $0x1ac] sm:$0xf]
    %v287 = vld [vmem:[#allocation10 + $0x1b0] sm:$0xf]
    %v288 = vld [vmem:[#allocation10 + $0x1b4] sm:$0xf]
    %v289 = vld [vmem:[#allocation10 + $0x1b8] sm:$0xf]
    %v290 = vld [vmem:[#allocation10 + $0x1bc] sm:$0xf]
    %v291 = vld [vmem:[#allocation10 + $0x1c0] sm:$0xf]
    %v292 = vld [vmem:[#allocation10 + $0x1c4] sm:$0xf]
    %v293 = vld [vmem:[#allocation10 + $0x1c8] sm:$0xf]
    %v294 = vld [vmem:[#allocation10 + $0x1cc] sm:$0xf]
    %v295 = vld [vmem:[#allocation10 + $0x1d0] sm:$0xf]
    %v296 = vld [vmem:[#allocation10 + $0x1d4] sm:$0xf]
    %v297 = vld [vmem:[#allocation10 + $0x1d8] sm:$0xf]
    %v298 = vld [vmem:[#allocation10 + $0x1dc] sm:$0xf]
    %v299 = vld [vmem:[#allocation10 + $0x1e0] sm:$0xf]
    %v300 = vld [vmem:[#allocation10 + $0x1e4] sm:$0xf]
    %v301 = vld [vmem:[#allocation10 + $0x1e8] sm:$0xf]
    %v302 = vld [vmem:[#allocation10 + $0x1ec] sm:$0xf]
    %v303 = vld [vmem:[#allocation10 + $0x1f0] sm:$0xf]
    %v304 = vld [vmem:[#allocation10 + $0x1f4] sm:$0xf]
    %v305 = vld [vmem:[#allocation10 + $0x1f8] sm:$0xf]
    %v306 = vld [vmem:[#allocation10 + $0x1fc] sm:$0xf]
    %v307 = vld [vmem:[#allocation10 + $0x200] sm:$0xf]
    %v308 = vld [vmem:[#allocation10 + $0x204] sm:$0xf]
    %v309 = vld [vmem:[#allocation10 + $0x208] sm:$0xf]
    %v310 = vld [vmem:[#allocation10 + $0x20c] sm:$0xf]
    %v311 = vld [vmem:[#allocation10 + $0x210] sm:$0xf]
    %v312 = vld [vmem:[#allocation10 + $0x214] sm:$0xf]
    %v313 = vld [vmem:[#allocation10 + $0x218] sm:$0xf]
    %v314 = vld [vmem:[#allocation10 + $0x21c] sm:$0xf]
    %v315 = vld [vmem:[#allocation10 + $0x220] sm:$0xf]
    %v316 = vld [vmem:[#allocation10 + $0x224] sm:$0xf]
    %v317 = vld [vmem:[#allocation10 + $0x228] sm:$0xf]
    %v318 = vld [vmem:[#allocation10 + $0x22c] sm:$0xf]
    %v319 = vld [vmem:[#allocation10 + $0x230] sm:$0xf]
    %v320 = vld [vmem:[#allocation10 + $0x234] sm:$0xf]
    %v321 = vld [vmem:[#allocation10 + $0x238] sm:$0xf]
    %v322 = vld [vmem:[#allocation10 + $0x23c] sm:$0xf]
    %v323 = vld [vmem:[#allocation10 + $0x240] sm:$0xf]
    %v324 = vld [vmem:[#allocation10 + $0x244] sm:$0xf]
    %v325 = vld [vmem:[#allocation10 + $0x248] sm:$0xf]
    %v326 = vld [vmem:[#allocation10 + $0x24c] sm:$0xf]
    %v327 = vld [vmem:[#allocation10 + $0x250] sm:$0xf]
    %v328 = vld [vmem:[#allocation10 + $0x254] sm:$0xf]
    %v329 = vld [vmem:[#allocation10 + $0x258] sm:$0xf]
    %v330 = vld [vmem:[#allocation10 + $0x25c] sm:$0xf]
    %v331 = vld [vmem:[#allocation10 + $0x260] sm:$0xf]
    %v332 = vld [vmem:[#allocation10 + $0x264] sm:$0xf]
    %v333 = vld [vmem:[#allocation10 + $0x268] sm:$0xf]
    %v334 = vld [vmem:[#allocation10 + $0x26c] sm:$0xf]
    %v335 = vld [vmem:[#allocation10 + $0x270] sm:$0xf]
    %v336 = vld [vmem:[#allocation10 + $0x274] sm:$0xf]
    %v337 = vld [vmem:[#allocation10 + $0x278] sm:$0xf]
    %v338 = vld [vmem:[#allocation10 + $0x27c] sm:$0xf]
    %v339 = vld [vmem:[#allocation10 + $0x280] sm:$0xf]
    %v340 = vld [vmem:[#allocation10 + $0x284] sm:$0xf]
    %v341 = vld [vmem:[#allocation10 + $0x288] sm:$0xf]
    %v342 = vld [vmem:[#allocation10 + $0x28c] sm:$0xf]
    %v343 = vld [vmem:[#allocation10 + $0x290] sm:$0xf]
    %v344 = vld [vmem:[#allocation10 + $0x294] sm:$0xf]
    %v345 = vld [vmem:[#allocation10 + $0x298] sm:$0xf]
    %v346 = vld [vmem:[#allocation10 + $0x29c] sm:$0xf]
    %v347 = vld [vmem:[#allocation10 + $0x2a0] sm:$0xf]
    %v348 = vld [vmem:[#allocation10 + $0x2a4] sm:$0xf]
    %v349 = vld [vmem:[#allocation10 + $0x2a8] sm:$0xf]
    %v350 = vld [vmem:[#allocation10 + $0x2ac] sm:$0xf]
    %v351 = vld [vmem:[#allocation10 + $0x2b0] sm:$0xf]
    %v352 = vld [vmem:[#allocation10 + $0x2b4] sm:$0xf]
    %v353 = vld [vmem:[#allocation10 + $0x2b8] sm:$0xf]
    %v354 = vld [vmem:[#allocation10 + $0x2bc] sm:$0xf]
    %v355 = vld [vmem:[#allocation10 + $0x2c0] sm:$0xf]
    %v356 = vld [vmem:[#allocation10 + $0x2c4] sm:$0xf]
    %v357 = vld [vmem:[#allocation10 + $0x2c8] sm:$0xf]
    %v358 = vld [vmem:[#allocation10 + $0x2cc] sm:$0xf]
    %v359 = vld [vmem:[#allocation10 + $0x2d0] sm:$0xf]
    %v360 = vld [vmem:[#allocation10 + $0x2d4] sm:$0xf]
    %v361 = vld [vmem:[#allocation10 + $0x2d8] sm:$0xf]
    %v362 = vld [vmem:[#allocation10 + $0x2dc] sm:$0xf]
    %v363 = vld [vmem:[#allocation10 + $0x2e0] sm:$0xf]
    %v364 = vld [vmem:[#allocation10 + $0x2e4] sm:$0xf]
    %v365 = vld [vmem:[#allocation10 + $0x2e8] sm:$0xf]
    %v366 = vld [vmem:[#allocation10 + $0x2ec] sm:$0xf]
    %v367 = vld [vmem:[#allocation10 + $0x2f0] sm:$0xf]
    %v368 = vld [vmem:[#allocation10 + $0x2f4] sm:$0xf]
    %v369 = vld [vmem:[#allocation10 + $0x2f8] sm:$0xf]
    %v370 = vld [vmem:[#allocation10 + $0x2fc] sm:$0xf]
    %v371 = vld [vmem:[#allocation10 + $0x300] sm:$0xf]
    %v372 = vld [vmem:[#allocation10 + $0x304] sm:$0xf]
    %v373 = vld [vmem:[#allocation10 + $0x308] sm:$0xf]
    %v374 = vld [vmem:[#allocation10 + $0x30c] sm:$0xf]
    %v375 = vld [vmem:[#allocation10 + $0x310] sm:$0xf]
    %v376 = vld [vmem:[#allocation10 + $0x314] sm:$0xf]
    %v377 = vld [vmem:[#allocation10 + $0x318] sm:$0xf]
    %v378 = vld [vmem:[#allocation10 + $0x31c] sm:$0xf]
    %v379 = vld [vmem:[#allocation10 + $0x320] sm:$0xf]
    %v380 = vld [vmem:[#allocation10 + $0x324] sm:$0xf]
    %v381 = vld [vmem:[#allocation10 + $0x328] sm:$0xf]
    %v382 = vld [vmem:[#allocation10 + $0x32c] sm:$0xf]
    %v383 = vld [vmem:[#allocation10 + $0x330] sm:$0xf]
    %v384 = vld [vmem:[#allocation10 + $0x334] sm:$0xf]
    %v385 = vld [vmem:[#allocation10 + $0x338] sm:$0xf]
    %v386 = vld [vmem:[#allocation10 + $0x33c] sm:$0xf]
    %v387 = vld [vmem:[#allocation10 + $0x340] sm:$0xf]
    %v388 = vld [vmem:[#allocation10 + $0x344] sm:$0xf]
    %v389 = vld [vmem:[#allocation10 + $0x348] sm:$0xf]
    %v390 = vld [vmem:[#allocation10 + $0x34c] sm:$0xf]
    %v391 = vld [vmem:[#allocation10 + $0x350] sm:$0xf]
    %v392 = vld [vmem:[#allocation10 + $0x354] sm:$0xf]
    %v393 = vld [vmem:[#allocation10 + $0x358] sm:$0xf]
    %v394 = vld [vmem:[#allocation10 + $0x35c] sm:$0xf]
    %v395 = vld [vmem:[#allocation10 + $0x360] sm:$0xf]
    %v396 = vld [vmem:[#allocation10 + $0x364] sm:$0xf]
    %v397 = vld [vmem:[#allocation10 + $0x368] sm:$0xf]
    %v398 = vld [vmem:[#allocation10 + $0x36c] sm:$0xf]
    %v399 = vld [vmem:[#allocation10 + $0x370] sm:$0xf]
    %v400 = vld [vmem:[#allocation10 + $0x374] sm:$0xf]
    %v401 = vld [vmem:[#allocation10 + $0x378] sm:$0xf]
    %v402 = vld [vmem:[#allocation10 + $0x37c] sm:$0xf]
    %v403 = vld [vmem:[#allocation10 + $0x380] sm:$0xf]
    %v404 = vld [vmem:[#allocation10 + $0x384] sm:$0xf]
    %v405 = vld [vmem:[#allocation10 + $0x388] sm:$0xf]
    %v406 = vld [vmem:[#allocation10 + $0x38c] sm:$0xf]
    %v407 = vld [vmem:[#allocation10 + $0x390] sm:$0xf]
    %v408 = vld [vmem:[#allocation10 + $0x394] sm:$0xf]
    %v409 = vld [vmem:[#allocation10 + $0x398] sm:$0xf]
    %v410 = vld [vmem:[#allocation10 + $0x39c] sm:$0xf]
    %v411 = vld [vmem:[#allocation10 + $0x3a0] sm:$0xf]
    %v412 = vld [vmem:[#allocation10 + $0x3a4] sm:$0xf]
    %v413 = vld [vmem:[#allocation10 + $0x3a8] sm:$0xf]
    %v414 = vld [vmem:[#allocation10 + $0x3ac] sm:$0xf]
    %v415 = vld [vmem:[#allocation10 + $0x3b0] sm:$0xf]
    %v416 = vld [vmem:[#allocation10 + $0x3b4] sm:$0xf]
    %v417 = vld [vmem:[#allocation10 + $0x3b8] sm:$0xf]
    %v418 = vld [vmem:[#allocation10 + $0x3bc] sm:$0xf]
    %v419 = vld [vmem:[#allocation10 + $0x3c0] sm:$0xf]
    %v420 = vld [vmem:[#allocation10 + $0x3c4] sm:$0xf]
    %v421 = vld [vmem:[#allocation10 + $0x3c8] sm:$0xf]
    %v422 = vld [vmem:[#allocation10 + $0x3cc] sm:$0xf]
    %v423 = vld [vmem:[#allocation10 + $0x3d0] sm:$0xf]
    %v424 = vld [vmem:[#allocation10 + $0x3d4] sm:$0xf]
    %v425 = vld [vmem:[#allocation10 + $0x3d8] sm:$0xf]
    %v426 = vld [vmem:[#allocation10 + $0x3dc] sm:$0xf]
    %v427 = vld [vmem:[#allocation10 + $0x3e0] sm:$0xf]
    %v428 = vld [vmem:[#allocation10 + $0x3e4] sm:$0xf]
    %v429 = vld [vmem:[#allocation10 + $0x3e8] sm:$0xf]
    %v430 = vld [vmem:[#allocation10 + $0x3ec] sm:$0xf]
    %v431 = vld [vmem:[#allocation10 + $0x3f0] sm:$0xf]
    %v432 = vld [vmem:[#allocation10 + $0x3f4] sm:$0xf]
    %v433 = vld [vmem:[#allocation10 + $0x3f8] sm:$0xf]
    %v434 = vld [vmem:[#allocation10 + $0x3fc] sm:$0xf]
    %v435 = vld [vmem:[#allocation10 + $0x400] sm:$0xf]
    %v436 = vld [vmem:[#allocation10 + $0x404] sm:$0xf]
    %v437 = vld [vmem:[#allocation10 + $0x408] sm:$0xf]
    %v438 = vld [vmem:[#allocation10 + $0x40c] sm:$0xf]
    %v439 = vld [vmem:[#allocation10 + $0x410] sm:$0xf]
    %v440 = vld [vmem:[#allocation10 + $0x414] sm:$0xf]
    %v441 = vld [vmem:[#allocation10 + $0x418] sm:$0xf]
    %v442 = vld [vmem:[#allocation10 + $0x41c] sm:$0xf]
    %v443 = vld [vmem:[#allocation10 + $0x420] sm:$0xf]
    %v444 = vld [vmem:[#allocation10 + $0x424] sm:$0xf]
    %v445 = vld [vmem:[#allocation10 + $0x428] sm:$0xf]
    %v446 = vld [vmem:[#allocation10 + $0x42c] sm:$0xf]
    %v447 = vld [vmem:[#allocation10 + $0x430] sm:$0xf]
    %v448 = vld [vmem:[#allocation10 + $0x434] sm:$0xf]
    %v449 = vld [vmem:[#allocation10 + $0x438] sm:$0xf]
    %v450 = vld [vmem:[#allocation10 + $0x43c] sm:$0xf]
    %v451 = vld [vmem:[#allocation10 + $0x440] sm:$0xf]
    %v452 = vld [vmem:[#allocation10 + $0x444] sm:$0xf]
    %v453 = vld [vmem:[#allocation10 + $0x448] sm:$0xf]
    %v454 = vld [vmem:[#allocation10 + $0x44c] sm:$0xf]
    %v455 = vld [vmem:[#allocation10 + $0x450] sm:$0xf]
    %v456 = vld [vmem:[#allocation10 + $0x454] sm:$0xf]
    %v457 = vld [vmem:[#allocation10 + $0x458] sm:$0xf]
    %v458 = vld [vmem:[#allocation10 + $0x45c] sm:$0xf]
    %v459 = vld [vmem:[#allocation10 + $0x460] sm:$0xf]
    %v460 = vld [vmem:[#allocation10 + $0x464] sm:$0xf]
    %v461 = vld [vmem:[#allocation10 + $0x468] sm:$0xf]
    %v462 = vld [vmem:[#allocation10 + $0x46c] sm:$0xf]
    %v463 = vld [vmem:[#allocation10 + $0x470] sm:$0xf]
    %v464 = vld [vmem:[#allocation10 + $0x474] sm:$0xf]
    %v465 = vld [vmem:[#allocation10 + $0x478] sm:$0xf]
    %v466 = vld [vmem:[#allocation10 + $0x47c] sm:$0xf]
    %v467 = vld [vmem:[#allocation10 + $0x480] sm:$0xf]
    %v468 = vld [vmem:[#allocation10 + $0x484] sm:$0xf]
    %v469 = vld [vmem:[#allocation10 + $0x488] sm:$0xf]
    %v470 = vld [vmem:[#allocation10 + $0x48c] sm:$0xf]
    %v471 = vld [vmem:[#allocation10 + $0x490] sm:$0xf]
    %v472 = vld [vmem:[#allocation10 + $0x494] sm:$0xf]
    %v473 = vld [vmem:[#allocation10 + $0x498] sm:$0xf]
    %v474 = vld [vmem:[#allocation10 + $0x49c] sm:$0xf]
    %v475 = vld [vmem:[#allocation10 + $0x4a0] sm:$0xf]
    %v476 = vld [vmem:[#allocation10 + $0x4a4] sm:$0xf]
    %v477 = vld [vmem:[#allocation10 + $0x4a8] sm:$0xf]
    %v478 = vld [vmem:[#allocation10 + $0x4ac] sm:$0xf]
    %v479 = vld [vmem:[#allocation10 + $0x4b0] sm:$0xf]
    %v480 = vld [vmem:[#allocation10 + $0x4b4] sm:$0xf]
    %v481 = vld [vmem:[#allocation10 + $0x4b8] sm:$0xf]
    %v482 = vld [vmem:[#allocation10 + $0x4bc] sm:$0xf]
    %v483 = vld [vmem:[#allocation10 + $0x4c0] sm:$0xf]
    %v484 = vld [vmem:[#allocation10 + $0x4c4] sm:$0xf]
    %v485 = vld [vmem:[#allocation10 + $0x4c8] sm:$0xf]
    %v486 = vld [vmem:[#allocation10 + $0x4cc] sm:$0xf]
    %v487 = vld [vmem:[#allocation10 + $0x4d0] sm:$0xf]
    %v488 = vld [vmem:[#allocation10 + $0x4d4] sm:$0xf]
    %v489 = vld [vmem:[#allocation10 + $0x4d8] sm:$0xf]
    %v490 = vld [vmem:[#allocation10 + $0x4dc] sm:$0xf]
    %v491 = vld [vmem:[#allocation10 + $0x4e0] sm:$0xf]
    %v492 = vld [vmem:[#allocation10 + $0x4e4] sm:$0xf]
    %v493 = vld [vmem:[#allocation10 + $0x4e8] sm:$0xf]
    %v494 = vld [vmem:[#allocation10 + $0x4ec] sm:$0xf]
    %v495 = vld [vmem:[#allocation10 + $0x4f0] sm:$0xf]
    %v496 = vld [vmem:[#allocation10 + $0x4f4] sm:$0xf]
    %v497 = vld [vmem:[#allocation10 + $0x4f8] sm:$0xf]
    %v498 = vld [vmem:[#allocation10 + $0x4fc] sm:$0xf]
    %v499 = vld [vmem:[#allocation10 + $0x500] sm:$0xf]
    %v500 = vld [vmem:[#allocation10 + $0x504] sm:$0xf]
    %v501 = vld [vmem:[#allocation10 + $0x508] sm:$0xf]
    %v502 = vld [vmem:[#allocation10 + $0x50c] sm:$0xf]
    %v503 = vld [vmem:[#allocation10 + $0x510] sm:$0xf]
    %v504 = vld [vmem:[#allocation10 + $0x514] sm:$0xf]
    %v505 = vld [vmem:[#allocation10 + $0x518] sm:$0xf]
    %v506 = vld [vmem:[#allocation10 + $0x51c] sm:$0xf]
    %v507 = vld [vmem:[#allocation10 + $0x520] sm:$0xf]
    %v508 = vld [vmem:[#allocation10 + $0x524] sm:$0xf]
    %v509 = vld [vmem:[#allocation10 + $0x528] sm:$0xf]
    %v510 = vld [vmem:[#allocation10 + $0x52c] sm:$0xf]
    %v511 = vld [vmem:[#allocation10 + $0x530] sm:$0xf]
    %v512 = vld [vmem:[#allocation10 + $0x534] sm:$0xf]
    %v513 = vld [vmem:[#allocation10 + $0x538] sm:$0xf]
    %v514 = vld [vmem:[#allocation10 + $0x53c] sm:$0xf]
    %v515 = vld [vmem:[#allocation10 + $0x540] sm:$0xf]
    %v516 = vld [vmem:[#allocation10 + $0x544] sm:$0xf]
    %v517 = vld [vmem:[#allocation10 + $0x548] sm:$0xf]
    %v518 = vld [vmem:[#allocation10 + $0x54c] sm:$0xf]
    %v519 = vld [vmem:[#allocation10 + $0x550] sm:$0xf]
    %v520 = vld [vmem:[#allocation10 + $0x554] sm:$0xf]
    %v521 = vld [vmem:[#allocation10 + $0x558] sm:$0xf]
    %v522 = vld [vmem:[#allocation10 + $0x55c] sm:$0xf]
    %v523 = vld [vmem:[#allocation10 + $0x560] sm:$0xf]
    %v524 = vld [vmem:[#allocation10 + $0x564] sm:$0xf]
    %v525 = vld [vmem:[#allocation10 + $0x568] sm:$0xf]
    %v526 = vld [vmem:[#allocation10 + $0x56c] sm:$0xf]
    %v527 = vld [vmem:[#allocation10 + $0x570] sm:$0xf]
    %v528 = vld [vmem:[#allocation10 + $0x574] sm:$0xf]
    %v529 = vld [vmem:[#allocation10 + $0x578] sm:$0xf]
    %v530 = vld [vmem:[#allocation10 + $0x57c] sm:$0xf]
    %v531 = vld [vmem:[#allocation10 + $0x580] sm:$0xf]
    %v532 = vld [vmem:[#allocation10 + $0x584] sm:$0xf]
    %v533 = vld [vmem:[#allocation10 + $0x588] sm:$0xf]
    %v534 = vld [vmem:[#allocation10 + $0x58c] sm:$0xf]
    %v535 = vld [vmem:[#allocation10 + $0x590] sm:$0xf]
    %v536 = vld [vmem:[#allocation10 + $0x594] sm:$0xf]
    %v537 = vld [vmem:[#allocation10 + $0x598] sm:$0xf]
    %v538 = vld [vmem:[#allocation10 + $0x59c] sm:$0xf]
    %v539 = vld [vmem:[#allocation10 + $0x5a0] sm:$0xf]
    %v540 = vld [vmem:[#allocation10 + $0x5a4] sm:$0xf]
    %v541 = vld [vmem:[#allocation10 + $0x5a8] sm:$0xf]
    %v542 = vld [vmem:[#allocation10 + $0x5ac] sm:$0xf]
    %v543 = vld [vmem:[#allocation10 + $0x5b0] sm:$0xf]
    %v544 = vld [vmem:[#allocation10 + $0x5b4] sm:$0xf]
    %v545 = vld [vmem:[#allocation10 + $0x5b8] sm:$0xf]
    %v546 = vld [vmem:[#allocation10 + $0x5bc] sm:$0xf]
    %v547 = vld [vmem:[#allocation10 + $0x5c0] sm:$0xf]
    %v548 = vld [vmem:[#allocation10 + $0x5c4] sm:$0xf]
    %v549 = vld [vmem:[#allocation10 + $0x5c8] sm:$0xf]
    %v550 = vld [vmem:[#allocation10 + $0x5cc] sm:$0xf]
    %v551 = vld [vmem:[#allocation10 + $0x5d0] sm:$0xf]
    %v552 = vld [vmem:[#allocation10 + $0x5d4] sm:$0xf]
    %v553 = vld [vmem:[#allocation10 + $0x5d8] sm:$0xf]
    %v554 = vld [vmem:[#allocation10 + $0x5dc] sm:$0xf]
    %v555 = vld [vmem:[#allocation10 + $0x5e0] sm:$0xf]
    %v556 = vld [vmem:[#allocation10 + $0x5e4] sm:$0xf]
    %v557 = vld [vmem:[#allocation10 + $0x5e8] sm:$0xf]
    %v558 = vld [vmem:[#allocation10 + $0x5ec] sm:$0xf]
    %v559 = vld [vmem:[#allocation10 + $0x5f0] sm:$0xf]
    %v560 = vld [vmem:[#allocation10 + $0x5f4] sm:$0xf]
    %v561 = vld [vmem:[#allocation10 + $0x5f8] sm:$0xf]
    %v562 = vld [vmem:[#allocation10 + $0x5fc] sm:$0xf]
    %v563 = vld [vmem:[%s2] sm:$0x1]
    %v564 = vld [vmem:[#allocation12] sm:$0xf]
    %v565 = vld [vmem:[#allocation12 + $0x4] sm:$0xf]
    %v566 = vld [vmem:[#allocation12 + $0x8] sm:$0xf]
    %v567 = vld [vmem:[#allocation12 + $0xc] sm:$0xf]
    %v568 = vld [vmem:[#allocation12 + $0x10] sm:$0xf]
    %v569 = vld [vmem:[#allocation12 + $0x14] sm:$0xf]
    %v570 = vld [vmem:[#allocation12 + $0x18] sm:$0xf]
    %v571 = vld [vmem:[#allocation12 + $0x1c] sm:$0xf]
    %v572 = vld [vmem:[#allocation12 + $0x20] sm:$0xf]
    %v573 = vld [vmem:[#allocation12 + $0x24] sm:$0xf]
    %v574 = vld [vmem:[#allocation12 + $0x28] sm:$0xf]
    %v575 = vld [vmem:[#allocation12 + $0x2c] sm:$0xf]
    %v576 = vld [vmem:[#allocation12 + $0x30] sm:$0xf]
    %v577 = vld [vmem:[#allocation12 + $0x34] sm:$0xf]
    %v578 = vld [vmem:[#allocation12 + $0x38] sm:$0xf]
    %v579 = vld [vmem:[#allocation12 + $0x3c] sm:$0xf]
    %v580 = vld [vmem:[%s4] sm:$0x1]
    %v581 = vld [vmem:[#allocation13] sm:$0xf]
    %v582 = vld [vmem:[#allocation13 + $0x4] sm:$0xf]
    %v583 = vld [vmem:[#allocation13 + $0x8] sm:$0xf]
    %v584 = vld [vmem:[#allocation13 + $0xc] sm:$0xf]
    %v585 = vld [vmem:[#allocation13 + $0x10] sm:$0xf]
    %v586 = vld [vmem:[#allocation13 + $0x14] sm:$0xf]
    %v587 = vld [vmem:[#allocation13 + $0x18] sm:$0xf]
    %v588 = vld [vmem:[#allocation13 + $0x1c] sm:$0xf]
    %v589 = vld [vmem:[#allocation13 + $0x20] sm:$0xf]
    %v590 = vld [vmem:[#allocation13 + $0x24] sm:$0xf]
    %v591 = vld [vmem:[#allocation13 + $0x28] sm:$0xf]
    %v592 = vld [vmem:[#allocation13 + $0x2c] sm:$0xf]
    %v593 = vld [vmem:[#allocation13 + $0x30] sm:$0xf]
    %v594 = vld [vmem:[#allocation13 + $0x34] sm:$0xf]
    %v595 = vld [vmem:[#allocation13 + $0x38] sm:$0xf]
    %v596 = vld [vmem:[#allocation13 + $0x3c] sm:$0xf]
    %v597 = vld [vmem:[%s6] sm:$0x1]
    %v598 = vld [vmem:[#allocation15] sm:$0xff]
    %v599 = vld [vmem:[#allocation15 + $0x8] sm:$0xff]
    %v600 = vld [vmem:[#allocation15 + $0x10] sm:$0xff]
    %v601 = vld [vmem:[#allocation15 + $0x18] sm:$0xff]
    %v602 = vld [vmem:[#allocation15 + $0x20] sm:$0xff]
    %v603 = vld [vmem:[#allocation15 + $0x28] sm:$0xff]
    %v604 = vld [vmem:[#allocation15 + $0x30] sm:$0xff]
    %v605 = vld [vmem:[#allocation15 + $0x38] sm:$0xff]
    %v606 = vld [vmem:[#allocation15 + $0x40] sm:$0xff]
    %v607 = vld [vmem:[#allocation15 + $0x48] sm:$0xff]
    %v608 = vld [vmem:[#allocation15 + $0x50] sm:$0xff]
    %v609 = vld [vmem:[#allocation15 + $0x58] sm:$0xff]
    %v610 = vld [vmem:[#allocation15 + $0x60] sm:$0xff]
    %v611 = vld [vmem:[#allocation15 + $0x68] sm:$0xff]
    %v612 = vld [vmem:[#allocation15 + $0x70] sm:$0xff]
    %v613 = vld [vmem:[#allocation15 + $0x78] sm:$0xff]
    %v614 = vld [vmem:[#allocation15 + $0x80] sm:$0xff]
    %v615 = vld [vmem:[#allocation15 + $0x88] sm:$0xff]
    %v616 = vld [vmem:[#allocation15 + $0x90] sm:$0xff]
    %v617 = vld [vmem:[#allocation15 + $0x98] sm:$0xff]
    %v618 = vld [vmem:[#allocation15 + $0xa0] sm:$0xff]
    %v619 = vld [vmem:[#allocation15 + $0xa8] sm:$0xff]
    %v620 = vld [vmem:[#allocation15 + $0xb0] sm:$0xff]
    %v621 = vld [vmem:[#allocation15 + $0xb8] sm:$0xff]
    %v622 = vld [vmem:[#allocation15 + $0xc0] sm:$0xff]
    %v623 = vld [vmem:[#allocation15 + $0xc8] sm:$0xff]
    %v624 = vld [vmem:[#allocation15 + $0xd0] sm:$0xff]
    %v625 = vld [vmem:[#allocation15 + $0xd8] sm:$0xff]
    %v626 = vld [vmem:[#allocation15 + $0xe0] sm:$0xff]
    %v627 = vld [vmem:[#allocation15 + $0xe8] sm:$0xff]
    %v628 = vld [vmem:[#allocation15 + $0xf0] sm:$0xff]
    %v629 = vld [vmem:[#allocation15 + $0xf8] sm:$0xff]
    %v630 = vld [vmem:[#allocation15 + $0x100] sm:$0xff]
    %v631 = vld [vmem:[#allocation15 + $0x108] sm:$0xff]
    %v632 = vld [vmem:[#allocation15 + $0x110] sm:$0xff]
    %v633 = vld [vmem:[#allocation15 + $0x118] sm:$0xff]
    %v634 = vld [vmem:[#allocation15 + $0x120] sm:$0xff]
    %v635 = vld [vmem:[#allocation15 + $0x128] sm:$0xff]
    %v636 = vld [vmem:[#allocation15 + $0x130] sm:$0xff]
    %v637 = vld [vmem:[#allocation15 + $0x138] sm:$0xff]
    %v638 = vld [vmem:[#allocation15 + $0x140] sm:$0xff]
    %v639 = vld [vmem:[#allocation15 + $0x148] sm:$0xff]
    %v640 = vld [vmem:[#allocation15 + $0x150] sm:$0xff]
    %v641 = vld [vmem:[#allocation15 + $0x158] sm:$0xff]
    %v642 = vld [vmem:[#allocation15 + $0x160] sm:$0xff]
    %v643 = vld [vmem:[#allocation15 + $0x168] sm:$0xff]
    %v644 = vld [vmem:[#allocation15 + $0x170] sm:$0xff]
    %v645 = vld [vmem:[#allocation15 + $0x178] sm:$0xff]
    %v646 = vld [vmem:[#allocation15 + $0x180] sm:$0xff]
    %v647 = vld [vmem:[#allocation15 + $0x188] sm:$0xff]
    %v648 = vld [vmem:[#allocation15 + $0x190] sm:$0xff]
    %v649 = vld [vmem:[#allocation15 + $0x198] sm:$0xff]
    %v650 = vld [vmem:[#allocation15 + $0x1a0] sm:$0xff]
    %v651 = vld [vmem:[#allocation15 + $0x1a8] sm:$0xff]
    %v652 = vld [vmem:[#allocation15 + $0x1b0] sm:$0xff]
    %v653 = vld [vmem:[#allocation15 + $0x1b8] sm:$0xff]
    %v654 = vld [vmem:[#allocation15 + $0x1c0] sm:$0xff]
    %v655 = vld [vmem:[#allocation15 + $0x1c8] sm:$0xff]
    %v656 = vld [vmem:[#allocation15 + $0x1d0] sm:$0xff]
    %v657 = vld [vmem:[#allocation15 + $0x1d8] sm:$0xff]
    %v658 = vld [vmem:[#allocation15 + $0x1e0] sm:$0xff]
    %v659 = vld [vmem:[#allocation15 + $0x1e8] sm:$0xff]
    %v660 = vld [vmem:[#allocation15 + $0x1f0] sm:$0xff]
    %v661 = vld [vmem:[#allocation15 + $0x1f8] sm:$0xff]
    %v662 = vld [vmem:[#allocation15 + $0x200] sm:$0xff]
    %v663 = vld [vmem:[#allocation15 + $0x208] sm:$0xff]
    %v664 = vld [vmem:[#allocation15 + $0x210] sm:$0xff]
    %v665 = vld [vmem:[#allocation15 + $0x218] sm:$0xff]
    %v666 = vld [vmem:[#allocation15 + $0x220] sm:$0xff]
    %v667 = vld [vmem:[#allocation15 + $0x228] sm:$0xff]
    %v668 = vld [vmem:[#allocation15 + $0x230] sm:$0xff]
    %v669 = vld [vmem:[#allocation15 + $0x238] sm:$0xff]
    %v670 = vld [vmem:[#allocation15 + $0x240] sm:$0xff]
    %v671 = vld [vmem:[#allocation15 + $0x248] sm:$0xff]
    %v672 = vld [vmem:[#allocation15 + $0x250] sm:$0xff]
    %v673 = vld [vmem:[#allocation15 + $0x258] sm:$0xff]
    %v674 = vld [vmem:[#allocation15 + $0x260] sm:$0xff]
    %v675 = vld [vmem:[#allocation15 + $0x268] sm:$0xff]
    %v676 = vld [vmem:[#allocation15 + $0x270] sm:$0xff]
    %v677 = vld [vmem:[#allocation15 + $0x278] sm:$0xff]
    %v678 = vld [vmem:[#allocation15 + $0x280] sm:$0xff]
    %v679 = vld [vmem:[#allocation15 + $0x288] sm:$0xff]
    %v680 = vld [vmem:[#allocation15 + $0x290] sm:$0xff]
    %v681 = vld [vmem:[#allocation15 + $0x298] sm:$0xff]
    %v682 = vld [vmem:[#allocation15 + $0x2a0] sm:$0xff]
    %v683 = vld [vmem:[#allocation15 + $0x2a8] sm:$0xff]
    %v684 = vld [vmem:[#allocation15 + $0x2b0] sm:$0xff]
    %v685 = vld [vmem:[#allocation15 + $0x2b8] sm:$0xff]
    %v686 = vld [vmem:[#allocation15 + $0x2c0] sm:$0xff]
    %v687 = vld [vmem:[#allocation15 + $0x2c8] sm:$0xff]
    %v688 = vld [vmem:[#allocation15 + $0x2d0] sm:$0xff]
    %v689 = vld [vmem:[#allocation15 + $0x2d8] sm:$0xff]
    %v690 = vld [vmem:[#allocation15 + $0x2e0] sm:$0xff]
    %v691 = vld [vmem:[#allocation15 + $0x2e8] sm:$0xff]
    %v692 = vld [vmem:[#allocation15 + $0x2f0] sm:$0xff]
    %v693 = vld [vmem:[#allocation15 + $0x2f8] sm:$0xff]
    %v694 = vld [vmem:[#allocation15 + $0x300] sm:$0xff]
    %v695 = vld [vmem:[#allocation15 + $0x308] sm:$0xff]
    %v696 = vld [vmem:[#allocation15 + $0x310] sm:$0xff]
    %v697 = vld [vmem:[#allocation15 + $0x318] sm:$0xff]
    %v698 = vld [vmem:[#allocation15 + $0x320] sm:$0xff]
    %v699 = vld [vmem:[#allocation15 + $0x328] sm:$0xff]
    %v700 = vld [vmem:[#allocation15 + $0x330] sm:$0xff]
    %v701 = vld [vmem:[#allocation15 + $0x338] sm:$0xff]
    %v702 = vld [vmem:[#allocation15 + $0x340] sm:$0xff]
    %v703 = vld [vmem:[#allocation15 + $0x348] sm:$0xff]
    %v704 = vld [vmem:[#allocation15 + $0x350] sm:$0xff]
    %v705 = vld [vmem:[#allocation15 + $0x358] sm:$0xff]
    %v706 = vld [vmem:[#allocation15 + $0x360] sm:$0xff]
    %v707 = vld [vmem:[#allocation15 + $0x368] sm:$0xff]
    %v708 = vld [vmem:[#allocation15 + $0x370] sm:$0xff]
    %v709 = vld [vmem:[#allocation15 + $0x378] sm:$0xff]
    %v710 = vld [vmem:[#allocation15 + $0x380] sm:$0xff]
    %v711 = vld [vmem:[#allocation15 + $0x388] sm:$0xff]
    %v712 = vld [vmem:[#allocation15 + $0x390] sm:$0xff]
    %v713 = vld [vmem:[#allocation15 + $0x398] sm:$0xff]
    %v714 = vld [vmem:[#allocation15 + $0x3a0] sm:$0xff]
    %v715 = vld [vmem:[#allocation15 + $0x3a8] sm:$0xff]
    %v716 = vld [vmem:[#allocation15 + $0x3b0] sm:$0xff]
    %v717 = vld [vmem:[#allocation15 + $0x3b8] sm:$0xff]
    %v718 = vld [vmem:[#allocation15 + $0x3c0] sm:$0xff]
    %v719 = vld [vmem:[#allocation15 + $0x3c8] sm:$0xff]
    %v720 = vld [vmem:[#allocation15 + $0x3d0] sm:$0xff]
    %v721 = vld [vmem:[#allocation15 + $0x3d8] sm:$0xff]
    %v722 = vld [vmem:[#allocation15 + $0x3e0] sm:$0xff]
    %v723 = vld [vmem:[#allocation15 + $0x3e8] sm:$0xff]
    %v724 = vld [vmem:[#allocation15 + $0x3f0] sm:$0xff]
    %v725 = vld [vmem:[#allocation15 + $0x3f8] sm:$0xff]
    %v726 = vld [vmem:[#allocation15 + $0x400] sm:$0xff]
    %v727 = vld [vmem:[#allocation15 + $0x408] sm:$0xff]
    %v728 = vld [vmem:[#allocation15 + $0x410] sm:$0xff]
    %v729 = vld [vmem:[#allocation15 + $0x418] sm:$0xff]
    %v730 = vld [vmem:[#allocation15 + $0x420] sm:$0xff]
    %v731 = vld [vmem:[#allocation15 + $0x428] sm:$0xff]
    %v732 = vld [vmem:[#allocation15 + $0x430] sm:$0xff]
    %v733 = vld [vmem:[#allocation15 + $0x438] sm:$0xff]
    %v734 = vld [vmem:[#allocation15 + $0x440] sm:$0xff]
    %v735 = vld [vmem:[#allocation15 + $0x448] sm:$0xff]
    %v736 = vld [vmem:[#allocation15 + $0x450] sm:$0xff]
    %v737 = vld [vmem:[#allocation15 + $0x458] sm:$0xff]
    %v738 = vld [vmem:[#allocation15 + $0x460] sm:$0xff]
    %v739 = vld [vmem:[#allocation15 + $0x468] sm:$0xff]
    %v740 = vld [vmem:[#allocation15 + $0x470] sm:$0xff]
    %v741 = vld [vmem:[#allocation15 + $0x478] sm:$0xff]
    %v742 = vld [vmem:[#allocation15 + $0x480] sm:$0xff]
    %v743 = vld [vmem:[#allocation15 + $0x488] sm:$0xff]
    %v744 = vld [vmem:[#allocation15 + $0x490] sm:$0xff]
    %v745 = vld [vmem:[#allocation15 + $0x498] sm:$0xff]
    %v746 = vld [vmem:[#allocation15 + $0x4a0] sm:$0xff]
    %v747 = vld [vmem:[#allocation15 + $0x4a8] sm:$0xff]
    %v748 = vld [vmem:[#allocation15 + $0x4b0] sm:$0xff]
    %v749 = vld [vmem:[#allocation15 + $0x4b8] sm:$0xff]
    %v750 = vld [vmem:[#allocation15 + $0x4c0] sm:$0xff]
    %v751 = vld [vmem:[#allocation15 + $0x4c8] sm:$0xff]
    %v752 = vld [vmem:[#allocation15 + $0x4d0] sm:$0xff]
    %v753 = vld [vmem:[#allocation15 + $0x4d8] sm:$0xff]
    %v754 = vld [vmem:[#allocation15 + $0x4e0] sm:$0xff]
    %v755 = vld [vmem:[#allocation15 + $0x4e8] sm:$0xff]
    %v756 = vld [vmem:[#allocation15 + $0x4f0] sm:$0xff]
    %v757 = vld [vmem:[#allocation15 + $0x4f8] sm:$0xff]
    %v758 = vld [vmem:[#allocation15 + $0x500] sm:$0xff]
    %v759 = vld [vmem:[#allocation15 + $0x508] sm:$0xff]
    %v760 = vld [vmem:[#allocation15 + $0x510] sm:$0xff]
    %v761 = vld [vmem:[#allocation15 + $0x518] sm:$0xff]
    %v762 = vld [vmem:[#allocation15 + $0x520] sm:$0xff]
    %v763 = vld [vmem:[#allocation15 + $0x528] sm:$0xff]
    %v764 = vld [vmem:[#allocation15 + $0x530] sm:$0xff]
    %v765 = vld [vmem:[#allocation15 + $0x538] sm:$0xff]
    %v766 = vld [vmem:[#allocation15 + $0x540] sm:$0xff]
    %v767 = vld [vmem:[#allocation15 + $0x548] sm:$0xff]
    %v768 = vld [vmem:[#allocation15 + $0x550] sm:$0xff]
    %v769 = vld [vmem:[#allocation15 + $0x558] sm:$0xff]
    %v770 = vld [vmem:[#allocation15 + $0x560] sm:$0xff]
    %v771 = vld [vmem:[#allocation15 + $0x568] sm:$0xff]
    %v772 = vld [vmem:[#allocation15 + $0x570] sm:$0xff]
    %v773 = vld [vmem:[#allocation15 + $0x578] sm:$0xff]
    %v774 = vld [vmem:[#allocation15 + $0x580] sm:$0xff]
    %v775 = vld [vmem:[#allocation15 + $0x588] sm:$0xff]
    %v776 = vld [vmem:[#allocation15 + $0x590] sm:$0xff]
    %v777 = vld [vmem:[#allocation15 + $0x598] sm:$0xff]
    %v778 = vld [vmem:[#allocation15 + $0x5a0] sm:$0xff]
    %v779 = vld [vmem:[#allocation15 + $0x5a8] sm:$0xff]
    %v780 = vld [vmem:[#allocation15 + $0x5b0] sm:$0xff]
    %v781 = vld [vmem:[#allocation15 + $0x5b8] sm:$0xff]
    %v782 = vld [vmem:[#allocation15 + $0x5c0] sm:$0xff]
    %v783 = vld [vmem:[#allocation15 + $0x5c8] sm:$0xff]
    %v784 = vld [vmem:[#allocation15 + $0x5d0] sm:$0xff]
    %v785 = vld [vmem:[#allocation15 + $0x5d8] sm:$0xff]
    %v786 = vld [vmem:[#allocation15 + $0x5e0] sm:$0xff]
    %v787 = vld [vmem:[#allocation15 + $0x5e8] sm:$0xff]
    %v788 = vld [vmem:[#allocation15 + $0x5f0] sm:$0xff]
    %v789 = vld [vmem:[#allocation15 + $0x5f8] sm:$0xff]
    %v790 = vld [vmem:[#allocation16] sm:$0xff]
    %v791 = vld [vmem:[#allocation16 + $0x8] sm:$0xff]
    %v792 = vld [vmem:[#allocation16 + $0x10] sm:$0xff]
    %v794 = vlaneseq
    %v795 = vshrl.u32 %v794, 7
    %v796 = vsub.s32 0, %v795
    %v797 = vrot.slane %v563, %v796
    %v1183 = vunpack.c.l.b16 %v179
    %v1184 = vunpack.c.l.b16 %v180
    %v1185 = vunpack.c.l.b16 %v181
    %v1186 = vunpack.c.l.b16 %v182
    %v1187 = vunpack.c.l.b16 %v183
    %v1188 = vunpack.c.l.b16 %v184
    %v1189 = vunpack.c.l.b16 %v185
    %v1190 = vunpack.c.l.b16 %v186
    %v1191 = vunpack.c.l.b16 %v187
    %v1192 = vunpack.c.l.b16 %v188
    %v1193 = vunpack.c.l.b16 %v189
    %v1194 = vunpack.c.l.b16 %v190
    %v1195 = vunpack.c.l.b16 %v191
    %v1196 = vunpack.c.l.b16 %v192
    %v1197 = vunpack.c.l.b16 %v193
    %v1198 = vunpack.c.l.b16 %v194
    %v1199 = vunpack.c.l.b16 %v195
    %v1200 = vunpack.c.l.b16 %v196
    %v1201 = vunpack.c.l.b16 %v197
    %v1202 = vunpack.c.l.b16 %v198
    %v1203 = vunpack.c.l.b16 %v199
    %v1204 = vunpack.c.l.b16 %v200
    %v1205 = vunpack.c.l.b16 %v201
    %v1206 = vunpack.c.l.b16 %v202
    %v1207 = vunpack.c.l.b16 %v203
    %v1208 = vunpack.c.l.b16 %v204
    %v1209 = vunpack.c.l.b16 %v205
    %v1210 = vunpack.c.l.b16 %v206
    %v1211 = vunpack.c.l.b16 %v207
    %v1212 = vunpack.c.l.b16 %v208
    %v1213 = vunpack.c.l.b16 %v209
    %v1214 = vunpack.c.l.b16 %v210
    %v1215 = vunpack.c.l.b16 %v211
    %v1216 = vunpack.c.l.b16 %v212
    %v1217 = vunpack.c.l.b16 %v213
    %v1218 = vunpack.c.l.b16 %v214
    %v1219 = vunpack.c.l.b16 %v215
    %v1220 = vunpack.c.l.b16 %v216
    %v1221 = vunpack.c.l.b16 %v217
    %v1222 = vunpack.c.l.b16 %v218
    %v1223 = vunpack.c.l.b16 %v219
    %v1224 = vunpack.c.l.b16 %v220
    %v1225 = vunpack.c.l.b16 %v221
    %v1226 = vunpack.c.l.b16 %v222
    %v1227 = vunpack.c.l.b16 %v223
    %v1228 = vunpack.c.l.b16 %v224
    %v1229 = vunpack.c.l.b16 %v225
    %v1230 = vunpack.c.l.b16 %v226
    %v1231 = vunpack.c.l.b16 %v227
    %v1232 = vunpack.c.l.b16 %v228
    %v1233 = vunpack.c.l.b16 %v229
    %v1234 = vunpack.c.l.b16 %v230
    %v1235 = vunpack.c.l.b16 %v231
    %v1236 = vunpack.c.l.b16 %v232
    %v1237 = vunpack.c.l.b16 %v233
    %v1238 = vunpack.c.l.b16 %v234
    %v1239 = vunpack.c.l.b16 %v235
    %v1240 = vunpack.c.l.b16 %v236
    %v1241 = vunpack.c.l.b16 %v237
    %v1242 = vunpack.c.l.b16 %v238
    %v1243 = vunpack.c.l.b16 %v239
    %v1244 = vunpack.c.l.b16 %v240
    %v1245 = vunpack.c.l.b16 %v241
    %v1246 = vunpack.c.l.b16 %v242
    %v1247 = vunpack.c.l.b16 %v243
    %v1248 = vunpack.c.l.b16 %v244
    %v1249 = vunpack.c.l.b16 %v245
    %v1250 = vunpack.c.l.b16 %v246
    %v1251 = vunpack.c.l.b16 %v247
    %v1252 = vunpack.c.l.b16 %v248
    %v1253 = vunpack.c.l.b16 %v249
    %v1254 = vunpack.c.l.b16 %v250
    %v1255 = vunpack.c.l.b16 %v251
    %v1256 = vunpack.c.l.b16 %v252
    %v1257 = vunpack.c.l.b16 %v253
    %v1258 = vunpack.c.l.b16 %v254
    %v1259 = vunpack.c.l.b16 %v255
    %v1260 = vunpack.c.l.b16 %v256
    %v1261 = vunpack.c.l.b16 %v257
    %v1262 = vunpack.c.l.b16 %v258
    %v1263 = vunpack.c.l.b16 %v259
    %v1264 = vunpack.c.l.b16 %v260
    %v1265 = vunpack.c.l.b16 %v261
    %v1266 = vunpack.c.l.b16 %v262
    %v1267 = vunpack.c.l.b16 %v263
    %v1268 = vunpack.c.l.b16 %v264
    %v1269 = vunpack.c.l.b16 %v265
    %v1270 = vunpack.c.l.b16 %v266
    %v1271 = vunpack.c.l.b16 %v267
    %v1272 = vunpack.c.l.b16 %v268
    %v1273 = vunpack.c.l.b16 %v269
    %v1274 = vunpack.c.l.b16 %v270
    %v1275 = vunpack.c.l.b16 %v271
    %v1276 = vunpack.c.l.b16 %v272
    %v1277 = vunpack.c.l.b16 %v273
    %v1278 = vunpack.c.l.b16 %v274
    %v1279 = vunpack.c.l.b16 %v275
    %v1280 = vunpack.c.l.b16 %v276
    %v1281 = vunpack.c.l.b16 %v277
    %v1282 = vunpack.c.l.b16 %v278
    %v1283 = vunpack.c.l.b16 %v279
    %v1284 = vunpack.c.l.b16 %v280
    %v1285 = vunpack.c.l.b16 %v281
    %v1286 = vunpack.c.l.b16 %v282
    %v1287 = vunpack.c.l.b16 %v283
    %v1288 = vunpack.c.l.b16 %v284
    %v1289 = vunpack.c.l.b16 %v285
    %v1290 = vunpack.c.l.b16 %v286
    %v1291 = vunpack.c.l.b16 %v287
    %v1292 = vunpack.c.l.b16 %v288
    %v1293 = vunpack.c.l.b16 %v289
    %v1294 = vunpack.c.l.b16 %v290
    %v1295 = vunpack.c.l.b16 %v291
    %v1296 = vunpack.c.l.b16 %v292
    %v1297 = vunpack.c.l.b16 %v293
    %v1298 = vunpack.c.l.b16 %v294
    %v1299 = vunpack.c.l.b16 %v295
    %v1300 = vunpack.c.l.b16 %v296
    %v1301 = vunpack.c.l.b16 %v297
    %v1302 = vunpack.c.l.b16 %v298
    %v1303 = vunpack.c.l.b16 %v299
    %v1304 = vunpack.c.l.b16 %v300
    %v1305 = vunpack.c.l.b16 %v301
    %v1306 = vunpack.c.l.b16 %v302
    %v1307 = vunpack.c.l.b16 %v303
    %v1308 = vunpack.c.l.b16 %v304
    %v1309 = vunpack.c.l.b16 %v305
    %v1310 = vunpack.c.l.b16 %v306
    %v1311 = vunpack.c.l.b16 %v307
    %v1312 = vunpack.c.l.b16 %v308
    %v1313 = vunpack.c.l.b16 %v309
    %v1314 = vunpack.c.l.b16 %v310
    %v1315 = vunpack.c.l.b16 %v311
    %v1316 = vunpack.c.l.b16 %v312
    %v1317 = vunpack.c.l.b16 %v313
    %v1318 = vunpack.c.l.b16 %v314
    %v1319 = vunpack.c.l.b16 %v315
    %v1320 = vunpack.c.l.b16 %v316
    %v1321 = vunpack.c.l.b16 %v317
    %v1322 = vunpack.c.l.b16 %v318
    %v1323 = vunpack.c.l.b16 %v319
    %v1324 = vunpack.c.l.b16 %v320
    %v1325 = vunpack.c.l.b16 %v321
    %v1326 = vunpack.c.l.b16 %v322
    %v1327 = vunpack.c.l.b16 %v323
    %v1328 = vunpack.c.l.b16 %v324
    %v1329 = vunpack.c.l.b16 %v325
    %v1330 = vunpack.c.l.b16 %v326
    %v1331 = vunpack.c.l.b16 %v327
    %v1332 = vunpack.c.l.b16 %v328
    %v1333 = vunpack.c.l.b16 %v329
    %v1334 = vunpack.c.l.b16 %v330
    %v1335 = vunpack.c.l.b16 %v331
    %v1336 = vunpack.c.l.b16 %v332
    %v1337 = vunpack.c.l.b16 %v333
    %v1338 = vunpack.c.l.b16 %v334
    %v1339 = vunpack.c.l.b16 %v335
    %v1340 = vunpack.c.l.b16 %v336
    %v1341 = vunpack.c.l.b16 %v337
    %v1342 = vunpack.c.l.b16 %v338
    %v1343 = vunpack.c.l.b16 %v339
    %v1344 = vunpack.c.l.b16 %v340
    %v1345 = vunpack.c.l.b16 %v341
    %v1346 = vunpack.c.l.b16 %v342
    %v1347 = vunpack.c.l.b16 %v343
    %v1348 = vunpack.c.l.b16 %v344
    %v1349 = vunpack.c.l.b16 %v345
    %v1350 = vunpack.c.l.b16 %v346
    %v1351 = vunpack.c.l.b16 %v347
    %v1352 = vunpack.c.l.b16 %v348
    %v1353 = vunpack.c.l.b16 %v349
    %v1354 = vunpack.c.l.b16 %v350
    %v1355 = vunpack.c.l.b16 %v351
    %v1356 = vunpack.c.l.b16 %v352
    %v1357 = vunpack.c.l.b16 %v353
    %v1358 = vunpack.c.l.b16 %v354
    %v1359 = vunpack.c.l.b16 %v355
    %v1360 = vunpack.c.l.b16 %v356
    %v1361 = vunpack.c.l.b16 %v357
    %v1362 = vunpack.c.l.b16 %v358
    %v1363 = vunpack.c.l.b16 %v359
    %v1364 = vunpack.c.l.b16 %v360
    %v1365 = vunpack.c.l.b16 %v361
    %v1366 = vunpack.c.l.b16 %v362
    %v1367 = vunpack.c.l.b16 %v363
    %v1368 = vunpack.c.l.b16 %v364
    %v1369 = vunpack.c.l.b16 %v365
    %v1370 = vunpack.c.l.b16 %v366
    %v1371 = vunpack.c.l.b16 %v367
    %v1372 = vunpack.c.l.b16 %v368
    %v1373 = vunpack.c.l.b16 %v369
    %v1374 = vunpack.c.l.b16 %v370
    %v1375 = vunpack.c.l.b16 %v371
    %v1376 = vunpack.c.l.b16 %v372
    %v1377 = vunpack.c.l.b16 %v373
    %v1378 = vunpack.c.l.b16 %v374
    %v1379 = vunpack.c.l.b16 %v375
    %v1380 = vunpack.c.l.b16 %v376
    %v1381 = vunpack.c.l.b16 %v377
    %v1382 = vunpack.c.l.b16 %v378
    %v1383 = vunpack.c.l.b16 %v379
    %v1384 = vunpack.c.l.b16 %v380
    %v1385 = vunpack.c.l.b16 %v381
    %v1386 = vunpack.c.l.b16 %v382
    %v1387 = vunpack.c.l.b16 %v383
    %v1388 = vunpack.c.l.b16 %v384
    %v1389 = vunpack.c.l.b16 %v385
    %v1390 = vunpack.c.l.b16 %v386
    %v1391 = vunpack.c.l.b16 %v387
    %v1392 = vunpack.c.l.b16 %v388
    %v1393 = vunpack.c.l.b16 %v389
    %v1394 = vunpack.c.l.b16 %v390
    %v1395 = vunpack.c.l.b16 %v391
    %v1396 = vunpack.c.l.b16 %v392
    %v1397 = vunpack.c.l.b16 %v393
    %v1398 = vunpack.c.l.b16 %v394
    %v1399 = vunpack.c.l.b16 %v395
    %v1400 = vunpack.c.l.b16 %v396
    %v1401 = vunpack.c.l.b16 %v397
    %v1402 = vunpack.c.l.b16 %v398
    %v1403 = vunpack.c.l.b16 %v399
    %v1404 = vunpack.c.l.b16 %v400
    %v1405 = vunpack.c.l.b16 %v401
    %v1406 = vunpack.c.l.b16 %v402
    %v1407 = vunpack.c.l.b16 %v403
    %v1408 = vunpack.c.l.b16 %v404
    %v1409 = vunpack.c.l.b16 %v405
    %v1410 = vunpack.c.l.b16 %v406
    %v1411 = vunpack.c.l.b16 %v407
    %v1412 = vunpack.c.l.b16 %v408
    %v1413 = vunpack.c.l.b16 %v409
    %v1414 = vunpack.c.l.b16 %v410
    %v1415 = vunpack.c.l.b16 %v411
    %v1416 = vunpack.c.l.b16 %v412
    %v1417 = vunpack.c.l.b16 %v413
    %v1418 = vunpack.c.l.b16 %v414
    %v1419 = vunpack.c.l.b16 %v415
    %v1420 = vunpack.c.l.b16 %v416
    %v1421 = vunpack.c.l.b16 %v417
    %v1422 = vunpack.c.l.b16 %v418
    %v1423 = vunpack.c.l.b16 %v419
    %v1424 = vunpack.c.l.b16 %v420
    %v1425 = vunpack.c.l.b16 %v421
    %v1426 = vunpack.c.l.b16 %v422
    %v1427 = vunpack.c.l.b16 %v423
    %v1428 = vunpack.c.l.b16 %v424
    %v1429 = vunpack.c.l.b16 %v425
    %v1430 = vunpack.c.l.b16 %v426
    %v1431 = vunpack.c.l.b16 %v427
    %v1432 = vunpack.c.l.b16 %v428
    %v1433 = vunpack.c.l.b16 %v429
    %v1434 = vunpack.c.l.b16 %v430
    %v1435 = vunpack.c.l.b16 %v431
    %v1436 = vunpack.c.l.b16 %v432
    %v1437 = vunpack.c.l.b16 %v433
    %v1438 = vunpack.c.l.b16 %v434
    %v1439 = vunpack.c.l.b16 %v435
    %v1440 = vunpack.c.l.b16 %v436
    %v1441 = vunpack.c.l.b16 %v437
    %v1442 = vunpack.c.l.b16 %v438
    %v1443 = vunpack.c.l.b16 %v439
    %v1444 = vunpack.c.l.b16 %v440
    %v1445 = vunpack.c.l.b16 %v441
    %v1446 = vunpack.c.l.b16 %v442
    %v1447 = vunpack.c.l.b16 %v443
    %v1448 = vunpack.c.l.b16 %v444
    %v1449 = vunpack.c.l.b16 %v445
    %v1450 = vunpack.c.l.b16 %v446
    %v1451 = vunpack.c.l.b16 %v447
    %v1452 = vunpack.c.l.b16 %v448
    %v1453 = vunpack.c.l.b16 %v449
    %v1454 = vunpack.c.l.b16 %v450
    %v1455 = vunpack.c.l.b16 %v451
    %v1456 = vunpack.c.l.b16 %v452
    %v1457 = vunpack.c.l.b16 %v453
    %v1458 = vunpack.c.l.b16 %v454
    %v1459 = vunpack.c.l.b16 %v455
    %v1460 = vunpack.c.l.b16 %v456
    %v1461 = vunpack.c.l.b16 %v457
    %v1462 = vunpack.c.l.b16 %v458
    %v1463 = vunpack.c.l.b16 %v459
    %v1464 = vunpack.c.l.b16 %v460
    %v1465 = vunpack.c.l.b16 %v461
    %v1466 = vunpack.c.l.b16 %v462
    %v1467 = vunpack.c.l.b16 %v463
    %v1468 = vunpack.c.l.b16 %v464
    %v1469 = vunpack.c.l.b16 %v465
    %v1470 = vunpack.c.l.b16 %v466
    %v1471 = vunpack.c.l.b16 %v467
    %v1472 = vunpack.c.l.b16 %v468
    %v1473 = vunpack.c.l.b16 %v469
    %v1474 = vunpack.c.l.b16 %v470
    %v1475 = vunpack.c.l.b16 %v471
    %v1476 = vunpack.c.l.b16 %v472
    %v1477 = vunpack.c.l.b16 %v473
    %v1478 = vunpack.c.l.b16 %v474
    %v1479 = vunpack.c.l.b16 %v475
    %v1480 = vunpack.c.l.b16 %v476
    %v1481 = vunpack.c.l.b16 %v477
    %v1482 = vunpack.c.l.b16 %v478
    %v1483 = vunpack.c.l.b16 %v479
    %v1484 = vunpack.c.l.b16 %v480
    %v1485 = vunpack.c.l.b16 %v481
    %v1486 = vunpack.c.l.b16 %v482
    %v1487 = vunpack.c.l.b16 %v483
    %v1488 = vunpack.c.l.b16 %v484
    %v1489 = vunpack.c.l.b16 %v485
    %v1490 = vunpack.c.l.b16 %v486
    %v1491 = vunpack.c.l.b16 %v487
    %v1492 = vunpack.c.l.b16 %v488
    %v1493 = vunpack.c.l.b16 %v489
    %v1494 = vunpack.c.l.b16 %v490
    %v1495 = vunpack.c.l.b16 %v491
    %v1496 = vunpack.c.l.b16 %v492
    %v1497 = vunpack.c.l.b16 %v493
    %v1498 = vunpack.c.l.b16 %v494
    %v1499 = vunpack.c.l.b16 %v495
    %v1500 = vunpack.c.l.b16 %v496
    %v1501 = vunpack.c.l.b16 %v497
    %v1502 = vunpack.c.l.b16 %v498
    %v1503 = vunpack.c.l.b16 %v499
    %v1504 = vunpack.c.l.b16 %v500
    %v1505 = vunpack.c.l.b16 %v501
    %v1506 = vunpack.c.l.b16 %v502
    %v1507 = vunpack.c.l.b16 %v503
    %v1508 = vunpack.c.l.b16 %v504
    %v1509 = vunpack.c.l.b16 %v505
    %v1510 = vunpack.c.l.b16 %v506
    %v1511 = vunpack.c.l.b16 %v507
    %v1512 = vunpack.c.l.b16 %v508
    %v1513 = vunpack.c.l.b16 %v509
    %v1514 = vunpack.c.l.b16 %v510
    %v1515 = vunpack.c.l.b16 %v511
    %v1516 = vunpack.c.l.b16 %v512
    %v1517 = vunpack.c.l.b16 %v513
    %v1518 = vunpack.c.l.b16 %v514
    %v1519 = vunpack.c.l.b16 %v515
    %v1520 = vunpack.c.l.b16 %v516
    %v1521 = vunpack.c.l.b16 %v517
    %v1522 = vunpack.c.l.b16 %v518
    %v1523 = vunpack.c.l.b16 %v519
    %v1524 = vunpack.c.l.b16 %v520
    %v1525 = vunpack.c.l.b16 %v521
    %v1526 = vunpack.c.l.b16 %v522
    %v1527 = vunpack.c.l.b16 %v523
    %v1528 = vunpack.c.l.b16 %v524
    %v1529 = vunpack.c.l.b16 %v525
    %v1530 = vunpack.c.l.b16 %v526
    %v1531 = vunpack.c.l.b16 %v527
    %v1532 = vunpack.c.l.b16 %v528
    %v1533 = vunpack.c.l.b16 %v529
    %v1534 = vunpack.c.l.b16 %v530
    %v1535 = vunpack.c.l.b16 %v531
    %v1536 = vunpack.c.l.b16 %v532
    %v1537 = vunpack.c.l.b16 %v533
    %v1538 = vunpack.c.l.b16 %v534
    %v1539 = vunpack.c.l.b16 %v535
    %v1540 = vunpack.c.l.b16 %v536
    %v1541 = vunpack.c.l.b16 %v537
    %v1542 = vunpack.c.l.b16 %v538
    %v1543 = vunpack.c.l.b16 %v539
    %v1544 = vunpack.c.l.b16 %v540
    %v1545 = vunpack.c.l.b16 %v541
    %v1546 = vunpack.c.l.b16 %v542
    %v1547 = vunpack.c.l.b16 %v543
    %v1548 = vunpack.c.l.b16 %v544
    %v1549 = vunpack.c.l.b16 %v545
    %v1550 = vunpack.c.l.b16 %v546
    %v1551 = vunpack.c.l.b16 %v547
    %v1552 = vunpack.c.l.b16 %v548
    %v1553 = vunpack.c.l.b16 %v549
    %v1554 = vunpack.c.l.b16 %v550
    %v1555 = vunpack.c.l.b16 %v551
    %v1556 = vunpack.c.l.b16 %v552
    %v1557 = vunpack.c.l.b16 %v553
    %v1558 = vunpack.c.l.b16 %v554
    %v1559 = vunpack.c.l.b16 %v555
    %v1560 = vunpack.c.l.b16 %v556
    %v1561 = vunpack.c.l.b16 %v557
    %v1562 = vunpack.c.l.b16 %v558
    %v1563 = vunpack.c.l.b16 %v559
    %v1564 = vunpack.c.l.b16 %v560
    %v1565 = vunpack.c.l.b16 %v561
    %v1566 = vunpack.c.l.b16 %v562
    %v1567 = vpack.c.b16 %v1184, %v1183
    %v1568 = vpack.c.b16 %v1186, %v1185
    %v1569 = vpack.c.b16 %v1188, %v1187
    %v1570 = vpack.c.b16 %v1190, %v1189
    %v1571 = vpack.c.b16 %v1192, %v1191
    %v1572 = vpack.c.b16 %v1194, %v1193
    %v1573 = vpack.c.b16 %v1196, %v1195
    %v1574 = vpack.c.b16 %v1198, %v1197
    %v1575 = vpack.c.b16 %v1200, %v1199
    %v1576 = vpack.c.b16 %v1202, %v1201
    %v1577 = vpack.c.b16 %v1204, %v1203
    %v1578 = vpack.c.b16 %v1206, %v1205
    %v1579 = vpack.c.b16 %v1208, %v1207
    %v1580 = vpack.c.b16 %v1210, %v1209
    %v1581 = vpack.c.b16 %v1212, %v1211
    %v1582 = vpack.c.b16 %v1214, %v1213
    %v1583 = vpack.c.b16 %v1216, %v1215
    %v1584 = vpack.c.b16 %v1218, %v1217
    %v1585 = vpack.c.b16 %v1220, %v1219
    %v1586 = vpack.c.b16 %v1222, %v1221
    %v1587 = vpack.c.b16 %v1224, %v1223
    %v1588 = vpack.c.b16 %v1226, %v1225
    %v1589 = vpack.c.b16 %v1228, %v1227
    %v1590 = vpack.c.b16 %v1230, %v1229
    %v1591 = vpack.c.b16 %v1232, %v1231
    %v1592 = vpack.c.b16 %v1234, %v1233
    %v1593 = vpack.c.b16 %v1236, %v1235
    %v1594 = vpack.c.b16 %v1238, %v1237
    %v1595 = vpack.c.b16 %v1240, %v1239
    %v1596 = vpack.c.b16 %v1242, %v1241
    %v1597 = vpack.c.b16 %v1244, %v1243
    %v1598 = vpack.c.b16 %v1246, %v1245
    %v1599 = vpack.c.b16 %v1248, %v1247
    %v1600 = vpack.c.b16 %v1250, %v1249
    %v1601 = vpack.c.b16 %v1252, %v1251
    %v1602 = vpack.c.b16 %v1254, %v1253
    %v1603 = vpack.c.b16 %v1256, %v1255
    %v1604 = vpack.c.b16 %v1258, %v1257
    %v1605 = vpack.c.b16 %v1260, %v1259
    %v1606 = vpack.c.b16 %v1262, %v1261
    %v1607 = vpack.c.b16 %v1264, %v1263
    %v1608 = vpack.c.b16 %v1266, %v1265
    %v1609 = vpack.c.b16 %v1268, %v1267
    %v1610 = vpack.c.b16 %v1270, %v1269
    %v1611 = vpack.c.b16 %v1272, %v1271
    %v1612 = vpack.c.b16 %v1274, %v1273
    %v1613 = vpack.c.b16 %v1276, %v1275
    %v1614 = vpack.c.b16 %v1278, %v1277
    %v1615 = vpack.c.b16 %v1280, %v1279
    %v1616 = vpack.c.b16 %v1282, %v1281
    %v1617 = vpack.c.b16 %v1284, %v1283
    %v1618 = vpack.c.b16 %v1286, %v1285
    %v1619 = vpack.c.b16 %v1288, %v1287
    %v1620 = vpack.c.b16 %v1290, %v1289
    %v1621 = vpack.c.b16 %v1292, %v1291
    %v1622 = vpack.c.b16 %v1294, %v1293
    %v1623 = vpack.c.b16 %v1296, %v1295
    %v1624 = vpack.c.b16 %v1298, %v1297
    %v1625 = vpack.c.b16 %v1300, %v1299
    %v1626 = vpack.c.b16 %v1302, %v1301
    %v1627 = vpack.c.b16 %v1304, %v1303
    %v1628 = vpack.c.b16 %v1306, %v1305
    %v1629 = vpack.c.b16 %v1308, %v1307
    %v1630 = vpack.c.b16 %v1310, %v1309
    %v1631 = vpack.c.b16 %v1312, %v1311
    %v1632 = vpack.c.b16 %v1314, %v1313
    %v1633 = vpack.c.b16 %v1316, %v1315
    %v1634 = vpack.c.b16 %v1318, %v1317
    %v1635 = vpack.c.b16 %v1320, %v1319
    %v1636 = vpack.c.b16 %v1322, %v1321
    %v1637 = vpack.c.b16 %v1324, %v1323
    %v1638 = vpack.c.b16 %v1326, %v1325
    %v1639 = vpack.c.b16 %v1328, %v1327
    %v1640 = vpack.c.b16 %v1330, %v1329
    %v1641 = vpack.c.b16 %v1332, %v1331
    %v1642 = vpack.c.b16 %v1334, %v1333
    %v1643 = vpack.c.b16 %v1336, %v1335
    %v1644 = vpack.c.b16 %v1338, %v1337
    %v1645 = vpack.c.b16 %v1340, %v1339
    %v1646 = vpack.c.b16 %v1342, %v1341
    %v1647 = vpack.c.b16 %v1344, %v1343
    %v1648 = vpack.c.b16 %v1346, %v1345
    %v1649 = vpack.c.b16 %v1348, %v1347
    %v1650 = vpack.c.b16 %v1350, %v1349
    %v1651 = vpack.c.b16 %v1352, %v1351
    %v1652 = vpack.c.b16 %v1354, %v1353
    %v1653 = vpack.c.b16 %v1356, %v1355
    %v1654 = vpack.c.b16 %v1358, %v1357
    %v1655 = vpack.c.b16 %v1360, %v1359
    %v1656 = vpack.c.b16 %v1362, %v1361
    %v1657 = vpack.c.b16 %v1364, %v1363
    %v1658 = vpack.c.b16 %v1366, %v1365
    %v1659 = vpack.c.b16 %v1368, %v1367
    %v1660 = vpack.c.b16 %v1370, %v1369
    %v1661 = vpack.c.b16 %v1372, %v1371
    %v1662 = vpack.c.b16 %v1374, %v1373
    %v1663 = vpack.c.b16 %v1376, %v1375
    %v1664 = vpack.c.b16 %v1378, %v1377
    %v1665 = vpack.c.b16 %v1380, %v1379
    %v1666 = vpack.c.b16 %v1382, %v1381
    %v1667 = vpack.c.b16 %v1384, %v1383
    %v1668 = vpack.c.b16 %v1386, %v1385
    %v1669 = vpack.c.b16 %v1388, %v1387
    %v1670 = vpack.c.b16 %v1390, %v1389
    %v1671 = vpack.c.b16 %v1392, %v1391
    %v1672 = vpack.c.b16 %v1394, %v1393
    %v1673 = vpack.c.b16 %v1396, %v1395
    %v1674 = vpack.c.b16 %v1398, %v1397
    %v1675 = vpack.c.b16 %v1400, %v1399
    %v1676 = vpack.c.b16 %v1402, %v1401
    %v1677 = vpack.c.b16 %v1404, %v1403
    %v1678 = vpack.c.b16 %v1406, %v1405
    %v1679 = vpack.c.b16 %v1408, %v1407
    %v1680 = vpack.c.b16 %v1410, %v1409
    %v1681 = vpack.c.b16 %v1412, %v1411
    %v1682 = vpack.c.b16 %v1414, %v1413
    %v1683 = vpack.c.b16 %v1416, %v1415
    %v1684 = vpack.c.b16 %v1418, %v1417
    %v1685 = vpack.c.b16 %v1420, %v1419
    %v1686 = vpack.c.b16 %v1422, %v1421
    %v1687 = vpack.c.b16 %v1424, %v1423
    %v1688 = vpack.c.b16 %v1426, %v1425
    %v1689 = vpack.c.b16 %v1428, %v1427
    %v1690 = vpack.c.b16 %v1430, %v1429
    %v1691 = vpack.c.b16 %v1432, %v1431
    %v1692 = vpack.c.b16 %v1434, %v1433
    %v1693 = vpack.c.b16 %v1436, %v1435
    %v1694 = vpack.c.b16 %v1438, %v1437
    %v1695 = vpack.c.b16 %v1440, %v1439
    %v1696 = vpack.c.b16 %v1442, %v1441
    %v1697 = vpack.c.b16 %v1444, %v1443
    %v1698 = vpack.c.b16 %v1446, %v1445
    %v1699 = vpack.c.b16 %v1448, %v1447
    %v1700 = vpack.c.b16 %v1450, %v1449
    %v1701 = vpack.c.b16 %v1452, %v1451
    %v1702 = vpack.c.b16 %v1454, %v1453
    %v1703 = vpack.c.b16 %v1456, %v1455
    %v1704 = vpack.c.b16 %v1458, %v1457
    %v1705 = vpack.c.b16 %v1460, %v1459
    %v1706 = vpack.c.b16 %v1462, %v1461
    %v1707 = vpack.c.b16 %v1464, %v1463
    %v1708 = vpack.c.b16 %v1466, %v1465
    %v1709 = vpack.c.b16 %v1468, %v1467
    %v1710 = vpack.c.b16 %v1470, %v1469
    %v1711 = vpack.c.b16 %v1472, %v1471
    %v1712 = vpack.c.b16 %v1474, %v1473
    %v1713 = vpack.c.b16 %v1476, %v1475
    %v1714 = vpack.c.b16 %v1478, %v1477
    %v1715 = vpack.c.b16 %v1480, %v1479
    %v1716 = vpack.c.b16 %v1482, %v1481
    %v1717 = vpack.c.b16 %v1484, %v1483
    %v1718 = vpack.c.b16 %v1486, %v1485
    %v1719 = vpack.c.b16 %v1488, %v1487
    %v1720 = vpack.c.b16 %v1490, %v1489
    %v1721 = vpack.c.b16 %v1492, %v1491
    %v1722 = vpack.c.b16 %v1494, %v1493
    %v1723 = vpack.c.b16 %v1496, %v1495
    %v1724 = vpack.c.b16 %v1498, %v1497
    %v1725 = vpack.c.b16 %v1500, %v1499
    %v1726 = vpack.c.b16 %v1502, %v1501
    %v1727 = vpack.c.b16 %v1504, %v1503
    %v1728 = vpack.c.b16 %v1506, %v1505
    %v1729 = vpack.c.b16 %v1508, %v1507
    %v1730 = vpack.c.b16 %v1510, %v1509
    %v1731 = vpack.c.b16 %v1512, %v1511
    %v1732 = vpack.c.b16 %v1514, %v1513
    %v1733 = vpack.c.b16 %v1516, %v1515
    %v1734 = vpack.c.b16 %v1518, %v1517
    %v1735 = vpack.c.b16 %v1520, %v1519
    %v1736 = vpack.c.b16 %v1522, %v1521
    %v1737 = vpack.c.b16 %v1524, %v1523
    %v1738 = vpack.c.b16 %v1526, %v1525
    %v1739 = vpack.c.b16 %v1528, %v1527
    %v1740 = vpack.c.b16 %v1530, %v1529
    %v1741 = vpack.c.b16 %v1532, %v1531
    %v1742 = vpack.c.b16 %v1534, %v1533
    %v1743 = vpack.c.b16 %v1536, %v1535
    %v1744 = vpack.c.b16 %v1538, %v1537
    %v1745 = vpack.c.b16 %v1540, %v1539
    %v1746 = vpack.c.b16 %v1542, %v1541
    %v1747 = vpack.c.b16 %v1544, %v1543
    %v1748 = vpack.c.b16 %v1546, %v1545
    %v1749 = vpack.c.b16 %v1548, %v1547
    %v1750 = vpack.c.b16 %v1550, %v1549
    %v1751 = vpack.c.b16 %v1552, %v1551
    %v1752 = vpack.c.b16 %v1554, %v1553
    %v1753 = vpack.c.b16 %v1556, %v1555
    %v1754 = vpack.c.b16 %v1558, %v1557
    %v1755 = vpack.c.b16 %v1560, %v1559
    %v1756 = vpack.c.b16 %v1562, %v1561
    %v1757 = vpack.c.b16 %v1564, %v1563
    %v1758 = vpack.c.b16 %v1566, %v1565
    %1951 = vmatprep.subr.bf16.mxu0 0
    %1952 = vmatpush1.bf16.msra.mxu0 %v1574
    %1953 = vmatprep.subr.bf16.mxu0 0
    %1954 = vmatpush1.bf16.msra.mxu0 %v1573
    %1955 = vmatprep.subr.bf16.mxu0 0
    %1956 = vmatpush1.bf16.msra.mxu0 %v1572
    %1957 = vmatprep.subr.bf16.mxu0 0
    %1958 = vmatpush1.bf16.msra.mxu0 %v1571
    %1959 = vmatprep.subr.bf16.mxu0 0
    %1960 = vmatpush1.bf16.msra.mxu0 %v1570
    %1961 = vmatprep.subr.bf16.mxu0 0
    %1962 = vmatpush1.bf16.msra.mxu0 %v1569
    %1963 = vmatprep.subr.bf16.mxu0 0
    %1964 = vmatpush1.bf16.msra.mxu0 %v1568
    %1965 = vmatprep.subr.bf16.mxu0 0
    %1966 = vmatpush1.bf16.msra.mxu0 %v1567
    %1967 = vmatprep.subr.bf16.mxu0 0
    %1968 = vmatpush2.bf16.msra.mxu0 %v1582
    %1969 = vmatprep.subr.bf16.mxu0 0
    %1970 = vmatpush2.bf16.msra.mxu0 %v1581
    %1971 = vmatprep.subr.bf16.mxu0 0
    %1972 = vmatpush2.bf16.msra.mxu0 %v1580
    %1973 = vmatprep.subr.bf16.mxu0 0
    %1974 = vmatpush2.bf16.msra.mxu0 %v1579
    %1975 = vmatprep.subr.bf16.mxu0 0
    %1976 = vmatpush2.bf16.msra.mxu0 %v1578
    %1977 = vmatprep.subr.bf16.mxu0 0
    %1978 = vmatpush2.bf16.msra.mxu0 %v1577
    %1979 = vmatprep.subr.bf16.mxu0 0
    %1980 = vmatpush2.bf16.msra.mxu0 %v1576
    %1981 = vmatprep.subr.bf16.mxu0 0
    %1982 = vmatpush2.bf16.msra.mxu0 %v1575
    %1983 = vmatprep.mubr.bf16.mxu0 %v156
    %1984 = vmatmul.mubr.bf16.gmra.mxu0 %v155
    %v1985 = vpop.f32.mrf.mxu0
    %v1986 = vadd.f32 %v797, %v1985
    %v1987 = vpop.f32.mrf.mxu0
    %v1988 = vpop.f32.mrf.mxu0
    %v1989 = vpop.f32.mrf.mxu0
    %1990 = vdwg.mxu0
    %1991 = vmatprep.subr.bf16.mxu0 0
    %1992 = vmatpush1.bf16.msra.mxu0 %v1590
    %1993 = vmatprep.subr.bf16.mxu0 0
    %1994 = vmatpush1.bf16.msra.mxu0 %v1589
    %1995 = vmatprep.subr.bf16.mxu0 0
    %1996 = vmatpush1.bf16.msra.mxu0 %v1588
    %1997 = vmatprep.subr.bf16.mxu0 0
    %1998 = vmatpush1.bf16.msra.mxu0 %v1587
    %1999 = vmatprep.subr.bf16.mxu0 0
    %2000 = vmatpush1.bf16.msra.mxu0 %v1586
    %2001 = vmatprep.subr.bf16.mxu0 0
    %2002 = vmatpush1.bf16.msra.mxu0 %v1585
    %2003 = vmatprep.subr.bf16.mxu0 0
    %2004 = vmatpush1.bf16.msra.mxu0 %v1584
    %2005 = vmatprep.subr.bf16.mxu0 0
    %2006 = vmatpush1.bf16.msra.mxu0 %v1583
    %2007 = vmatprep.subr.bf16.mxu0 0
    %2008 = vmatpush2.bf16.msra.mxu0 %v1598
    %2009 = vmatprep.subr.bf16.mxu0 0
    %2010 = vmatpush2.bf16.msra.mxu0 %v1597
    %2011 = vmatprep.subr.bf16.mxu0 0
    %2012 = vmatpush2.bf16.msra.mxu0 %v1596
    %2013 = vmatprep.subr.bf16.mxu0 0
    %2014 = vmatpush2.bf16.msra.mxu0 %v1595
    %2015 = vmatprep.subr.bf16.mxu0 0
    %2016 = vmatpush2.bf16.msra.mxu0 %v1594
    %2017 = vmatprep.subr.bf16.mxu0 0
    %2018 = vmatpush2.bf16.msra.mxu0 %v1593
    %2019 = vmatprep.subr.bf16.mxu0 0
    %2020 = vmatpush2.bf16.msra.mxu0 %v1592
    %2021 = vmatprep.subr.bf16.mxu0 0
    %2022 = vmatpush2.bf16.msra.mxu0 %v1591
    %2023 = vmatprep.mubr.bf16.mxu0 %v158
    %2024 = vmatmul.mubr.bf16.gmra.mxu0 %v157
    %v2025 = vpop.f32.mrf.mxu0
    %v2026 = vadd.f32 %v1986, %v2025
    %v2027 = vpop.f32.mrf.mxu0
    %v2028 = vpop.f32.mrf.mxu0
    %v2029 = vpop.f32.mrf.mxu0
    %2030 = vdwg.mxu0
    %2031 = vmatprep.subr.bf16.mxu0 0
    %2032 = vmatpush1.bf16.msra.mxu0 %v1606
    %2033 = vmatprep.subr.bf16.mxu0 0
    %2034 = vmatpush1.bf16.msra.mxu0 %v1605
    %2035 = vmatprep.subr.bf16.mxu0 0
    %2036 = vmatpush1.bf16.msra.mxu0 %v1604
    %2037 = vmatprep.subr.bf16.mxu0 0
    %2038 = vmatpush1.bf16.msra.mxu0 %v1603
    %2039 = vmatprep.subr.bf16.mxu0 0
    %2040 = vmatpush1.bf16.msra.mxu0 %v1602
    %2041 = vmatprep.subr.bf16.mxu0 0
    %2042 = vmatpush1.bf16.msra.mxu0 %v1601
    %2043 = vmatprep.subr.bf16.mxu0 0
    %2044 = vmatpush1.bf16.msra.mxu0 %v1600
    %2045 = vmatprep.subr.bf16.mxu0 0
    %2046 = vmatpush1.bf16.msra.mxu0 %v1599
    %2047 = vmatprep.subr.bf16.mxu0 0
    %2048 = vmatpush2.bf16.msra.mxu0 %v1614
    %2049 = vmatprep.subr.bf16.mxu0 0
    %2050 = vmatpush2.bf16.msra.mxu0 %v1613
    %2051 = vmatprep.subr.bf16.mxu0 0
    %2052 = vmatpush2.bf16.msra.mxu0 %v1612
    %2053 = vmatprep.subr.bf16.mxu0 0
    %2054 = vmatpush2.bf16.msra.mxu0 %v1611
    %2055 = vmatprep.subr.bf16.mxu0 0
    %2056 = vmatpush2.bf16.msra.mxu0 %v1610
    %2057 = vmatprep.subr.bf16.mxu0 0
    %2058 = vmatpush2.bf16.msra.mxu0 %v1609
    %2059 = vmatprep.subr.bf16.mxu0 0
    %2060 = vmatpush2.bf16.msra.mxu0 %v1608
    %2061 = vmatprep.subr.bf16.mxu0 0
    %2062 = vmatpush2.bf16.msra.mxu0 %v1607
    %2063 = vmatprep.mubr.bf16.mxu0 %v160
    %2064 = vmatmul.mubr.bf16.gmra.mxu0 %v159
    %v2065 = vpop.f32.mrf.mxu0
    %v2066 = vadd.f32 %v2026, %v2065
    %v2067 = vpop.f32.mrf.mxu0
    %v2068 = vpop.f32.mrf.mxu0
    %v2069 = vpop.f32.mrf.mxu0
    %2070 = vdwg.mxu0
    %2071 = vmatprep.subr.bf16.mxu0 0
    %2072 = vmatpush1.bf16.msra.mxu0 %v1622
    %2073 = vmatprep.subr.bf16.mxu0 0
    %2074 = vmatpush1.bf16.msra.mxu0 %v1621
    %2075 = vmatprep.subr.bf16.mxu0 0
    %2076 = vmatpush1.bf16.msra.mxu0 %v1620
    %2077 = vmatprep.subr.bf16.mxu0 0
    %2078 = vmatpush1.bf16.msra.mxu0 %v1619
    %2079 = vmatprep.subr.bf16.mxu0 0
    %2080 = vmatpush1.bf16.msra.mxu0 %v1618
    %2081 = vmatprep.subr.bf16.mxu0 0
    %2082 = vmatpush1.bf16.msra.mxu0 %v1617
    %2083 = vmatprep.subr.bf16.mxu0 0
    %2084 = vmatpush1.bf16.msra.mxu0 %v1616
    %2085 = vmatprep.subr.bf16.mxu0 0
    %2086 = vmatpush1.bf16.msra.mxu0 %v1615
    %2087 = vmatprep.subr.bf16.mxu0 0
    %2088 = vmatpush2.bf16.msra.mxu0 %v1630
    %2089 = vmatprep.subr.bf16.mxu0 0
    %2090 = vmatpush2.bf16.msra.mxu0 %v1629
    %2091 = vmatprep.subr.bf16.mxu0 0
    %2092 = vmatpush2.bf16.msra.mxu0 %v1628
    %2093 = vmatprep.subr.bf16.mxu0 0
    %2094 = vmatpush2.bf16.msra.mxu0 %v1627
    %2095 = vmatprep.subr.bf16.mxu0 0
    %2096 = vmatpush2.bf16.msra.mxu0 %v1626
    %2097 = vmatprep.subr.bf16.mxu0 0
    %2098 = vmatpush2.bf16.msra.mxu0 %v1625
    %2099 = vmatprep.subr.bf16.mxu0 0
    %2100 = vmatpush2.bf16.msra.mxu0 %v1624
    %2101 = vmatprep.subr.bf16.mxu0 0
    %2102 = vmatpush2.bf16.msra.mxu0 %v1623
    %2103 = vmatprep.mubr.bf16.mxu0 %v162
    %2104 = vmatmul.mubr.bf16.gmra.mxu0 %v161
    %v2105 = vpop.f32.mrf.mxu0
    %v2106 = vadd.f32 %v2066, %v2105
    %v2107 = vpop.f32.mrf.mxu0
    %v2108 = vpop.f32.mrf.mxu0
    %v2109 = vpop.f32.mrf.mxu0
    %2110 = vdwg.mxu0
    %2111 = vmatprep.subr.bf16.mxu0 0
    %2112 = vmatpush1.bf16.msra.mxu0 %v1638
    %2113 = vmatprep.subr.bf16.mxu0 0
    %2114 = vmatpush1.bf16.msra.mxu0 %v1637
    %2115 = vmatprep.subr.bf16.mxu0 0
    %2116 = vmatpush1.bf16.msra.mxu0 %v1636
    %2117 = vmatprep.subr.bf16.mxu0 0
    %2118 = vmatpush1.bf16.msra.mxu0 %v1635
    %2119 = vmatprep.subr.bf16.mxu0 0
    %2120 = vmatpush1.bf16.msra.mxu0 %v1634
    %2121 = vmatprep.subr.bf16.mxu0 0
    %2122 = vmatpush1.bf16.msra.mxu0 %v1633
    %2123 = vmatprep.subr.bf16.mxu0 0
    %2124 = vmatpush1.bf16.msra.mxu0 %v1632
    %2125 = vmatprep.subr.bf16.mxu0 0
    %2126 = vmatpush1.bf16.msra.mxu0 %v1631
    %2127 = vmatprep.subr.bf16.mxu0 0
    %2128 = vmatpush2.bf16.msra.mxu0 %v1646
    %2129 = vmatprep.subr.bf16.mxu0 0
    %2130 = vmatpush2.bf16.msra.mxu0 %v1645
    %2131 = vmatprep.subr.bf16.mxu0 0
    %2132 = vmatpush2.bf16.msra.mxu0 %v1644
    %2133 = vmatprep.subr.bf16.mxu0 0
    %2134 = vmatpush2.bf16.msra.mxu0 %v1643
    %2135 = vmatprep.subr.bf16.mxu0 0
    %2136 = vmatpush2.bf16.msra.mxu0 %v1642
    %2137 = vmatprep.subr.bf16.mxu0 0
    %2138 = vmatpush2.bf16.msra.mxu0 %v1641
    %2139 = vmatprep.subr.bf16.mxu0 0
    %2140 = vmatpush2.bf16.msra.mxu0 %v1640
    %2141 = vmatprep.subr.bf16.mxu0 0
    %2142 = vmatpush2.bf16.msra.mxu0 %v1639
    %2143 = vmatprep.mubr.bf16.mxu0 %v164
    %2144 = vmatmul.mubr.bf16.gmra.mxu0 %v163
    %v2145 = vpop.f32.mrf.mxu0
    %v2146 = vadd.f32 %v2106, %v2145
    %v2147 = vpop.f32.mrf.mxu0
    %v2148 = vpop.f32.mrf.mxu0
    %v2149 = vpop.f32.mrf.mxu0
    %2150 = vdwg.mxu0
    %2151 = vmatprep.subr.bf16.mxu0 0
    %2152 = vmatpush1.bf16.msra.mxu0 %v1654
    %2153 = vmatprep.subr.bf16.mxu0 0
    %2154 = vmatpush1.bf16.msra.mxu0 %v1653
    %2155 = vmatprep.subr.bf16.mxu0 0
    %2156 = vmatpush1.bf16.msra.mxu0 %v1652
    %2157 = vmatprep.subr.bf16.mxu0 0
    %2158 = vmatpush1.bf16.msra.mxu0 %v1651
    %2159 = vmatprep.subr.bf16.mxu0 0
    %2160 = vmatpush1.bf16.msra.mxu0 %v1650
    %2161 = vmatprep.subr.bf16.mxu0 0
    %2162 = vmatpush1.bf16.msra.mxu0 %v1649
    %2163 = vmatprep.subr.bf16.mxu0 0
    %2164 = vmatpush1.bf16.msra.mxu0 %v1648
    %2165 = vmatprep.subr.bf16.mxu0 0
    %2166 = vmatpush1.bf16.msra.mxu0 %v1647
    %2167 = vmatprep.subr.bf16.mxu0 0
    %2168 = vmatpush2.bf16.msra.mxu0 %v1662
    %2169 = vmatprep.subr.bf16.mxu0 0
    %2170 = vmatpush2.bf16.msra.mxu0 %v1661
    %2171 = vmatprep.subr.bf16.mxu0 0
    %2172 = vmatpush2.bf16.msra.mxu0 %v1660
    %2173 = vmatprep.subr.bf16.mxu0 0
    %2174 = vmatpush2.bf16.msra.mxu0 %v1659
    %2175 = vmatprep.subr.bf16.mxu0 0
    %2176 = vmatpush2.bf16.msra.mxu0 %v1658
    %2177 = vmatprep.subr.bf16.mxu0 0
    %2178 = vmatpush2.bf16.msra.mxu0 %v1657
    %2179 = vmatprep.subr.bf16.mxu0 0
    %2180 = vmatpush2.bf16.msra.mxu0 %v1656
    %2181 = vmatprep.subr.bf16.mxu0 0
    %2182 = vmatpush2.bf16.msra.mxu0 %v1655
    %2183 = vmatprep.mubr.bf16.mxu0 %v166
    %2184 = vmatmul.mubr.bf16.gmra.mxu0 %v165
    %v2185 = vpop.f32.mrf.mxu0
    %v2186 = vadd.f32 %v2146, %v2185
    %v2187 = vpop.f32.mrf.mxu0
    %v2188 = vpop.f32.mrf.mxu0
    %v2189 = vpop.f32.mrf.mxu0
    %2190 = vdwg.mxu0
    %2191 = vmatprep.subr.bf16.mxu0 0
    %2192 = vmatpush1.bf16.msra.mxu0 %v1670
    %2193 = vmatprep.subr.bf16.mxu0 0
    %2194 = vmatpush1.bf16.msra.mxu0 %v1669
    %2195 = vmatprep.subr.bf16.mxu0 0
    %2196 = vmatpush1.bf16.msra.mxu0 %v1668
    %2197 = vmatprep.subr.bf16.mxu0 0
    %2198 = vmatpush1.bf16.msra.mxu0 %v1667
    %2199 = vmatprep.subr.bf16.mxu0 0
    %2200 = vmatpush1.bf16.msra.mxu0 %v1666
    %2201 = vmatprep.subr.bf16.mxu0 0
    %2202 = vmatpush1.bf16.msra.mxu0 %v1665
    %2203 = vmatprep.subr.bf16.mxu0 0
    %2204 = vmatpush1.bf16.msra.mxu0 %v1664
    %2205 = vmatprep.subr.bf16.mxu0 0
    %2206 = vmatpush1.bf16.msra.mxu0 %v1663
    %2207 = vmatprep.subr.bf16.mxu0 0
    %2208 = vmatpush2.bf16.msra.mxu0 %v1678
    %2209 = vmatprep.subr.bf16.mxu0 0
    %2210 = vmatpush2.bf16.msra.mxu0 %v1677
    %2211 = vmatprep.subr.bf16.mxu0 0
    %2212 = vmatpush2.bf16.msra.mxu0 %v1676
    %2213 = vmatprep.subr.bf16.mxu0 0
    %2214 = vmatpush2.bf16.msra.mxu0 %v1675
    %2215 = vmatprep.subr.bf16.mxu0 0
    %2216 = vmatpush2.bf16.msra.mxu0 %v1674
    %2217 = vmatprep.subr.bf16.mxu0 0
    %2218 = vmatpush2.bf16.msra.mxu0 %v1673
    %2219 = vmatprep.subr.bf16.mxu0 0
    %2220 = vmatpush2.bf16.msra.mxu0 %v1672
    %2221 = vmatprep.subr.bf16.mxu0 0
    %2222 = vmatpush2.bf16.msra.mxu0 %v1671
    %2223 = vmatprep.mubr.bf16.mxu0 %v168
    %2224 = vmatmul.mubr.bf16.gmra.mxu0 %v167
    %v2225 = vpop.f32.mrf.mxu0
    %v2226 = vadd.f32 %v2186, %v2225
    %v2227 = vpop.f32.mrf.mxu0
    %v2228 = vpop.f32.mrf.mxu0
    %v2229 = vpop.f32.mrf.mxu0
    %2230 = vdwg.mxu0
    %2231 = vmatprep.subr.bf16.mxu0 0
    %2232 = vmatpush1.bf16.msra.mxu0 %v1686
    %2233 = vmatprep.subr.bf16.mxu0 0
    %2234 = vmatpush1.bf16.msra.mxu0 %v1685
    %2235 = vmatprep.subr.bf16.mxu0 0
    %2236 = vmatpush1.bf16.msra.mxu0 %v1684
    %2237 = vmatprep.subr.bf16.mxu0 0
    %2238 = vmatpush1.bf16.msra.mxu0 %v1683
    %2239 = vmatprep.subr.bf16.mxu0 0
    %2240 = vmatpush1.bf16.msra.mxu0 %v1682
    %2241 = vmatprep.subr.bf16.mxu0 0
    %2242 = vmatpush1.bf16.msra.mxu0 %v1681
    %2243 = vmatprep.subr.bf16.mxu0 0
    %2244 = vmatpush1.bf16.msra.mxu0 %v1680
    %2245 = vmatprep.subr.bf16.mxu0 0
    %2246 = vmatpush1.bf16.msra.mxu0 %v1679
    %2247 = vmatprep.subr.bf16.mxu0 0
    %2248 = vmatpush2.bf16.msra.mxu0 %v1694
    %2249 = vmatprep.subr.bf16.mxu0 0
    %2250 = vmatpush2.bf16.msra.mxu0 %v1693
    %2251 = vmatprep.subr.bf16.mxu0 0
    %2252 = vmatpush2.bf16.msra.mxu0 %v1692
    %2253 = vmatprep.subr.bf16.mxu0 0
    %2254 = vmatpush2.bf16.msra.mxu0 %v1691
    %2255 = vmatprep.subr.bf16.mxu0 0
    %2256 = vmatpush2.bf16.msra.mxu0 %v1690
    %2257 = vmatprep.subr.bf16.mxu0 0
    %2258 = vmatpush2.bf16.msra.mxu0 %v1689
    %2259 = vmatprep.subr.bf16.mxu0 0
    %2260 = vmatpush2.bf16.msra.mxu0 %v1688
    %2261 = vmatprep.subr.bf16.mxu0 0
    %2262 = vmatpush2.bf16.msra.mxu0 %v1687
    %2263 = vmatprep.mubr.bf16.mxu0 %v170
    %2264 = vmatmul.mubr.bf16.gmra.mxu0 %v169
    %v2265 = vpop.f32.mrf.mxu0
    %v2266 = vadd.f32 %v2226, %v2265
    %v2267 = vpop.f32.mrf.mxu0
    %v2268 = vpop.f32.mrf.mxu0
    %v2269 = vpop.f32.mrf.mxu0
    %2270 = vdwg.mxu0
    %2271 = vmatprep.subr.bf16.mxu0 0
    %2272 = vmatpush1.bf16.msra.mxu0 %v1702
    %2273 = vmatprep.subr.bf16.mxu0 0
    %2274 = vmatpush1.bf16.msra.mxu0 %v1701
    %2275 = vmatprep.subr.bf16.mxu0 0
    %2276 = vmatpush1.bf16.msra.mxu0 %v1700
    %2277 = vmatprep.subr.bf16.mxu0 0
    %2278 = vmatpush1.bf16.msra.mxu0 %v1699
    %2279 = vmatprep.subr.bf16.mxu0 0
    %2280 = vmatpush1.bf16.msra.mxu0 %v1698
    %2281 = vmatprep.subr.bf16.mxu0 0
    %2282 = vmatpush1.bf16.msra.mxu0 %v1697
    %2283 = vmatprep.subr.bf16.mxu0 0
    %2284 = vmatpush1.bf16.msra.mxu0 %v1696
    %2285 = vmatprep.subr.bf16.mxu0 0
    %2286 = vmatpush1.bf16.msra.mxu0 %v1695
    %2287 = vmatprep.subr.bf16.mxu0 0
    %2288 = vmatpush2.bf16.msra.mxu0 %v1710
    %2289 = vmatprep.subr.bf16.mxu0 0
    %2290 = vmatpush2.bf16.msra.mxu0 %v1709
    %2291 = vmatprep.subr.bf16.mxu0 0
    %2292 = vmatpush2.bf16.msra.mxu0 %v1708
    %2293 = vmatprep.subr.bf16.mxu0 0
    %2294 = vmatpush2.bf16.msra.mxu0 %v1707
    %2295 = vmatprep.subr.bf16.mxu0 0
    %2296 = vmatpush2.bf16.msra.mxu0 %v1706
    %2297 = vmatprep.subr.bf16.mxu0 0
    %2298 = vmatpush2.bf16.msra.mxu0 %v1705
    %2299 = vmatprep.subr.bf16.mxu0 0
    %2300 = vmatpush2.bf16.msra.mxu0 %v1704
    %2301 = vmatprep.subr.bf16.mxu0 0
    %2302 = vmatpush2.bf16.msra.mxu0 %v1703
    %2303 = vmatprep.mubr.bf16.mxu0 %v172
    %2304 = vmatmul.mubr.bf16.gmra.mxu0 %v171
    %v2305 = vpop.f32.mrf.mxu0
    %v2306 = vadd.f32 %v2266, %v2305
    %v2307 = vpop.f32.mrf.mxu0
    %v2308 = vpop.f32.mrf.mxu0
    %v2309 = vpop.f32.mrf.mxu0
    %2310 = vdwg.mxu0
    %2311 = vmatprep.subr.bf16.mxu0 0
    %2312 = vmatpush1.bf16.msra.mxu0 %v1718
    %2313 = vmatprep.subr.bf16.mxu0 0
    %2314 = vmatpush1.bf16.msra.mxu0 %v1717
    %2315 = vmatprep.subr.bf16.mxu0 0
    %2316 = vmatpush1.bf16.msra.mxu0 %v1716
    %2317 = vmatprep.subr.bf16.mxu0 0
    %2318 = vmatpush1.bf16.msra.mxu0 %v1715
    %2319 = vmatprep.subr.bf16.mxu0 0
    %2320 = vmatpush1.bf16.msra.mxu0 %v1714
    %2321 = vmatprep.subr.bf16.mxu0 0
    %2322 = vmatpush1.bf16.msra.mxu0 %v1713
    %2323 = vmatprep.subr.bf16.mxu0 0
    %2324 = vmatpush1.bf16.msra.mxu0 %v1712
    %2325 = vmatprep.subr.bf16.mxu0 0
    %2326 = vmatpush1.bf16.msra.mxu0 %v1711
    %2327 = vmatprep.subr.bf16.mxu0 0
    %2328 = vmatpush2.bf16.msra.mxu0 %v1726
    %2329 = vmatprep.subr.bf16.mxu0 0
    %2330 = vmatpush2.bf16.msra.mxu0 %v1725
    %2331 = vmatprep.subr.bf16.mxu0 0
    %2332 = vmatpush2.bf16.msra.mxu0 %v1724
    %2333 = vmatprep.subr.bf16.mxu0 0
    %2334 = vmatpush2.bf16.msra.mxu0 %v1723
    %2335 = vmatprep.subr.bf16.mxu0 0
    %2336 = vmatpush2.bf16.msra.mxu0 %v1722
    %2337 = vmatprep.subr.bf16.mxu0 0
    %2338 = vmatpush2.bf16.msra.mxu0 %v1721
    %2339 = vmatprep.subr.bf16.mxu0 0
    %2340 = vmatpush2.bf16.msra.mxu0 %v1720
    %2341 = vmatprep.subr.bf16.mxu0 0
    %2342 = vmatpush2.bf16.msra.mxu0 %v1719
    %2343 = vmatprep.mubr.bf16.mxu0 %v174
    %2344 = vmatmul.mubr.bf16.gmra.mxu0 %v173
    %v2345 = vpop.f32.mrf.mxu0
    %v2346 = vadd.f32 %v2306, %v2345
    %v2347 = vpop.f32.mrf.mxu0
    %v2348 = vpop.f32.mrf.mxu0
    %v2349 = vpop.f32.mrf.mxu0
    %2350 = vdwg.mxu0
    %2351 = vmatprep.subr.bf16.mxu0 0
    %2352 = vmatpush1.bf16.msra.mxu0 %v1734
    %2353 = vmatprep.subr.bf16.mxu0 0
    %2354 = vmatpush1.bf16.msra.mxu0 %v1733
    %2355 = vmatprep.subr.bf16.mxu0 0
    %2356 = vmatpush1.bf16.msra.mxu0 %v1732
    %2357 = vmatprep.subr.bf16.mxu0 0
    %2358 = vmatpush1.bf16.msra.mxu0 %v1731
    %2359 = vmatprep.subr.bf16.mxu0 0
    %2360 = vmatpush1.bf16.msra.mxu0 %v1730
    %2361 = vmatprep.subr.bf16.mxu0 0
    %2362 = vmatpush1.bf16.msra.mxu0 %v1729
    %2363 = vmatprep.subr.bf16.mxu0 0
    %2364 = vmatpush1.bf16.msra.mxu0 %v1728
    %2365 = vmatprep.subr.bf16.mxu0 0
    %2366 = vmatpush1.bf16.msra.mxu0 %v1727
    %2367 = vmatprep.subr.bf16.mxu0 0
    %2368 = vmatpush2.bf16.msra.mxu0 %v1742
    %2369 = vmatprep.subr.bf16.mxu0 0
    %2370 = vmatpush2.bf16.msra.mxu0 %v1741
    %2371 = vmatprep.subr.bf16.mxu0 0
    %2372 = vmatpush2.bf16.msra.mxu0 %v1740
    %2373 = vmatprep.subr.bf16.mxu0 0
    %2374 = vmatpush2.bf16.msra.mxu0 %v1739
    %2375 = vmatprep.subr.bf16.mxu0 0
    %2376 = vmatpush2.bf16.msra.mxu0 %v1738
    %2377 = vmatprep.subr.bf16.mxu0 0
    %2378 = vmatpush2.bf16.msra.mxu0 %v1737
    %2379 = vmatprep.subr.bf16.mxu0 0
    %2380 = vmatpush2.bf16.msra.mxu0 %v1736
    %2381 = vmatprep.subr.bf16.mxu0 0
    %2382 = vmatpush2.bf16.msra.mxu0 %v1735
    %2383 = vmatprep.mubr.bf16.mxu0 %v176
    %2384 = vmatmul.mubr.bf16.gmra.mxu0 %v175
    %v2385 = vpop.f32.mrf.mxu0
    %v2386 = vadd.f32 %v2346, %v2385
    %v2387 = vpop.f32.mrf.mxu0
    %v2388 = vpop.f32.mrf.mxu0
    %v2389 = vpop.f32.mrf.mxu0
    %2390 = vdwg.mxu0
    %2391 = vmatprep.subr.bf16.mxu0 0
    %2392 = vmatpush1.bf16.msra.mxu0 %v1750
    %2393 = vmatprep.subr.bf16.mxu0 0
    %2394 = vmatpush1.bf16.msra.mxu0 %v1749
    %2395 = vmatprep.subr.bf16.mxu0 0
    %2396 = vmatpush1.bf16.msra.mxu0 %v1748
    %2397 = vmatprep.subr.bf16.mxu0 0
    %2398 = vmatpush1.bf16.msra.mxu0 %v1747
    %2399 = vmatprep.subr.bf16.mxu0 0
    %2400 = vmatpush1.bf16.msra.mxu0 %v1746
    %2401 = vmatprep.subr.bf16.mxu0 0
    %2402 = vmatpush1.bf16.msra.mxu0 %v1745
    %2403 = vmatprep.subr.bf16.mxu0 0
    %2404 = vmatpush1.bf16.msra.mxu0 %v1744
    %2405 = vmatprep.subr.bf16.mxu0 0
    %2406 = vmatpush1.bf16.msra.mxu0 %v1743
    %2407 = vmatprep.subr.bf16.mxu0 0
    %2408 = vmatpush2.bf16.msra.mxu0 %v1758
    %2409 = vmatprep.subr.bf16.mxu0 0
    %2410 = vmatpush2.bf16.msra.mxu0 %v1757
    %2411 = vmatprep.subr.bf16.mxu0 0
    %2412 = vmatpush2.bf16.msra.mxu0 %v1756
    %2413 = vmatprep.subr.bf16.mxu0 0
    %2414 = vmatpush2.bf16.msra.mxu0 %v1755
    %2415 = vmatprep.subr.bf16.mxu0 0
    %2416 = vmatpush2.bf16.msra.mxu0 %v1754
    %2417 = vmatprep.subr.bf16.mxu0 0
    %2418 = vmatpush2.bf16.msra.mxu0 %v1753
    %2419 = vmatprep.subr.bf16.mxu0 0
    %2420 = vmatpush2.bf16.msra.mxu0 %v1752
    %2421 = vmatprep.subr.bf16.mxu0 0
    %2422 = vmatpush2.bf16.msra.mxu0 %v1751
    %2423 = vmatprep.mubr.bf16.mxu0 %v178
    %2424 = vmatmul.mubr.bf16.gmra.mxu0 %v177
    %v2425 = vpop.f32.mrf.mxu0
    %v2426 = vadd.f32 %v2386, %v2425
    %v2427 = vpop.f32.mrf.mxu0
    %v2428 = vpop.f32.mrf.mxu0
    %v2429 = vpop.f32.mrf.mxu0
    %2430 = vdwg.mxu0
    %v2431 = vmax.f32 %v2426, 0.0
    %v2432 = vpack.c.bf16 %v2431, %v2431
    %v2434 = vlaneseq
    %v2435 = vshrl.u32 %v2434, 7
    %v2436 = vsub.s32 0, %v2435
    %v2437 = vrot.slane %v580, %v2436
    %v2455 = vunpack.c.l.b16 %v564
    %v2456 = vunpack.c.l.b16 %v565
    %v2457 = vunpack.c.l.b16 %v566
    %v2458 = vunpack.c.l.b16 %v567
    %v2459 = vunpack.c.l.b16 %v568
    %v2460 = vunpack.c.l.b16 %v569
    %v2461 = vunpack.c.l.b16 %v570
    %v2462 = vunpack.c.l.b16 %v571
    %v2463 = vunpack.c.l.b16 %v572
    %v2464 = vunpack.c.l.b16 %v573
    %v2465 = vunpack.c.l.b16 %v574
    %v2466 = vunpack.c.l.b16 %v575
    %v2467 = vunpack.c.l.b16 %v576
    %v2468 = vunpack.c.l.b16 %v577
    %v2469 = vunpack.c.l.b16 %v578
    %v2470 = vunpack.c.l.b16 %v579
    %v2471 = vpack.c.b16 %v2456, %v2455
    %v2472 = vpack.c.b16 %v2458, %v2457
    %v2473 = vpack.c.b16 %v2460, %v2459
    %v2474 = vpack.c.b16 %v2462, %v2461
    %v2475 = vpack.c.b16 %v2464, %v2463
    %v2476 = vpack.c.b16 %v2466, %v2465
    %v2477 = vpack.c.b16 %v2468, %v2467
    %v2478 = vpack.c.b16 %v2470, %v2469
    %2487 = vmatprep.subr.bf16.mxu0 0
    %2488 = vmatpush1.bf16.msra.mxu0 %v2478
    %2489 = vmatprep.subr.bf16.mxu0 0
    %2490 = vmatpush1.bf16.msra.mxu0 %v2477
    %2491 = vmatprep.subr.bf16.mxu0 0
    %2492 = vmatpush1.bf16.msra.mxu0 %v2476
    %2493 = vmatprep.subr.bf16.mxu0 0
    %2494 = vmatpush1.bf16.msra.mxu0 %v2475
    %2495 = vmatprep.subr.bf16.mxu0 0
    %2496 = vmatpush1.bf16.msra.mxu0 %v2474
    %2497 = vmatprep.subr.bf16.mxu0 0
    %2498 = vmatpush1.bf16.msra.mxu0 %v2473
    %2499 = vmatprep.subr.bf16.mxu0 0
    %2500 = vmatpush1.bf16.msra.mxu0 %v2472
    %2501 = vmatprep.subr.bf16.mxu0 0
    %2502 = vmatpush1.bf16.msra.mxu0 %v2471
    %2503 = vmatprep.subr.bf16.mxu0 0
    %2504 = vmatpush2.bf16.msra.mxu0 0
    %2505 = vmatprep.subr.bf16.mxu0 0
    %2506 = vmatpush2.bf16.msra.mxu0 0
    %2507 = vmatprep.subr.bf16.mxu0 0
    %2508 = vmatpush2.bf16.msra.mxu0 0
    %2509 = vmatprep.subr.bf16.mxu0 0
    %2510 = vmatpush2.bf16.msra.mxu0 0
    %2511 = vmatprep.subr.bf16.mxu0 0
    %2512 = vmatpush2.bf16.msra.mxu0 0
    %2513 = vmatprep.subr.bf16.mxu0 0
    %2514 = vmatpush2.bf16.msra.mxu0 0
    %2515 = vmatprep.subr.bf16.mxu0 0
    %2516 = vmatpush2.bf16.msra.mxu0 0
    %2517 = vmatprep.subr.bf16.mxu0 0
    %2518 = vmatpush2.bf16.msra.mxu0 0
    %2519 = vmatprep.mubr.bf16.mxu0 0
    %2520 = vmatmul.mubr.bf16.gmra.mxu0 %v2432
    %v2521 = vpop.f32.mrf.mxu0
    %v2522 = vadd.f32 %v2437, %v2521
    %v2523 = vpop.f32.mrf.mxu0
    %v2524 = vpop.f32.mrf.mxu0
    %v2525 = vpop.f32.mrf.mxu0
    %2526 = vdwg.mxu0
    %v2527 = vmax.f32 %v2522, 0.0
    %v2528 = vpack.c.bf16 %v2527, %v2527
    %v2530 = vlaneseq
    %v2531 = vshrl.u32 %v2530, 7
    %v2532 = vsub.s32 0, %v2531
    %v2533 = vrot.slane %v597, %v2532
    %v2551 = vunpack.c.l.b16 %v581
    %v2552 = vunpack.c.l.b16 %v582
    %v2553 = vunpack.c.l.b16 %v583
    %v2554 = vunpack.c.l.b16 %v584
    %v2555 = vunpack.c.l.b16 %v585
    %v2556 = vunpack.c.l.b16 %v586
    %v2557 = vunpack.c.l.b16 %v587
    %v2558 = vunpack.c.l.b16 %v588
    %v2559 = vunpack.c.l.b16 %v589
    %v2560 = vunpack.c.l.b16 %v590
    %v2561 = vunpack.c.l.b16 %v591
    %v2562 = vunpack.c.l.b16 %v592
    %v2563 = vunpack.c.l.b16 %v593
    %v2564 = vunpack.c.l.b16 %v594
    %v2565 = vunpack.c.l.b16 %v595
    %v2566 = vunpack.c.l.b16 %v596
    %v2567 = vpack.c.b16 %v2552, %v2551
    %v2568 = vpack.c.b16 %v2554, %v2553
    %v2569 = vpack.c.b16 %v2556, %v2555
    %v2570 = vpack.c.b16 %v2558, %v2557
    %v2571 = vpack.c.b16 %v2560, %v2559
    %v2572 = vpack.c.b16 %v2562, %v2561
    %v2573 = vpack.c.b16 %v2564, %v2563
    %v2574 = vpack.c.b16 %v2566, %v2565
    %2583 = vmatprep.subr.bf16.mxu0 0
    %2584 = vmatpush1.bf16.msra.mxu0 %v2574
    %2585 = vmatprep.subr.bf16.mxu0 0
    %2586 = vmatpush1.bf16.msra.mxu0 %v2573
    %2587 = vmatprep.subr.bf16.mxu0 0
    %2588 = vmatpush1.bf16.msra.mxu0 %v2572
    %2589 = vmatprep.subr.bf16.mxu0 0
    %2590 = vmatpush1.bf16.msra.mxu0 %v2571
    %2591 = vmatprep.subr.bf16.mxu0 0
    %2592 = vmatpush1.bf16.msra.mxu0 %v2570
    %2593 = vmatprep.subr.bf16.mxu0 0
    %2594 = vmatpush1.bf16.msra.mxu0 %v2569
    %2595 = vmatprep.subr.bf16.mxu0 0
    %2596 = vmatpush1.bf16.msra.mxu0 %v2568
    %2597 = vmatprep.subr.bf16.mxu0 0
    %2598 = vmatpush1.bf16.msra.mxu0 %v2567
    %2599 = vmatprep.subr.bf16.mxu0 0
    %2600 = vmatpush2.bf16.msra.mxu0 0
    %2601 = vmatprep.subr.bf16.mxu0 0
    %2602 = vmatpush2.bf16.msra.mxu0 0
    %2603 = vmatprep.subr.bf16.mxu0 0
    %2604 = vmatpush2.bf16.msra.mxu0 0
    %2605 = vmatprep.subr.bf16.mxu0 0
    %2606 = vmatpush2.bf16.msra.mxu0 0
    %2607 = vmatprep.subr.bf16.mxu0 0
    %2608 = vmatpush2.bf16.msra.mxu0 0
    %2609 = vmatprep.subr.bf16.mxu0 0
    %2610 = vmatpush2.bf16.msra.mxu0 0
    %2611 = vmatprep.subr.bf16.mxu0 0
    %2612 = vmatpush2.bf16.msra.mxu0 0
    %2613 = vmatprep.subr.bf16.mxu0 0
    %2614 = vmatpush2.bf16.msra.mxu0 0
    %2615 = vmatprep.mubr.bf16.mxu0 0
    %2616 = vmatmul.mubr.bf16.gmra.mxu0 %v2528
    %v2617 = vpop.f32.mrf.mxu0
    %v2618 = vadd.f32 %v2533, %v2617
    %v2619 = vpop.f32.mrf.mxu0
    %v2620 = vpop.f32.mrf.mxu0
    %v2621 = vpop.f32.mrf.mxu0
    %2622 = vdwg.mxu0
    %v2623 = vmax.f32 %v2618, 0.0
    %v2624 = vpack.c.bf16 %v2623, %v2623
    %v2628 = vlaneseq
    %v2629 = vshrl.u32 %v2628, 7
    %v2630 = vsub.s32 0, %v2629
    %v2631 = vrot.slane %v790, %v2630
    %v2632 = vlaneseq
    %v2633 = vshrl.u32 %v2632, 7
    %v2634 = vsub.s32 1, %v2633
    %v2635 = vrot.slane %v790, %v2634
    %v2636 = vlaneseq
    %v2637 = vshrl.u32 %v2636, 7
    %v2638 = vsub.s32 2, %v2637
    %v2639 = vrot.slane %v790, %v2638
    %v2640 = vlaneseq
    %v2641 = vshrl.u32 %v2640, 7
    %v2642 = vsub.s32 3, %v2641
    %v2643 = vrot.slane %v790, %v2642
    %v2644 = vlaneseq
    %v2645 = vshrl.u32 %v2644, 7
    %v2646 = vsub.s32 4, %v2645
    %v2647 = vrot.slane %v790, %v2646
    %v2648 = vlaneseq
    %v2649 = vshrl.u32 %v2648, 7
    %v2650 = vsub.s32 5, %v2649
    %v2651 = vrot.slane %v790, %v2650
    %v2652 = vlaneseq
    %v2653 = vshrl.u32 %v2652, 7
    %v2654 = vsub.s32 6, %v2653
    %v2655 = vrot.slane %v790, %v2654
    %v2656 = vlaneseq
    %v2657 = vshrl.u32 %v2656, 7
    %v2658 = vsub.s32 7, %v2657
    %v2659 = vrot.slane %v790, %v2658
    %v2660 = vlaneseq
    %v2661 = vshrl.u32 %v2660, 7
    %v2662 = vsub.s32 0, %v2661
    %v2663 = vrot.slane %v791, %v2662
    %v2664 = vlaneseq
    %v2665 = vshrl.u32 %v2664, 7
    %v2666 = vsub.s32 1, %v2665
    %v2667 = vrot.slane %v791, %v2666
    %v2668 = vlaneseq
    %v2669 = vshrl.u32 %v2668, 7
    %v2670 = vsub.s32 2, %v2669
    %v2671 = vrot.slane %v791, %v2670
    %v2672 = vlaneseq
    %v2673 = vshrl.u32 %v2672, 7
    %v2674 = vsub.s32 3, %v2673
    %v2675 = vrot.slane %v791, %v2674
    %v2676 = vlaneseq
    %v2677 = vshrl.u32 %v2676, 7
    %v2678 = vsub.s32 4, %v2677
    %v2679 = vrot.slane %v791, %v2678
    %v2680 = vlaneseq
    %v2681 = vshrl.u32 %v2680, 7
    %v2682 = vsub.s32 5, %v2681
    %v2683 = vrot.slane %v791, %v2682
    %v2684 = vlaneseq
    %v2685 = vshrl.u32 %v2684, 7
    %v2686 = vsub.s32 6, %v2685
    %v2687 = vrot.slane %v791, %v2686
    %v2688 = vlaneseq
    %v2689 = vshrl.u32 %v2688, 7
    %v2690 = vsub.s32 7, %v2689
    %v2691 = vrot.slane %v791, %v2690
    %v2692 = vlaneseq
    %v2693 = vshrl.u32 %v2692, 7
    %v2694 = vsub.s32 0, %v2693
    %v2695 = vrot.slane %v792, %v2694
    %v2696 = vlaneseq
    %v2697 = vshrl.u32 %v2696, 7
    %v2698 = vsub.s32 1, %v2697
    %v2699 = vrot.slane %v792, %v2698
    %v2700 = vlaneseq
    %v2701 = vshrl.u32 %v2700, 7
    %v2702 = vsub.s32 2, %v2701
    %v2703 = vrot.slane %v792, %v2702
    %v2704 = vlaneseq
    %v2705 = vshrl.u32 %v2704, 7
    %v2706 = vsub.s32 3, %v2705
    %v2707 = vrot.slane %v792, %v2706
    %v2708 = vlaneseq
    %v2709 = vshrl.u32 %v2708, 7
    %v2710 = vsub.s32 4, %v2709
    %v2711 = vrot.slane %v792, %v2710
    %v2712 = vlaneseq
    %v2713 = vshrl.u32 %v2712, 7
    %v2714 = vsub.s32 5, %v2713
    %v2715 = vrot.slane %v792, %v2714
    %v2716 = vlaneseq
    %v2717 = vshrl.u32 %v2716, 7
    %v2718 = vsub.s32 6, %v2717
    %v2719 = vrot.slane %v792, %v2718
    %v2720 = vlaneseq
    %v2721 = vshrl.u32 %v2720, 7
    %v2722 = vsub.s32 7, %v2721
    %v2723 = vrot.slane %v792, %v2722
    %v2940 = vunpack.c.l.b16 %v598
    %v2941 = vunpack.c.h.b16 %v598
    %v2942 = vunpack.c.l.b16 %v599
    %v2943 = vunpack.c.h.b16 %v599
    %v2944 = vunpack.c.l.b16 %v600
    %v2945 = vunpack.c.h.b16 %v600
    %v2946 = vunpack.c.l.b16 %v601
    %v2947 = vunpack.c.h.b16 %v601
    %v2948 = vunpack.c.l.b16 %v602
    %v2949 = vunpack.c.h.b16 %v602
    %v2950 = vunpack.c.l.b16 %v603
    %v2951 = vunpack.c.h.b16 %v603
    %v2952 = vunpack.c.l.b16 %v604
    %v2953 = vunpack.c.h.b16 %v604
    %v2954 = vunpack.c.l.b16 %v605
    %v2955 = vunpack.c.h.b16 %v605
    %v2956 = vunpack.c.l.b16 %v606
    %v2957 = vunpack.c.h.b16 %v606
    %v2958 = vunpack.c.l.b16 %v607
    %v2959 = vunpack.c.h.b16 %v607
    %v2960 = vunpack.c.l.b16 %v608
    %v2961 = vunpack.c.h.b16 %v608
    %v2962 = vunpack.c.l.b16 %v609
    %v2963 = vunpack.c.h.b16 %v609
    %v2964 = vunpack.c.l.b16 %v610
    %v2965 = vunpack.c.h.b16 %v610
    %v2966 = vunpack.c.l.b16 %v611
    %v2967 = vunpack.c.h.b16 %v611
    %v2968 = vunpack.c.l.b16 %v612
    %v2969 = vunpack.c.h.b16 %v612
    %v2970 = vunpack.c.l.b16 %v613
    %v2971 = vunpack.c.h.b16 %v613
    %v2972 = vunpack.c.l.b16 %v614
    %v2973 = vunpack.c.h.b16 %v614
    %v2974 = vunpack.c.l.b16 %v615
    %v2975 = vunpack.c.h.b16 %v615
    %v2976 = vunpack.c.l.b16 %v616
    %v2977 = vunpack.c.h.b16 %v616
    %v2978 = vunpack.c.l.b16 %v617
    %v2979 = vunpack.c.h.b16 %v617
    %v2980 = vunpack.c.l.b16 %v618
    %v2981 = vunpack.c.h.b16 %v618
    %v2982 = vunpack.c.l.b16 %v619
    %v2983 = vunpack.c.h.b16 %v619
    %v2984 = vunpack.c.l.b16 %v620
    %v2985 = vunpack.c.h.b16 %v620
    %v2986 = vunpack.c.l.b16 %v621
    %v2987 = vunpack.c.h.b16 %v621
    %v2988 = vunpack.c.l.b16 %v622
    %v2989 = vunpack.c.h.b16 %v622
    %v2990 = vunpack.c.l.b16 %v623
    %v2991 = vunpack.c.h.b16 %v623
    %v2992 = vunpack.c.l.b16 %v624
    %v2993 = vunpack.c.h.b16 %v624
    %v2994 = vunpack.c.l.b16 %v625
    %v2995 = vunpack.c.h.b16 %v625
    %v2996 = vunpack.c.l.b16 %v626
    %v2997 = vunpack.c.h.b16 %v626
    %v2998 = vunpack.c.l.b16 %v627
    %v2999 = vunpack.c.h.b16 %v627
    %v3000 = vunpack.c.l.b16 %v628
    %v3001 = vunpack.c.h.b16 %v628
    %v3002 = vunpack.c.l.b16 %v629
    %v3003 = vunpack.c.h.b16 %v629
    %v3004 = vunpack.c.l.b16 %v630
    %v3005 = vunpack.c.h.b16 %v630
    %v3006 = vunpack.c.l.b16 %v631
    %v3007 = vunpack.c.h.b16 %v631
    %v3008 = vunpack.c.l.b16 %v632
    %v3009 = vunpack.c.h.b16 %v632
    %v3010 = vunpack.c.l.b16 %v633
    %v3011 = vunpack.c.h.b16 %v633
    %v3012 = vunpack.c.l.b16 %v634
    %v3013 = vunpack.c.h.b16 %v634
    %v3014 = vunpack.c.l.b16 %v635
    %v3015 = vunpack.c.h.b16 %v635
    %v3016 = vunpack.c.l.b16 %v636
    %v3017 = vunpack.c.h.b16 %v636
    %v3018 = vunpack.c.l.b16 %v637
    %v3019 = vunpack.c.h.b16 %v637
    %v3020 = vunpack.c.l.b16 %v638
    %v3021 = vunpack.c.h.b16 %v638
    %v3022 = vunpack.c.l.b16 %v639
    %v3023 = vunpack.c.h.b16 %v639
    %v3024 = vunpack.c.l.b16 %v640
    %v3025 = vunpack.c.h.b16 %v640
    %v3026 = vunpack.c.l.b16 %v641
    %v3027 = vunpack.c.h.b16 %v641
    %v3028 = vunpack.c.l.b16 %v642
    %v3029 = vunpack.c.h.b16 %v642
    %v3030 = vunpack.c.l.b16 %v643
    %v3031 = vunpack.c.h.b16 %v643
    %v3032 = vunpack.c.l.b16 %v644
    %v3033 = vunpack.c.h.b16 %v644
    %v3034 = vunpack.c.l.b16 %v645
    %v3035 = vunpack.c.h.b16 %v645
    %v3036 = vunpack.c.l.b16 %v646
    %v3037 = vunpack.c.h.b16 %v646
    %v3038 = vunpack.c.l.b16 %v647
    %v3039 = vunpack.c.h.b16 %v647
    %v3040 = vunpack.c.l.b16 %v648
    %v3041 = vunpack.c.h.b16 %v648
    %v3042 = vunpack.c.l.b16 %v649
    %v3043 = vunpack.c.h.b16 %v649
    %v3044 = vunpack.c.l.b16 %v650
    %v3045 = vunpack.c.h.b16 %v650
    %v3046 = vunpack.c.l.b16 %v651
    %v3047 = vunpack.c.h.b16 %v651
    %v3048 = vunpack.c.l.b16 %v652
    %v3049 = vunpack.c.h.b16 %v652
    %v3050 = vunpack.c.l.b16 %v653
    %v3051 = vunpack.c.h.b16 %v653
    %v3052 = vunpack.c.l.b16 %v654
    %v3053 = vunpack.c.h.b16 %v654
    %v3054 = vunpack.c.l.b16 %v655
    %v3055 = vunpack.c.h.b16 %v655
    %v3056 = vunpack.c.l.b16 %v656
    %v3057 = vunpack.c.h.b16 %v656
    %v3058 = vunpack.c.l.b16 %v657
    %v3059 = vunpack.c.h.b16 %v657
    %v3060 = vunpack.c.l.b16 %v658
    %v3061 = vunpack.c.h.b16 %v658
    %v3062 = vunpack.c.l.b16 %v659
    %v3063 = vunpack.c.h.b16 %v659
    %v3064 = vunpack.c.l.b16 %v660
    %v3065 = vunpack.c.h.b16 %v660
    %v3066 = vunpack.c.l.b16 %v661
    %v3067 = vunpack.c.h.b16 %v661
    %v3068 = vunpack.c.l.b16 %v662
    %v3069 = vunpack.c.h.b16 %v662
    %v3070 = vunpack.c.l.b16 %v663
    %v3071 = vunpack.c.h.b16 %v663
    %v3072 = vunpack.c.l.b16 %v664
    %v3073 = vunpack.c.h.b16 %v664
    %v3074 = vunpack.c.l.b16 %v665
    %v3075 = vunpack.c.h.b16 %v665
    %v3076 = vunpack.c.l.b16 %v666
    %v3077 = vunpack.c.h.b16 %v666
    %v3078 = vunpack.c.l.b16 %v667
    %v3079 = vunpack.c.h.b16 %v667
    %v3080 = vunpack.c.l.b16 %v668
    %v3081 = vunpack.c.h.b16 %v668
    %v3082 = vunpack.c.l.b16 %v669
    %v3083 = vunpack.c.h.b16 %v669
    %v3084 = vunpack.c.l.b16 %v670
    %v3085 = vunpack.c.h.b16 %v670
    %v3086 = vunpack.c.l.b16 %v671
    %v3087 = vunpack.c.h.b16 %v671
    %v3088 = vunpack.c.l.b16 %v672
    %v3089 = vunpack.c.h.b16 %v672
    %v3090 = vunpack.c.l.b16 %v673
    %v3091 = vunpack.c.h.b16 %v673
    %v3092 = vunpack.c.l.b16 %v674
    %v3093 = vunpack.c.h.b16 %v674
    %v3094 = vunpack.c.l.b16 %v675
    %v3095 = vunpack.c.h.b16 %v675
    %v3096 = vunpack.c.l.b16 %v676
    %v3097 = vunpack.c.h.b16 %v676
    %v3098 = vunpack.c.l.b16 %v677
    %v3099 = vunpack.c.h.b16 %v677
    %v3100 = vunpack.c.l.b16 %v678
    %v3101 = vunpack.c.h.b16 %v678
    %v3102 = vunpack.c.l.b16 %v679
    %v3103 = vunpack.c.h.b16 %v679
    %v3104 = vunpack.c.l.b16 %v680
    %v3105 = vunpack.c.h.b16 %v680
    %v3106 = vunpack.c.l.b16 %v681
    %v3107 = vunpack.c.h.b16 %v681
    %v3108 = vunpack.c.l.b16 %v682
    %v3109 = vunpack.c.h.b16 %v682
    %v3110 = vunpack.c.l.b16 %v683
    %v3111 = vunpack.c.h.b16 %v683
    %v3112 = vunpack.c.l.b16 %v684
    %v3113 = vunpack.c.h.b16 %v684
    %v3114 = vunpack.c.l.b16 %v685
    %v3115 = vunpack.c.h.b16 %v685
    %v3116 = vunpack.c.l.b16 %v686
    %v3117 = vunpack.c.h.b16 %v686
    %v3118 = vunpack.c.l.b16 %v687
    %v3119 = vunpack.c.h.b16 %v687
    %v3120 = vunpack.c.l.b16 %v688
    %v3121 = vunpack.c.h.b16 %v688
    %v3122 = vunpack.c.l.b16 %v689
    %v3123 = vunpack.c.h.b16 %v689
    %v3124 = vunpack.c.l.b16 %v690
    %v3125 = vunpack.c.h.b16 %v690
    %v3126 = vunpack.c.l.b16 %v691
    %v3127 = vunpack.c.h.b16 %v691
    %v3128 = vunpack.c.l.b16 %v692
    %v3129 = vunpack.c.h.b16 %v692
    %v3130 = vunpack.c.l.b16 %v693
    %v3131 = vunpack.c.h.b16 %v693
    %v3132 = vunpack.c.l.b16 %v694
    %v3133 = vunpack.c.h.b16 %v694
    %v3134 = vunpack.c.l.b16 %v695
    %v3135 = vunpack.c.h.b16 %v695
    %v3136 = vunpack.c.l.b16 %v696
    %v3137 = vunpack.c.h.b16 %v696
    %v3138 = vunpack.c.l.b16 %v697
    %v3139 = vunpack.c.h.b16 %v697
    %v3140 = vunpack.c.l.b16 %v698
    %v3141 = vunpack.c.h.b16 %v698
    %v3142 = vunpack.c.l.b16 %v699
    %v3143 = vunpack.c.h.b16 %v699
    %v3144 = vunpack.c.l.b16 %v700
    %v3145 = vunpack.c.h.b16 %v700
    %v3146 = vunpack.c.l.b16 %v701
    %v3147 = vunpack.c.h.b16 %v701
    %v3148 = vunpack.c.l.b16 %v702
    %v3149 = vunpack.c.h.b16 %v702
    %v3150 = vunpack.c.l.b16 %v703
    %v3151 = vunpack.c.h.b16 %v703
    %v3152 = vunpack.c.l.b16 %v704
    %v3153 = vunpack.c.h.b16 %v704
    %v3154 = vunpack.c.l.b16 %v705
    %v3155 = vunpack.c.h.b16 %v705
    %v3156 = vunpack.c.l.b16 %v706
    %v3157 = vunpack.c.h.b16 %v706
    %v3158 = vunpack.c.l.b16 %v707
    %v3159 = vunpack.c.h.b16 %v707
    %v3160 = vunpack.c.l.b16 %v708
    %v3161 = vunpack.c.h.b16 %v708
    %v3162 = vunpack.c.l.b16 %v709
    %v3163 = vunpack.c.h.b16 %v709
    %v3164 = vunpack.c.l.b16 %v710
    %v3165 = vunpack.c.h.b16 %v710
    %v3166 = vunpack.c.l.b16 %v711
    %v3167 = vunpack.c.h.b16 %v711
    %v3168 = vunpack.c.l.b16 %v712
    %v3169 = vunpack.c.h.b16 %v712
    %v3170 = vunpack.c.l.b16 %v713
    %v3171 = vunpack.c.h.b16 %v713
    %v3172 = vunpack.c.l.b16 %v714
    %v3173 = vunpack.c.h.b16 %v714
    %v3174 = vunpack.c.l.b16 %v715
    %v3175 = vunpack.c.h.b16 %v715
    %v3176 = vunpack.c.l.b16 %v716
    %v3177 = vunpack.c.h.b16 %v716
    %v3178 = vunpack.c.l.b16 %v717
    %v3179 = vunpack.c.h.b16 %v717
    %v3180 = vunpack.c.l.b16 %v718
    %v3181 = vunpack.c.h.b16 %v718
    %v3182 = vunpack.c.l.b16 %v719
    %v3183 = vunpack.c.h.b16 %v719
    %v3184 = vunpack.c.l.b16 %v720
    %v3185 = vunpack.c.h.b16 %v720
    %v3186 = vunpack.c.l.b16 %v721
    %v3187 = vunpack.c.h.b16 %v721
    %v3188 = vunpack.c.l.b16 %v722
    %v3189 = vunpack.c.h.b16 %v722
    %v3190 = vunpack.c.l.b16 %v723
    %v3191 = vunpack.c.h.b16 %v723
    %v3192 = vunpack.c.l.b16 %v724
    %v3193 = vunpack.c.h.b16 %v724
    %v3194 = vunpack.c.l.b16 %v725
    %v3195 = vunpack.c.h.b16 %v725
    %v3196 = vunpack.c.l.b16 %v726
    %v3197 = vunpack.c.h.b16 %v726
    %v3198 = vunpack.c.l.b16 %v727
    %v3199 = vunpack.c.h.b16 %v727
    %v3200 = vunpack.c.l.b16 %v728
    %v3201 = vunpack.c.h.b16 %v728
    %v3202 = vunpack.c.l.b16 %v729
    %v3203 = vunpack.c.h.b16 %v729
    %v3204 = vunpack.c.l.b16 %v730
    %v3205 = vunpack.c.h.b16 %v730
    %v3206 = vunpack.c.l.b16 %v731
    %v3207 = vunpack.c.h.b16 %v731
    %v3208 = vunpack.c.l.b16 %v732
    %v3209 = vunpack.c.h.b16 %v732
    %v3210 = vunpack.c.l.b16 %v733
    %v3211 = vunpack.c.h.b16 %v733
    %v3212 = vunpack.c.l.b16 %v734
    %v3213 = vunpack.c.h.b16 %v734
    %v3214 = vunpack.c.l.b16 %v735
    %v3215 = vunpack.c.h.b16 %v735
    %v3216 = vunpack.c.l.b16 %v736
    %v3217 = vunpack.c.h.b16 %v736
    %v3218 = vunpack.c.l.b16 %v737
    %v3219 = vunpack.c.h.b16 %v737
    %v3220 = vunpack.c.l.b16 %v738
    %v3221 = vunpack.c.h.b16 %v738
    %v3222 = vunpack.c.l.b16 %v739
    %v3223 = vunpack.c.h.b16 %v739
    %v3224 = vunpack.c.l.b16 %v740
    %v3225 = vunpack.c.h.b16 %v740
    %v3226 = vunpack.c.l.b16 %v741
    %v3227 = vunpack.c.h.b16 %v741
    %v3228 = vunpack.c.l.b16 %v742
    %v3229 = vunpack.c.h.b16 %v742
    %v3230 = vunpack.c.l.b16 %v743
    %v3231 = vunpack.c.h.b16 %v743
    %v3232 = vunpack.c.l.b16 %v744
    %v3233 = vunpack.c.h.b16 %v744
    %v3234 = vunpack.c.l.b16 %v745
    %v3235 = vunpack.c.h.b16 %v745
    %v3236 = vunpack.c.l.b16 %v746
    %v3237 = vunpack.c.h.b16 %v746
    %v3238 = vunpack.c.l.b16 %v747
    %v3239 = vunpack.c.h.b16 %v747
    %v3240 = vunpack.c.l.b16 %v748
    %v3241 = vunpack.c.h.b16 %v748
    %v3242 = vunpack.c.l.b16 %v749
    %v3243 = vunpack.c.h.b16 %v749
    %v3244 = vunpack.c.l.b16 %v750
    %v3245 = vunpack.c.h.b16 %v750
    %v3246 = vunpack.c.l.b16 %v751
    %v3247 = vunpack.c.h.b16 %v751
    %v3248 = vunpack.c.l.b16 %v752
    %v3249 = vunpack.c.h.b16 %v752
    %v3250 = vunpack.c.l.b16 %v753
    %v3251 = vunpack.c.h.b16 %v753
    %v3252 = vunpack.c.l.b16 %v754
    %v3253 = vunpack.c.h.b16 %v754
    %v3254 = vunpack.c.l.b16 %v755
    %v3255 = vunpack.c.h.b16 %v755
    %v3256 = vunpack.c.l.b16 %v756
    %v3257 = vunpack.c.h.b16 %v756
    %v3258 = vunpack.c.l.b16 %v757
    %v3259 = vunpack.c.h.b16 %v757
    %v3260 = vunpack.c.l.b16 %v758
    %v3261 = vunpack.c.h.b16 %v758
    %v3262 = vunpack.c.l.b16 %v759
    %v3263 = vunpack.c.h.b16 %v759
    %v3264 = vunpack.c.l.b16 %v760
    %v3265 = vunpack.c.h.b16 %v760
    %v3266 = vunpack.c.l.b16 %v761
    %v3267 = vunpack.c.h.b16 %v761
    %v3268 = vunpack.c.l.b16 %v762
    %v3269 = vunpack.c.h.b16 %v762
    %v3270 = vunpack.c.l.b16 %v763
    %v3271 = vunpack.c.h.b16 %v763
    %v3272 = vunpack.c.l.b16 %v764
    %v3273 = vunpack.c.h.b16 %v764
    %v3274 = vunpack.c.l.b16 %v765
    %v3275 = vunpack.c.h.b16 %v765
    %v3276 = vunpack.c.l.b16 %v766
    %v3277 = vunpack.c.h.b16 %v766
    %v3278 = vunpack.c.l.b16 %v767
    %v3279 = vunpack.c.h.b16 %v767
    %v3280 = vunpack.c.l.b16 %v768
    %v3281 = vunpack.c.h.b16 %v768
    %v3282 = vunpack.c.l.b16 %v769
    %v3283 = vunpack.c.h.b16 %v769
    %v3284 = vunpack.c.l.b16 %v770
    %v3285 = vunpack.c.h.b16 %v770
    %v3286 = vunpack.c.l.b16 %v771
    %v3287 = vunpack.c.h.b16 %v771
    %v3288 = vunpack.c.l.b16 %v772
    %v3289 = vunpack.c.h.b16 %v772
    %v3290 = vunpack.c.l.b16 %v773
    %v3291 = vunpack.c.h.b16 %v773
    %v3292 = vunpack.c.l.b16 %v774
    %v3293 = vunpack.c.h.b16 %v774
    %v3294 = vunpack.c.l.b16 %v775
    %v3295 = vunpack.c.h.b16 %v775
    %v3296 = vunpack.c.l.b16 %v776
    %v3297 = vunpack.c.h.b16 %v776
    %v3298 = vunpack.c.l.b16 %v777
    %v3299 = vunpack.c.h.b16 %v777
    %v3300 = vunpack.c.l.b16 %v778
    %v3301 = vunpack.c.h.b16 %v778
    %v3302 = vunpack.c.l.b16 %v779
    %v3303 = vunpack.c.h.b16 %v779
    %v3304 = vunpack.c.l.b16 %v780
    %v3305 = vunpack.c.h.b16 %v780
    %v3306 = vunpack.c.l.b16 %v781
    %v3307 = vunpack.c.h.b16 %v781
    %v3308 = vunpack.c.l.b16 %v782
    %v3309 = vunpack.c.h.b16 %v782
    %v3310 = vunpack.c.l.b16 %v783
    %v3311 = vunpack.c.h.b16 %v783
    %v3312 = vunpack.c.l.b16 %v784
    %v3313 = vunpack.c.h.b16 %v784
    %v3314 = vunpack.c.l.b16 %v785
    %v3315 = vunpack.c.h.b16 %v785
    %v3316 = vunpack.c.l.b16 %v786
    %v3317 = vunpack.c.h.b16 %v786
    %v3318 = vunpack.c.l.b16 %v787
    %v3319 = vunpack.c.h.b16 %v787
    %v3320 = vunpack.c.l.b16 %v788
    %v3321 = vunpack.c.h.b16 %v788
    %v3322 = vunpack.c.l.b16 %v789
    %v3323 = vunpack.c.h.b16 %v789
    %v3324 = vpack.c.b16 %v2964, %v2940
    %v3325 = vpack.c.b16 %v2965, %v2941
    %v3326 = vpack.c.b16 %v2966, %v2942
    %v3327 = vpack.c.b16 %v2967, %v2943
    %v3328 = vpack.c.b16 %v2968, %v2944
    %v3329 = vpack.c.b16 %v2969, %v2945
    %v3330 = vpack.c.b16 %v2970, %v2946
    %v3331 = vpack.c.b16 %v2971, %v2947
    %v3332 = vpack.c.b16 %v2972, %v2948
    %v3333 = vpack.c.b16 %v2973, %v2949
    %v3334 = vpack.c.b16 %v2974, %v2950
    %v3335 = vpack.c.b16 %v2975, %v2951
    %v3336 = vpack.c.b16 %v2976, %v2952
    %v3337 = vpack.c.b16 %v2977, %v2953
    %v3338 = vpack.c.b16 %v2978, %v2954
    %v3339 = vpack.c.b16 %v2979, %v2955
    %v3340 = vpack.c.b16 %v2980, %v2956
    %v3341 = vpack.c.b16 %v2981, %v2957
    %v3342 = vpack.c.b16 %v2982, %v2958
    %v3343 = vpack.c.b16 %v2983, %v2959
    %v3344 = vpack.c.b16 %v2984, %v2960
    %v3345 = vpack.c.b16 %v2985, %v2961
    %v3346 = vpack.c.b16 %v2986, %v2962
    %v3347 = vpack.c.b16 %v2987, %v2963
    %v3348 = vpack.c.b16 %v3012, %v2988
    %v3349 = vpack.c.b16 %v3013, %v2989
    %v3350 = vpack.c.b16 %v3014, %v2990
    %v3351 = vpack.c.b16 %v3015, %v2991
    %v3352 = vpack.c.b16 %v3016, %v2992
    %v3353 = vpack.c.b16 %v3017, %v2993
    %v3354 = vpack.c.b16 %v3018, %v2994
    %v3355 = vpack.c.b16 %v3019, %v2995
    %v3356 = vpack.c.b16 %v3020, %v2996
    %v3357 = vpack.c.b16 %v3021, %v2997
    %v3358 = vpack.c.b16 %v3022, %v2998
    %v3359 = vpack.c.b16 %v3023, %v2999
    %v3360 = vpack.c.b16 %v3024, %v3000
    %v3361 = vpack.c.b16 %v3025, %v3001
    %v3362 = vpack.c.b16 %v3026, %v3002
    %v3363 = vpack.c.b16 %v3027, %v3003
    %v3364 = vpack.c.b16 %v3028, %v3004
    %v3365 = vpack.c.b16 %v3029, %v3005
    %v3366 = vpack.c.b16 %v3030, %v3006
    %v3367 = vpack.c.b16 %v3031, %v3007
    %v3368 = vpack.c.b16 %v3032, %v3008
    %v3369 = vpack.c.b16 %v3033, %v3009
    %v3370 = vpack.c.b16 %v3034, %v3010
    %v3371 = vpack.c.b16 %v3035, %v3011
    %v3372 = vpack.c.b16 %v3060, %v3036
    %v3373 = vpack.c.b16 %v3061, %v3037
    %v3374 = vpack.c.b16 %v3062, %v3038
    %v3375 = vpack.c.b16 %v3063, %v3039
    %v3376 = vpack.c.b16 %v3064, %v3040
    %v3377 = vpack.c.b16 %v3065, %v3041
    %v3378 = vpack.c.b16 %v3066, %v3042
    %v3379 = vpack.c.b16 %v3067, %v3043
    %v3380 = vpack.c.b16 %v3068, %v3044
    %v3381 = vpack.c.b16 %v3069, %v3045
    %v3382 = vpack.c.b16 %v3070, %v3046
    %v3383 = vpack.c.b16 %v3071, %v3047
    %v3384 = vpack.c.b16 %v3072, %v3048
    %v3385 = vpack.c.b16 %v3073, %v3049
    %v3386 = vpack.c.b16 %v3074, %v3050
    %v3387 = vpack.c.b16 %v3075, %v3051
    %v3388 = vpack.c.b16 %v3076, %v3052
    %v3389 = vpack.c.b16 %v3077, %v3053
    %v3390 = vpack.c.b16 %v3078, %v3054
    %v3391 = vpack.c.b16 %v3079, %v3055
    %v3392 = vpack.c.b16 %v3080, %v3056
    %v3393 = vpack.c.b16 %v3081, %v3057
    %v3394 = vpack.c.b16 %v3082, %v3058
    %v3395 = vpack.c.b16 %v3083, %v3059
    %v3396 = vpack.c.b16 %v3108, %v3084
    %v3397 = vpack.c.b16 %v3109, %v3085
    %v3398 = vpack.c.b16 %v3110, %v3086
    %v3399 = vpack.c.b16 %v3111, %v3087
    %v3400 = vpack.c.b16 %v3112, %v3088
    %v3401 = vpack.c.b16 %v3113, %v3089
    %v3402 = vpack.c.b16 %v3114, %v3090
    %v3403 = vpack.c.b16 %v3115, %v3091
    %v3404 = vpack.c.b16 %v3116, %v3092
    %v3405 = vpack.c.b16 %v3117, %v3093
    %v3406 = vpack.c.b16 %v3118, %v3094
    %v3407 = vpack.c.b16 %v3119, %v3095
    %v3408 = vpack.c.b16 %v3120, %v3096
    %v3409 = vpack.c.b16 %v3121, %v3097
    %v3410 = vpack.c.b16 %v3122, %v3098
    %v3411 = vpack.c.b16 %v3123, %v3099
    %v3412 = vpack.c.b16 %v3124, %v3100
    %v3413 = vpack.c.b16 %v3125, %v3101
    %v3414 = vpack.c.b16 %v3126, %v3102
    %v3415 = vpack.c.b16 %v3127, %v3103
    %v3416 = vpack.c.b16 %v3128, %v3104
    %v3417 = vpack.c.b16 %v3129, %v3105
    %v3418 = vpack.c.b16 %v3130, %v3106
    %v3419 = vpack.c.b16 %v3131, %v3107
    %v3420 = vpack.c.b16 %v3156, %v3132
    %v3421 = vpack.c.b16 %v3157, %v3133
    %v3422 = vpack.c.b16 %v3158, %v3134
    %v3423 = vpack.c.b16 %v3159, %v3135
    %v3424 = vpack.c.b16 %v3160, %v3136
    %v3425 = vpack.c.b16 %v3161, %v3137
    %v3426 = vpack.c.b16 %v3162, %v3138
    %v3427 = vpack.c.b16 %v3163, %v3139
    %v3428 = vpack.c.b16 %v3164, %v3140
    %v3429 = vpack.c.b16 %v3165, %v3141
    %v3430 = vpack.c.b16 %v3166, %v3142
    %v3431 = vpack.c.b16 %v3167, %v3143
    %v3432 = vpack.c.b16 %v3168, %v3144
    %v3433 = vpack.c.b16 %v3169, %v3145
    %v3434 = vpack.c.b16 %v3170, %v3146
    %v3435 = vpack.c.b16 %v3171, %v3147
    %v3436 = vpack.c.b16 %v3172, %v3148
    %v3437 = vpack.c.b16 %v3173, %v3149
    %v3438 = vpack.c.b16 %v3174, %v3150
    %v3439 = vpack.c.b16 %v3175, %v3151
    %v3440 = vpack.c.b16 %v3176, %v3152
    %v3441 = vpack.c.b16 %v3177, %v3153
    %v3442 = vpack.c.b16 %v3178, %v3154
    %v3443 = vpack.c.b16 %v3179, %v3155
    %v3444 = vpack.c.b16 %v3204, %v3180
    %v3445 = vpack.c.b16 %v3205, %v3181
    %v3446 = vpack.c.b16 %v3206, %v3182
    %v3447 = vpack.c.b16 %v3207, %v3183
    %v3448 = vpack.c.b16 %v3208, %v3184
    %v3449 = vpack.c.b16 %v3209, %v3185
    %v3450 = vpack.c.b16 %v3210, %v3186
    %v3451 = vpack.c.b16 %v3211, %v3187
    %v3452 = vpack.c.b16 %v3212, %v3188
    %v3453 = vpack.c.b16 %v3213, %v3189
    %v3454 = vpack.c.b16 %v3214, %v3190
    %v3455 = vpack.c.b16 %v3215, %v3191
    %v3456 = vpack.c.b16 %v3216, %v3192
    %v3457 = vpack.c.b16 %v3217, %v3193
    %v3458 = vpack.c.b16 %v3218, %v3194
    %v3459 = vpack.c.b16 %v3219, %v3195
    %v3460 = vpack.c.b16 %v3220, %v3196
    %v3461 = vpack.c.b16 %v3221, %v3197
    %v3462 = vpack.c.b16 %v3222, %v3198
    %v3463 = vpack.c.b16 %v3223, %v3199
    %v3464 = vpack.c.b16 %v3224, %v3200
    %v3465 = vpack.c.b16 %v3225, %v3201
    %v3466 = vpack.c.b16 %v3226, %v3202
    %v3467 = vpack.c.b16 %v3227, %v3203
    %v3468 = vpack.c.b16 %v3252, %v3228
    %v3469 = vpack.c.b16 %v3253, %v3229
    %v3470 = vpack.c.b16 %v3254, %v3230
    %v3471 = vpack.c.b16 %v3255, %v3231
    %v3472 = vpack.c.b16 %v3256, %v3232
    %v3473 = vpack.c.b16 %v3257, %v3233
    %v3474 = vpack.c.b16 %v3258, %v3234
    %v3475 = vpack.c.b16 %v3259, %v3235
    %v3476 = vpack.c.b16 %v3260, %v3236
    %v3477 = vpack.c.b16 %v3261, %v3237
    %v3478 = vpack.c.b16 %v3262, %v3238
    %v3479 = vpack.c.b16 %v3263, %v3239
    %v3480 = vpack.c.b16 %v3264, %v3240
    %v3481 = vpack.c.b16 %v3265, %v3241
    %v3482 = vpack.c.b16 %v3266, %v3242
    %v3483 = vpack.c.b16 %v3267, %v3243
    %v3484 = vpack.c.b16 %v3268, %v3244
    %v3485 = vpack.c.b16 %v3269, %v3245
    %v3486 = vpack.c.b16 %v3270, %v3246
    %v3487 = vpack.c.b16 %v3271, %v3247
    %v3488 = vpack.c.b16 %v3272, %v3248
    %v3489 = vpack.c.b16 %v3273, %v3249
    %v3490 = vpack.c.b16 %v3274, %v3250
    %v3491 = vpack.c.b16 %v3275, %v3251
    %v3492 = vpack.c.b16 %v3300, %v3276
    %v3493 = vpack.c.b16 %v3301, %v3277
    %v3494 = vpack.c.b16 %v3302, %v3278
    %v3495 = vpack.c.b16 %v3303, %v3279
    %v3496 = vpack.c.b16 %v3304, %v3280
    %v3497 = vpack.c.b16 %v3305, %v3281
    %v3498 = vpack.c.b16 %v3306, %v3282
    %v3499 = vpack.c.b16 %v3307, %v3283
    %v3500 = vpack.c.b16 %v3308, %v3284
    %v3501 = vpack.c.b16 %v3309, %v3285
    %v3502 = vpack.c.b16 %v3310, %v3286
    %v3503 = vpack.c.b16 %v3311, %v3287
    %v3504 = vpack.c.b16 %v3312, %v3288
    %v3505 = vpack.c.b16 %v3313, %v3289
    %v3506 = vpack.c.b16 %v3314, %v3290
    %v3507 = vpack.c.b16 %v3315, %v3291
    %v3508 = vpack.c.b16 %v3316, %v3292
    %v3509 = vpack.c.b16 %v3317, %v3293
    %v3510 = vpack.c.b16 %v3318, %v3294
    %v3511 = vpack.c.b16 %v3319, %v3295
    %v3512 = vpack.c.b16 %v3320, %v3296
    %v3513 = vpack.c.b16 %v3321, %v3297
    %v3514 = vpack.c.b16 %v3322, %v3298
    %v3515 = vpack.c.b16 %v3323, %v3299
    %3708 = vmatprep.subr.bf16.mxu0 %v3493
    %3709 = vmatpush1.bf16.msra.mxu0 %v3492
    %3710 = vmatprep.subr.bf16.mxu0 %v3469
    %3711 = vmatpush1.bf16.msra.mxu0 %v3468
    %3712 = vmatprep.subr.bf16.mxu0 %v3445
    %3713 = vmatpush1.bf16.msra.mxu0 %v3444
    %3714 = vmatprep.subr.bf16.mxu0 %v3421
    %3715 = vmatpush1.bf16.msra.mxu0 %v3420
    %3716 = vmatprep.subr.bf16.mxu0 %v3397
    %3717 = vmatpush1.bf16.msra.mxu0 %v3396
    %3718 = vmatprep.subr.bf16.mxu0 %v3373
    %3719 = vmatpush1.bf16.msra.mxu0 %v3372
    %3720 = vmatprep.subr.bf16.mxu0 %v3349
    %3721 = vmatpush1.bf16.msra.mxu0 %v3348
    %3722 = vmatprep.subr.bf16.mxu0 %v3325
    %3723 = vmatpush1.bf16.msra.mxu0 %v3324
    %3724 = vmatprep.subr.bf16.mxu0 0
    %3725 = vmatpush2.bf16.msra.mxu0 0
    %3726 = vmatprep.subr.bf16.mxu0 0
    %3727 = vmatpush2.bf16.msra.mxu0 0
    %3728 = vmatprep.subr.bf16.mxu0 0
    %3729 = vmatpush2.bf16.msra.mxu0 0
    %3730 = vmatprep.subr.bf16.mxu0 0
    %3731 = vmatpush2.bf16.msra.mxu0 0
    %3732 = vmatprep.subr.bf16.mxu0 0
    %3733 = vmatpush2.bf16.msra.mxu0 0
    %3734 = vmatprep.subr.bf16.mxu0 0
    %3735 = vmatpush2.bf16.msra.mxu0 0
    %3736 = vmatprep.subr.bf16.mxu0 0
    %3737 = vmatpush2.bf16.msra.mxu0 0
    %3738 = vmatprep.subr.bf16.mxu0 0
    %3739 = vmatpush2.bf16.msra.mxu0 0
    %3740 = vmatprep.mubr.bf16.mxu0 0
    %3741 = vmatmul.mubr.bf16.gmra.mxu0 %v2624
    %v3742 = vpop.f32.mrf.mxu0
    %v3743 = vadd.f32 %v2631, %v3742
    %v3744 = vpop.f32.mrf.mxu0
    %v3745 = vadd.f32 %v2635, %v3744
    %v3746 = vpop.f32.mrf.mxu0
    %v3747 = vpop.f32.mrf.mxu0
    %3748 = vdwg.mxu0
    %3749 = vmatprep.subr.bf16.mxu0 %v3495
    %3750 = vmatpush1.bf16.msra.mxu0 %v3494
    %3751 = vmatprep.subr.bf16.mxu0 %v3471
    %3752 = vmatpush1.bf16.msra.mxu0 %v3470
    %3753 = vmatprep.subr.bf16.mxu0 %v3447
    %3754 = vmatpush1.bf16.msra.mxu0 %v3446
    %3755 = vmatprep.subr.bf16.mxu0 %v3423
    %3756 = vmatpush1.bf16.msra.mxu0 %v3422
    %3757 = vmatprep.subr.bf16.mxu0 %v3399
    %3758 = vmatpush1.bf16.msra.mxu0 %v3398
    %3759 = vmatprep.subr.bf16.mxu0 %v3375
    %3760 = vmatpush1.bf16.msra.mxu0 %v3374
    %3761 = vmatprep.subr.bf16.mxu0 %v3351
    %3762 = vmatpush1.bf16.msra.mxu0 %v3350
    %3763 = vmatprep.subr.bf16.mxu0 %v3327
    %3764 = vmatpush1.bf16.msra.mxu0 %v3326
    %3765 = vmatprep.subr.bf16.mxu0 0
    %3766 = vmatpush2.bf16.msra.mxu0 0
    %3767 = vmatprep.subr.bf16.mxu0 0
    %3768 = vmatpush2.bf16.msra.mxu0 0
    %3769 = vmatprep.subr.bf16.mxu0 0
    %3770 = vmatpush2.bf16.msra.mxu0 0
    %3771 = vmatprep.subr.bf16.mxu0 0
    %3772 = vmatpush2.bf16.msra.mxu0 0
    %3773 = vmatprep.subr.bf16.mxu0 0
    %3774 = vmatpush2.bf16.msra.mxu0 0
    %3775 = vmatprep.subr.bf16.mxu0 0
    %3776 = vmatpush2.bf16.msra.mxu0 0
    %3777 = vmatprep.subr.bf16.mxu0 0
    %3778 = vmatpush2.bf16.msra.mxu0 0
    %3779 = vmatprep.subr.bf16.mxu0 0
    %3780 = vmatpush2.bf16.msra.mxu0 0
    %3781 = vmatprep.mubr.bf16.mxu0 0
    %3782 = vmatmul.mubr.bf16.gmra.mxu0 %v2624
    %v3783 = vpop.f32.mrf.mxu0
    %v3784 = vadd.f32 %v2639, %v3783
    %v3785 = vpop.f32.mrf.mxu0
    %v3786 = vadd.f32 %v2643, %v3785
    %v3787 = vpop.f32.mrf.mxu0
    %v3788 = vpop.f32.mrf.mxu0
    %3789 = vdwg.mxu0
    %3790 = vmatprep.subr.bf16.mxu0 %v3497
    %3791 = vmatpush1.bf16.msra.mxu0 %v3496
    %3792 = vmatprep.subr.bf16.mxu0 %v3473
    %3793 = vmatpush1.bf16.msra.mxu0 %v3472
    %3794 = vmatprep.subr.bf16.mxu0 %v3449
    %3795 = vmatpush1.bf16.msra.mxu0 %v3448
    %3796 = vmatprep.subr.bf16.mxu0 %v3425
    %3797 = vmatpush1.bf16.msra.mxu0 %v3424
    %3798 = vmatprep.subr.bf16.mxu0 %v3401
    %3799 = vmatpush1.bf16.msra.mxu0 %v3400
    %3800 = vmatprep.subr.bf16.mxu0 %v3377
    %3801 = vmatpush1.bf16.msra.mxu0 %v3376
    %3802 = vmatprep.subr.bf16.mxu0 %v3353
    %3803 = vmatpush1.bf16.msra.mxu0 %v3352
    %3804 = vmatprep.subr.bf16.mxu0 %v3329
    %3805 = vmatpush1.bf16.msra.mxu0 %v3328
    %3806 = vmatprep.subr.bf16.mxu0 0
    %3807 = vmatpush2.bf16.msra.mxu0 0
    %3808 = vmatprep.subr.bf16.mxu0 0
    %3809 = vmatpush2.bf16.msra.mxu0 0
    %3810 = vmatprep.subr.bf16.mxu0 0
    %3811 = vmatpush2.bf16.msra.mxu0 0
    %3812 = vmatprep.subr.bf16.mxu0 0
    %3813 = vmatpush2.bf16.msra.mxu0 0
    %3814 = vmatprep.subr.bf16.mxu0 0
    %3815 = vmatpush2.bf16.msra.mxu0 0
    %3816 = vmatprep.subr.bf16.mxu0 0
    %3817 = vmatpush2.bf16.msra.mxu0 0
    %3818 = vmatprep.subr.bf16.mxu0 0
    %3819 = vmatpush2.bf16.msra.mxu0 0
    %3820 = vmatprep.subr.bf16.mxu0 0
    %3821 = vmatpush2.bf16.msra.mxu0 0
    %3822 = vmatprep.mubr.bf16.mxu0 0
    %3823 = vmatmul.mubr.bf16.gmra.mxu0 %v2624
    %v3824 = vpop.f32.mrf.mxu0
    %v3825 = vadd.f32 %v2647, %v3824
    %v3826 = vpop.f32.mrf.mxu0
    %v3827 = vadd.f32 %v2651, %v3826
    %v3828 = vpop.f32.mrf.mxu0
    %v3829 = vpop.f32.mrf.mxu0
    %3830 = vdwg.mxu0
    %3831 = vmatprep.subr.bf16.mxu0 %v3499
    %3832 = vmatpush1.bf16.msra.mxu0 %v3498
    %3833 = vmatprep.subr.bf16.mxu0 %v3475
    %3834 = vmatpush1.bf16.msra.mxu0 %v3474
    %3835 = vmatprep.subr.bf16.mxu0 %v3451
    %3836 = vmatpush1.bf16.msra.mxu0 %v3450
    %3837 = vmatprep.subr.bf16.mxu0 %v3427
    %3838 = vmatpush1.bf16.msra.mxu0 %v3426
    %3839 = vmatprep.subr.bf16.mxu0 %v3403
    %3840 = vmatpush1.bf16.msra.mxu0 %v3402
    %3841 = vmatprep.subr.bf16.mxu0 %v3379
    %3842 = vmatpush1.bf16.msra.mxu0 %v3378
    %3843 = vmatprep.subr.bf16.mxu0 %v3355
    %3844 = vmatpush1.bf16.msra.mxu0 %v3354
    %3845 = vmatprep.subr.bf16.mxu0 %v3331
    %3846 = vmatpush1.bf16.msra.mxu0 %v3330
    %3847 = vmatprep.subr.bf16.mxu0 0
    %3848 = vmatpush2.bf16.msra.mxu0 0
    %3849 = vmatprep.subr.bf16.mxu0 0
    %3850 = vmatpush2.bf16.msra.mxu0 0
    %3851 = vmatprep.subr.bf16.mxu0 0
    %3852 = vmatpush2.bf16.msra.mxu0 0
    %3853 = vmatprep.subr.bf16.mxu0 0
    %3854 = vmatpush2.bf16.msra.mxu0 0
    %3855 = vmatprep.subr.bf16.mxu0 0
    %3856 = vmatpush2.bf16.msra.mxu0 0
    %3857 = vmatprep.subr.bf16.mxu0 0
    %3858 = vmatpush2.bf16.msra.mxu0 0
    %3859 = vmatprep.subr.bf16.mxu0 0
    %3860 = vmatpush2.bf16.msra.mxu0 0
    %3861 = vmatprep.subr.bf16.mxu0 0
    %3862 = vmatpush2.bf16.msra.mxu0 0
    %3863 = vmatprep.mubr.bf16.mxu0 0
    %3864 = vmatmul.mubr.bf16.gmra.mxu0 %v2624
    %v3865 = vpop.f32.mrf.mxu0
    %v3866 = vadd.f32 %v2655, %v3865
    %v3867 = vpop.f32.mrf.mxu0
    %v3868 = vadd.f32 %v2659, %v3867
    %v3869 = vpop.f32.mrf.mxu0
    %v3870 = vpop.f32.mrf.mxu0
    %3871 = vdwg.mxu0
    %3872 = vmatprep.subr.bf16.mxu0 %v3501
    %3873 = vmatpush1.bf16.msra.mxu0 %v3500
    %3874 = vmatprep.subr.bf16.mxu0 %v3477
    %3875 = vmatpush1.bf16.msra.mxu0 %v3476
    %3876 = vmatprep.subr.bf16.mxu0 %v3453
    %3877 = vmatpush1.bf16.msra.mxu0 %v3452
    %3878 = vmatprep.subr.bf16.mxu0 %v3429
    %3879 = vmatpush1.bf16.msra.mxu0 %v3428
    %3880 = vmatprep.subr.bf16.mxu0 %v3405
    %3881 = vmatpush1.bf16.msra.mxu0 %v3404
    %3882 = vmatprep.subr.bf16.mxu0 %v3381
    %3883 = vmatpush1.bf16.msra.mxu0 %v3380
    %3884 = vmatprep.subr.bf16.mxu0 %v3357
    %3885 = vmatpush1.bf16.msra.mxu0 %v3356
    %3886 = vmatprep.subr.bf16.mxu0 %v3333
    %3887 = vmatpush1.bf16.msra.mxu0 %v3332
    %3888 = vmatprep.subr.bf16.mxu0 0
    %3889 = vmatpush2.bf16.msra.mxu0 0
    %3890 = vmatprep.subr.bf16.mxu0 0
    %3891 = vmatpush2.bf16.msra.mxu0 0
    %3892 = vmatprep.subr.bf16.mxu0 0
    %3893 = vmatpush2.bf16.msra.mxu0 0
    %3894 = vmatprep.subr.bf16.mxu0 0
    %3895 = vmatpush2.bf16.msra.mxu0 0
    %3896 = vmatprep.subr.bf16.mxu0 0
    %3897 = vmatpush2.bf16.msra.mxu0 0
    %3898 = vmatprep.subr.bf16.mxu0 0
    %3899 = vmatpush2.bf16.msra.mxu0 0
    %3900 = vmatprep.subr.bf16.mxu0 0
    %3901 = vmatpush2.bf16.msra.mxu0 0
    %3902 = vmatprep.subr.bf16.mxu0 0
    %3903 = vmatpush2.bf16.msra.mxu0 0
    %3904 = vmatprep.mubr.bf16.mxu0 0
    %3905 = vmatmul.mubr.bf16.gmra.mxu0 %v2624
    %v3906 = vpop.f32.mrf.mxu0
    %v3907 = vadd.f32 %v2663, %v3906
    %v3908 = vpop.f32.mrf.mxu0
    %v3909 = vadd.f32 %v2667, %v3908
    %v3910 = vpop.f32.mrf.mxu0
    %v3911 = vpop.f32.mrf.mxu0
    %3912 = vdwg.mxu0
    %3913 = vmatprep.subr.bf16.mxu0 %v3503
    %3914 = vmatpush1.bf16.msra.mxu0 %v3502
    %3915 = vmatprep.subr.bf16.mxu0 %v3479
    %3916 = vmatpush1.bf16.msra.mxu0 %v3478
    %3917 = vmatprep.subr.bf16.mxu0 %v3455
    %3918 = vmatpush1.bf16.msra.mxu0 %v3454
    %3919 = vmatprep.subr.bf16.mxu0 %v3431
    %3920 = vmatpush1.bf16.msra.mxu0 %v3430
    %3921 = vmatprep.subr.bf16.mxu0 %v3407
    %3922 = vmatpush1.bf16.msra.mxu0 %v3406
    %3923 = vmatprep.subr.bf16.mxu0 %v3383
    %3924 = vmatpush1.bf16.msra.mxu0 %v3382
    %3925 = vmatprep.subr.bf16.mxu0 %v3359
    %3926 = vmatpush1.bf16.msra.mxu0 %v3358
    %3927 = vmatprep.subr.bf16.mxu0 %v3335
    %3928 = vmatpush1.bf16.msra.mxu0 %v3334
    %3929 = vmatprep.subr.bf16.mxu0 0
    %3930 = vmatpush2.bf16.msra.mxu0 0
    %3931 = vmatprep.subr.bf16.mxu0 0
    %3932 = vmatpush2.bf16.msra.mxu0 0
    %3933 = vmatprep.subr.bf16.mxu0 0
    %3934 = vmatpush2.bf16.msra.mxu0 0
    %3935 = vmatprep.subr.bf16.mxu0 0
    %3936 = vmatpush2.bf16.msra.mxu0 0
    %3937 = vmatprep.subr.bf16.mxu0 0
    %3938 = vmatpush2.bf16.msra.mxu0 0
    %3939 = vmatprep.subr.bf16.mxu0 0
    %3940 = vmatpush2.bf16.msra.mxu0 0
    %3941 = vmatprep.subr.bf16.mxu0 0
    %3942 = vmatpush2.bf16.msra.mxu0 0
    %3943 = vmatprep.subr.bf16.mxu0 0
    %3944 = vmatpush2.bf16.msra.mxu0 0
    %3945 = vmatprep.mubr.bf16.mxu0 0
    %3946 = vmatmul.mubr.bf16.gmra.mxu0 %v2624
    %v3947 = vpop.f32.mrf.mxu0
    %v3948 = vadd.f32 %v2671, %v3947
    %v3949 = vpop.f32.mrf.mxu0
    %v3950 = vadd.f32 %v2675, %v3949
    %v3951 = vpop.f32.mrf.mxu0
    %v3952 = vpop.f32.mrf.mxu0
    %3953 = vdwg.mxu0
    %3954 = vmatprep.subr.bf16.mxu0 %v3505
    %3955 = vmatpush1.bf16.msra.mxu0 %v3504
    %3956 = vmatprep.subr.bf16.mxu0 %v3481
    %3957 = vmatpush1.bf16.msra.mxu0 %v3480
    %3958 = vmatprep.subr.bf16.mxu0 %v3457
    %3959 = vmatpush1.bf16.msra.mxu0 %v3456
    %3960 = vmatprep.subr.bf16.mxu0 %v3433
    %3961 = vmatpush1.bf16.msra.mxu0 %v3432
    %3962 = vmatprep.subr.bf16.mxu0 %v3409
    %3963 = vmatpush1.bf16.msra.mxu0 %v3408
    %3964 = vmatprep.subr.bf16.mxu0 %v3385
    %3965 = vmatpush1.bf16.msra.mxu0 %v3384
    %3966 = vmatprep.subr.bf16.mxu0 %v3361
    %3967 = vmatpush1.bf16.msra.mxu0 %v3360
    %3968 = vmatprep.subr.bf16.mxu0 %v3337
    %3969 = vmatpush1.bf16.msra.mxu0 %v3336
    %3970 = vmatprep.subr.bf16.mxu0 0
    %3971 = vmatpush2.bf16.msra.mxu0 0
    %3972 = vmatprep.subr.bf16.mxu0 0
    %3973 = vmatpush2.bf16.msra.mxu0 0
    %3974 = vmatprep.subr.bf16.mxu0 0
    %3975 = vmatpush2.bf16.msra.mxu0 0
    %3976 = vmatprep.subr.bf16.mxu0 0
    %3977 = vmatpush2.bf16.msra.mxu0 0
    %3978 = vmatprep.subr.bf16.mxu0 0
    %3979 = vmatpush2.bf16.msra.mxu0 0
    %3980 = vmatprep.subr.bf16.mxu0 0
    %3981 = vmatpush2.bf16.msra.mxu0 0
    %3982 = vmatprep.subr.bf16.mxu0 0
    %3983 = vmatpush2.bf16.msra.mxu0 0
    %3984 = vmatprep.subr.bf16.mxu0 0
    %3985 = vmatpush2.bf16.msra.mxu0 0
    %3986 = vmatprep.mubr.bf16.mxu0 0
    %3987 = vmatmul.mubr.bf16.gmra.mxu0 %v2624
    %v3988 = vpop.f32.mrf.mxu0
    %v3989 = vadd.f32 %v2679, %v3988
    %v3990 = vpop.f32.mrf.mxu0
    %v3991 = vadd.f32 %v2683, %v3990
    %v3992 = vpop.f32.mrf.mxu0
    %v3993 = vpop.f32.mrf.mxu0
    %3994 = vdwg.mxu0
    %3995 = vmatprep.subr.bf16.mxu0 %v3507
    %3996 = vmatpush1.bf16.msra.mxu0 %v3506
    %3997 = vmatprep.subr.bf16.mxu0 %v3483
    %3998 = vmatpush1.bf16.msra.mxu0 %v3482
    %3999 = vmatprep.subr.bf16.mxu0 %v3459
    %4000 = vmatpush1.bf16.msra.mxu0 %v3458
    %4001 = vmatprep.subr.bf16.mxu0 %v3435
    %4002 = vmatpush1.bf16.msra.mxu0 %v3434
    %4003 = vmatprep.subr.bf16.mxu0 %v3411
    %4004 = vmatpush1.bf16.msra.mxu0 %v3410
    %4005 = vmatprep.subr.bf16.mxu0 %v3387
    %4006 = vmatpush1.bf16.msra.mxu0 %v3386
    %4007 = vmatprep.subr.bf16.mxu0 %v3363
    %4008 = vmatpush1.bf16.msra.mxu0 %v3362
    %4009 = vmatprep.subr.bf16.mxu0 %v3339
    %4010 = vmatpush1.bf16.msra.mxu0 %v3338
    %4011 = vmatprep.subr.bf16.mxu0 0
    %4012 = vmatpush2.bf16.msra.mxu0 0
    %4013 = vmatprep.subr.bf16.mxu0 0
    %4014 = vmatpush2.bf16.msra.mxu0 0
    %4015 = vmatprep.subr.bf16.mxu0 0
    %4016 = vmatpush2.bf16.msra.mxu0 0
    %4017 = vmatprep.subr.bf16.mxu0 0
    %4018 = vmatpush2.bf16.msra.mxu0 0
    %4019 = vmatprep.subr.bf16.mxu0 0
    %4020 = vmatpush2.bf16.msra.mxu0 0
    %4021 = vmatprep.subr.bf16.mxu0 0
    %4022 = vmatpush2.bf16.msra.mxu0 0
    %4023 = vmatprep.subr.bf16.mxu0 0
    %4024 = vmatpush2.bf16.msra.mxu0 0
    %4025 = vmatprep.subr.bf16.mxu0 0
    %4026 = vmatpush2.bf16.msra.mxu0 0
    %4027 = vmatprep.mubr.bf16.mxu0 0
    %4028 = vmatmul.mubr.bf16.gmra.mxu0 %v2624
    %v4029 = vpop.f32.mrf.mxu0
    %v4030 = vadd.f32 %v2687, %v4029
    %v4031 = vpop.f32.mrf.mxu0
    %v4032 = vadd.f32 %v2691, %v4031
    %v4033 = vpop.f32.mrf.mxu0
    %v4034 = vpop.f32.mrf.mxu0
    %4035 = vdwg.mxu0
    %4036 = vmatprep.subr.bf16.mxu0 %v3509
    %4037 = vmatpush1.bf16.msra.mxu0 %v3508
    %4038 = vmatprep.subr.bf16.mxu0 %v3485
    %4039 = vmatpush1.bf16.msra.mxu0 %v3484
    %4040 = vmatprep.subr.bf16.mxu0 %v3461
    %4041 = vmatpush1.bf16.msra.mxu0 %v3460
    %4042 = vmatprep.subr.bf16.mxu0 %v3437
    %4043 = vmatpush1.bf16.msra.mxu0 %v3436
    %4044 = vmatprep.subr.bf16.mxu0 %v3413
    %4045 = vmatpush1.bf16.msra.mxu0 %v3412
    %4046 = vmatprep.subr.bf16.mxu0 %v3389
    %4047 = vmatpush1.bf16.msra.mxu0 %v3388
    %4048 = vmatprep.subr.bf16.mxu0 %v3365
    %4049 = vmatpush1.bf16.msra.mxu0 %v3364
    %4050 = vmatprep.subr.bf16.mxu0 %v3341
    %4051 = vmatpush1.bf16.msra.mxu0 %v3340
    %4052 = vmatprep.subr.bf16.mxu0 0
    %4053 = vmatpush2.bf16.msra.mxu0 0
    %4054 = vmatprep.subr.bf16.mxu0 0
    %4055 = vmatpush2.bf16.msra.mxu0 0
    %4056 = vmatprep.subr.bf16.mxu0 0
    %4057 = vmatpush2.bf16.msra.mxu0 0
    %4058 = vmatprep.subr.bf16.mxu0 0
    %4059 = vmatpush2.bf16.msra.mxu0 0
    %4060 = vmatprep.subr.bf16.mxu0 0
    %4061 = vmatpush2.bf16.msra.mxu0 0
    %4062 = vmatprep.subr.bf16.mxu0 0
    %4063 = vmatpush2.bf16.msra.mxu0 0
    %4064 = vmatprep.subr.bf16.mxu0 0
    %4065 = vmatpush2.bf16.msra.mxu0 0
    %4066 = vmatprep.subr.bf16.mxu0 0
    %4067 = vmatpush2.bf16.msra.mxu0 0
    %4068 = vmatprep.mubr.bf16.mxu0 0
    %4069 = vmatmul.mubr.bf16.gmra.mxu0 %v2624
    %v4070 = vpop.f32.mrf.mxu0
    %v4071 = vadd.f32 %v2695, %v4070
    %v4072 = vpop.f32.mrf.mxu0
    %v4073 = vadd.f32 %v2699, %v4072
    %v4074 = vpop.f32.mrf.mxu0
    %v4075 = vpop.f32.mrf.mxu0
    %4076 = vdwg.mxu0
    %4077 = vmatprep.subr.bf16.mxu0 %v3511
    %4078 = vmatpush1.bf16.msra.mxu0 %v3510
    %4079 = vmatprep.subr.bf16.mxu0 %v3487
    %4080 = vmatpush1.bf16.msra.mxu0 %v3486
    %4081 = vmatprep.subr.bf16.mxu0 %v3463
    %4082 = vmatpush1.bf16.msra.mxu0 %v3462
    %4083 = vmatprep.subr.bf16.mxu0 %v3439
    %4084 = vmatpush1.bf16.msra.mxu0 %v3438
    %4085 = vmatprep.subr.bf16.mxu0 %v3415
    %4086 = vmatpush1.bf16.msra.mxu0 %v3414
    %4087 = vmatprep.subr.bf16.mxu0 %v3391
    %4088 = vmatpush1.bf16.msra.mxu0 %v3390
    %4089 = vmatprep.subr.bf16.mxu0 %v3367
    %4090 = vmatpush1.bf16.msra.mxu0 %v3366
    %4091 = vmatprep.subr.bf16.mxu0 %v3343
    %4092 = vmatpush1.bf16.msra.mxu0 %v3342
    %4093 = vmatprep.subr.bf16.mxu0 0
    %4094 = vmatpush2.bf16.msra.mxu0 0
    %4095 = vmatprep.subr.bf16.mxu0 0
    %4096 = vmatpush2.bf16.msra.mxu0 0
    %4097 = vmatprep.subr.bf16.mxu0 0
    %4098 = vmatpush2.bf16.msra.mxu0 0
    %4099 = vmatprep.subr.bf16.mxu0 0
    %4100 = vmatpush2.bf16.msra.mxu0 0
    %4101 = vmatprep.subr.bf16.mxu0 0
    %4102 = vmatpush2.bf16.msra.mxu0 0
    %4103 = vmatprep.subr.bf16.mxu0 0
    %4104 = vmatpush2.bf16.msra.mxu0 0
    %4105 = vmatprep.subr.bf16.mxu0 0
    %4106 = vmatpush2.bf16.msra.mxu0 0
    %4107 = vmatprep.subr.bf16.mxu0 0
    %4108 = vmatpush2.bf16.msra.mxu0 0
    %4109 = vmatprep.mubr.bf16.mxu0 0
    %4110 = vmatmul.mubr.bf16.gmra.mxu0 %v2624
    %v4111 = vpop.f32.mrf.mxu0
    %v4112 = vadd.f32 %v2703, %v4111
    %v4113 = vpop.f32.mrf.mxu0
    %v4114 = vadd.f32 %v2707, %v4113
    %v4115 = vpop.f32.mrf.mxu0
    %v4116 = vpop.f32.mrf.mxu0
    %4117 = vdwg.mxu0
    %4118 = vmatprep.subr.bf16.mxu0 %v3513
    %4119 = vmatpush1.bf16.msra.mxu0 %v3512
    %4120 = vmatprep.subr.bf16.mxu0 %v3489
    %4121 = vmatpush1.bf16.msra.mxu0 %v3488
    %4122 = vmatprep.subr.bf16.mxu0 %v3465
    %4123 = vmatpush1.bf16.msra.mxu0 %v3464
    %4124 = vmatprep.subr.bf16.mxu0 %v3441
    %4125 = vmatpush1.bf16.msra.mxu0 %v3440
    %4126 = vmatprep.subr.bf16.mxu0 %v3417
    %4127 = vmatpush1.bf16.msra.mxu0 %v3416
    %4128 = vmatprep.subr.bf16.mxu0 %v3393
    %4129 = vmatpush1.bf16.msra.mxu0 %v3392
    %4130 = vmatprep.subr.bf16.mxu0 %v3369
    %4131 = vmatpush1.bf16.msra.mxu0 %v3368
    %4132 = vmatprep.subr.bf16.mxu0 %v3345
    %4133 = vmatpush1.bf16.msra.mxu0 %v3344
    %4134 = vmatprep.subr.bf16.mxu0 0
    %4135 = vmatpush2.bf16.msra.mxu0 0
    %4136 = vmatprep.subr.bf16.mxu0 0
    %4137 = vmatpush2.bf16.msra.mxu0 0
    %4138 = vmatprep.subr.bf16.mxu0 0
    %4139 = vmatpush2.bf16.msra.mxu0 0
    %4140 = vmatprep.subr.bf16.mxu0 0
    %4141 = vmatpush2.bf16.msra.mxu0 0
    %4142 = vmatprep.subr.bf16.mxu0 0
    %4143 = vmatpush2.bf16.msra.mxu0 0
    %4144 = vmatprep.subr.bf16.mxu0 0
    %4145 = vmatpush2.bf16.msra.mxu0 0
    %4146 = vmatprep.subr.bf16.mxu0 0
    %4147 = vmatpush2.bf16.msra.mxu0 0
    %4148 = vmatprep.subr.bf16.mxu0 0
    %4149 = vmatpush2.bf16.msra.mxu0 0
    %4150 = vmatprep.mubr.bf16.mxu0 0
    %4151 = vmatmul.mubr.bf16.gmra.mxu0 %v2624
    %v4152 = vpop.f32.mrf.mxu0
    %v4153 = vadd.f32 %v2711, %v4152
    %v4154 = vpop.f32.mrf.mxu0
    %v4155 = vadd.f32 %v2715, %v4154
    %v4156 = vpop.f32.mrf.mxu0
    %v4157 = vpop.f32.mrf.mxu0
    %4158 = vdwg.mxu0
    %4159 = vmatprep.subr.bf16.mxu0 %v3515
    %4160 = vmatpush1.bf16.msra.mxu0 %v3514
    %4161 = vmatprep.subr.bf16.mxu0 %v3491
    %4162 = vmatpush1.bf16.msra.mxu0 %v3490
    %4163 = vmatprep.subr.bf16.mxu0 %v3467
    %4164 = vmatpush1.bf16.msra.mxu0 %v3466
    %4165 = vmatprep.subr.bf16.mxu0 %v3443
    %4166 = vmatpush1.bf16.msra.mxu0 %v3442
    %4167 = vmatprep.subr.bf16.mxu0 %v3419
    %4168 = vmatpush1.bf16.msra.mxu0 %v3418
    %4169 = vmatprep.subr.bf16.mxu0 %v3395
    %4170 = vmatpush1.bf16.msra.mxu0 %v3394
    %4171 = vmatprep.subr.bf16.mxu0 %v3371
    %4172 = vmatpush1.bf16.msra.mxu0 %v3370
    %4173 = vmatprep.subr.bf16.mxu0 %v3347
    %4174 = vmatpush1.bf16.msra.mxu0 %v3346
    %4175 = vmatprep.subr.bf16.mxu0 0
    %4176 = vmatpush2.bf16.msra.mxu0 0
    %4177 = vmatprep.subr.bf16.mxu0 0
    %4178 = vmatpush2.bf16.msra.mxu0 0
    %4179 = vmatprep.subr.bf16.mxu0 0
    %4180 = vmatpush2.bf16.msra.mxu0 0
    %4181 = vmatprep.subr.bf16.mxu0 0
    %4182 = vmatpush2.bf16.msra.mxu0 0
    %4183 = vmatprep.subr.bf16.mxu0 0
    %4184 = vmatpush2.bf16.msra.mxu0 0
    %4185 = vmatprep.subr.bf16.mxu0 0
    %4186 = vmatpush2.bf16.msra.mxu0 0
    %4187 = vmatprep.subr.bf16.mxu0 0
    %4188 = vmatpush2.bf16.msra.mxu0 0
    %4189 = vmatprep.subr.bf16.mxu0 0
    %4190 = vmatpush2.bf16.msra.mxu0 0
    %4191 = vmatprep.mubr.bf16.mxu0 0
    %4192 = vmatmul.mubr.bf16.gmra.mxu0 %v2624
    %v4193 = vpop.f32.mrf.mxu0
    %v4194 = vadd.f32 %v2719, %v4193
    %v4195 = vpop.f32.mrf.mxu0
    %v4196 = vadd.f32 %v2723, %v4195
    %v4197 = vpop.f32.mrf.mxu0
    %v4198 = vpop.f32.mrf.mxu0
    %4199 = vdwg.mxu0
    %v4200 = vxor.u32 %v3743, 2147483648
    %v4201 = vxor.u32 %v3745, 2147483648
    %v4202 = vxor.u32 %v3784, 2147483648
    %v4203 = vxor.u32 %v3786, 2147483648
    %v4204 = vxor.u32 %v3825, 2147483648
    %v4205 = vxor.u32 %v3827, 2147483648
    %v4206 = vxor.u32 %v3866, 2147483648
    %v4207 = vxor.u32 %v3868, 2147483648
    %v4208 = vxor.u32 %v3907, 2147483648
    %v4209 = vxor.u32 %v3909, 2147483648
    %v4210 = vxor.u32 %v3948, 2147483648
    %v4211 = vxor.u32 %v3950, 2147483648
    %v4212 = vxor.u32 %v3989, 2147483648
    %v4213 = vxor.u32 %v3991, 2147483648
    %v4214 = vxor.u32 %v4030, 2147483648
    %v4215 = vxor.u32 %v4032, 2147483648
    %v4216 = vxor.u32 %v4071, 2147483648
    %v4217 = vxor.u32 %v4073, 2147483648
    %v4218 = vxor.u32 %v4112, 2147483648
    %v4219 = vxor.u32 %v4114, 2147483648
    %v4220 = vxor.u32 %v4153, 2147483648
    %v4221 = vxor.u32 %v4155, 2147483648
    %v4222 = vxor.u32 %v4194, 2147483648
    %v4223 = vxor.u32 %v4196, 2147483648
    %v4224 = vmul.f32 %v4200, 1.442695
    %v4225 = vpow.pop %v4224
    %v4226 = vmul.f32 %v4201, 1.442695
    %v4227 = vpow.pop %v4226
    %v4228 = vmul.f32 %v4202, 1.442695
    %v4229 = vpow.pop %v4228
    %v4230 = vmul.f32 %v4203, 1.442695
    %v4231 = vpow.pop %v4230
    %v4232 = vmul.f32 %v4204, 1.442695
    %v4233 = vpow.pop %v4232
    %v4234 = vmul.f32 %v4205, 1.442695
    %v4235 = vpow.pop %v4234
    %v4236 = vmul.f32 %v4206, 1.442695
    %v4237 = vpow.pop %v4236
    %v4238 = vmul.f32 %v4207, 1.442695
    %v4239 = vpow.pop %v4238
    %v4240 = vmul.f32 %v4208, 1.442695
    %v4241 = vpow.pop %v4240
    %v4242 = vmul.f32 %v4209, 1.442695
    %v4243 = vpow.pop %v4242
    %v4244 = vmul.f32 %v4210, 1.442695
    %v4245 = vpow.pop %v4244
    %v4246 = vmul.f32 %v4211, 1.442695
    %v4247 = vpow.pop %v4246
    %v4248 = vmul.f32 %v4212, 1.442695
    %v4249 = vpow.pop %v4248
    %v4250 = vmul.f32 %v4213, 1.442695
    %v4251 = vpow.pop %v4250
    %v4252 = vmul.f32 %v4214, 1.442695
    %v4253 = vpow.pop %v4252
    %v4254 = vmul.f32 %v4215, 1.442695
    %v4255 = vpow.pop %v4254
    %v4256 = vmul.f32 %v4216, 1.442695
    %v4257 = vpow.pop %v4256
    %v4258 = vmul.f32 %v4217, 1.442695
    %v4259 = vpow.pop %v4258
    %v4260 = vmul.f32 %v4218, 1.442695
    %v4261 = vpow.pop %v4260
    %v4262 = vmul.f32 %v4219, 1.442695
    %v4263 = vpow.pop %v4262
    %v4264 = vmul.f32 %v4220, 1.442695
    %v4265 = vpow.pop %v4264
    %v4266 = vmul.f32 %v4221, 1.442695
    %v4267 = vpow.pop %v4266
    %v4268 = vmul.f32 %v4222, 1.442695
    %v4269 = vpow.pop %v4268
    %v4270 = vmul.f32 %v4223, 1.442695
    %v4271 = vpow.pop %v4270
    %v4272 = vadd.f32 %v4225, 1.0
    %v4273 = vadd.f32 %v4227, 1.0
    %v4274 = vadd.f32 %v4229, 1.0
    %v4275 = vadd.f32 %v4231, 1.0
    %v4276 = vadd.f32 %v4233, 1.0
    %v4277 = vadd.f32 %v4235, 1.0
    %v4278 = vadd.f32 %v4237, 1.0
    %v4279 = vadd.f32 %v4239, 1.0
    %v4280 = vadd.f32 %v4241, 1.0
    %v4281 = vadd.f32 %v4243, 1.0
    %v4282 = vadd.f32 %v4245, 1.0
    %v4283 = vadd.f32 %v4247, 1.0
    %v4284 = vadd.f32 %v4249, 1.0
    %v4285 = vadd.f32 %v4251, 1.0
    %v4286 = vadd.f32 %v4253, 1.0
    %v4287 = vadd.f32 %v4255, 1.0
    %v4288 = vadd.f32 %v4257, 1.0
    %v4289 = vadd.f32 %v4259, 1.0
    %v4290 = vadd.f32 %v4261, 1.0
    %v4291 = vadd.f32 %v4263, 1.0
    %v4292 = vadd.f32 %v4265, 1.0
    %v4293 = vadd.f32 %v4267, 1.0
    %v4294 = vadd.f32 %v4269, 1.0
    %v4295 = vadd.f32 %v4271, 1.0
    %v4296 = vrcp.pop %v4272
    %v4297 = vmul.f32 1.0, %v4296
    %v4298 = vrcp.pop %v4273
    %v4299 = vmul.f32 1.0, %v4298
    %v4300 = vrcp.pop %v4274
    %v4301 = vmul.f32 1.0, %v4300
    %v4302 = vrcp.pop %v4275
    %v4303 = vmul.f32 1.0, %v4302
    %v4304 = vrcp.pop %v4276
    %v4305 = vmul.f32 1.0, %v4304
    %v4306 = vrcp.pop %v4277
    %v4307 = vmul.f32 1.0, %v4306
    %v4308 = vrcp.pop %v4278
    %v4309 = vmul.f32 1.0, %v4308
    %v4310 = vrcp.pop %v4279
    %v4311 = vmul.f32 1.0, %v4310
    %v4312 = vrcp.pop %v4280
    %v4313 = vmul.f32 1.0, %v4312
    %v4314 = vrcp.pop %v4281
    %v4315 = vmul.f32 1.0, %v4314
    %v4316 = vrcp.pop %v4282
    %v4317 = vmul.f32 1.0, %v4316
    %v4318 = vrcp.pop %v4283
    %v4319 = vmul.f32 1.0, %v4318
    %v4320 = vrcp.pop %v4284
    %v4321 = vmul.f32 1.0, %v4320
    %v4322 = vrcp.pop %v4285
    %v4323 = vmul.f32 1.0, %v4322
    %v4324 = vrcp.pop %v4286
    %v4325 = vmul.f32 1.0, %v4324
    %v4326 = vrcp.pop %v4287
    %v4327 = vmul.f32 1.0, %v4326
    %v4328 = vrcp.pop %v4288
    %v4329 = vmul.f32 1.0, %v4328
    %v4330 = vrcp.pop %v4289
    %v4331 = vmul.f32 1.0, %v4330
    %v4332 = vrcp.pop %v4290
    %v4333 = vmul.f32 1.0, %v4332
    %v4334 = vrcp.pop %v4291
    %v4335 = vmul.f32 1.0, %v4334
    %v4336 = vrcp.pop %v4292
    %v4337 = vmul.f32 1.0, %v4336
    %v4338 = vrcp.pop %v4293
    %v4339 = vmul.f32 1.0, %v4338
    %v4340 = vrcp.pop %v4294
    %v4341 = vmul.f32 1.0, %v4340
    %v4342 = vrcp.pop %v4295
    %v4343 = vmul.f32 1.0, %v4342
    %v4344 = vld [vmem:[#allocation2] sm:$0xff]
    %v4345 = vld [vmem:[#allocation2 + $0x8] sm:$0xff]
    %v4346 = vld [vmem:[#allocation2 + $0x10] sm:$0xff]
    %v4347 = vmul.f32 %v4297, %v131
    %v4348 = vmul.f32 %v4299, %v132
    %v4349 = vmul.f32 %v4301, %v133
    %v4350 = vmul.f32 %v4303, %v134
    %v4351 = vmul.f32 %v4305, %v135
    %v4352 = vmul.f32 %v4307, %v136
    %v4353 = vmul.f32 %v4309, %v137
    %v4354 = vmul.f32 %v4311, %v138
    %v4355 = vmul.f32 %v4313, %v139
    %v4356 = vmul.f32 %v4315, %v140
    %v4357 = vmul.f32 %v4317, %v141
    %v4358 = vmul.f32 %v4319, %v142
    %v4359 = vmul.f32 %v4321, %v143
    %v4360 = vmul.f32 %v4323, %v144
    %v4361 = vmul.f32 %v4325, %v145
    %v4362 = vmul.f32 %v4327, %v146
    %v4363 = vmul.f32 %v4329, %v147
    %v4364 = vmul.f32 %v4331, %v148
    %v4365 = vmul.f32 %v4333, %v149
    %v4366 = vmul.f32 %v4335, %v150
    %v4367 = vmul.f32 %v4337, %v151
    %v4368 = vmul.f32 %v4339, %v152
    %v4369 = vmul.f32 %v4341, %v153
    %v4370 = vmul.f32 %v4343, %v154
    %v4371 = vrot.slane %v4347, 4
    %v4372 = vadd.f32 %v4347, %v4371
    %v4373 = vrot.slane %v4372, 2
    %v4374 = vadd.f32 %v4372, %v4373
    %v4375 = vrot.slane %v4374, 1
    %v4376 = vadd.f32 %v4374, %v4375
    %v4377 = vrot.slane %v4348, 4
    %v4378 = vadd.f32 %v4348, %v4377
    %v4379 = vrot.slane %v4378, 2
    %v4380 = vadd.f32 %v4378, %v4379
    %v4381 = vrot.slane %v4380, 1
    %v4382 = vadd.f32 %v4380, %v4381
    %v4383 = vrot.slane %v4349, 4
    %v4384 = vadd.f32 %v4349, %v4383
    %v4385 = vrot.slane %v4384, 2
    %v4386 = vadd.f32 %v4384, %v4385
    %v4387 = vrot.slane %v4386, 1
    %v4388 = vadd.f32 %v4386, %v4387
    %v4389 = vrot.slane %v4350, 4
    %v4390 = vadd.f32 %v4350, %v4389
    %v4391 = vrot.slane %v4390, 2
    %v4392 = vadd.f32 %v4390, %v4391
    %v4393 = vrot.slane %v4392, 1
    %v4394 = vadd.f32 %v4392, %v4393
    %v4395 = vrot.slane %v4351, 4
    %v4396 = vadd.f32 %v4351, %v4395
    %v4397 = vrot.slane %v4396, 2
    %v4398 = vadd.f32 %v4396, %v4397
    %v4399 = vrot.slane %v4398, 1
    %v4400 = vadd.f32 %v4398, %v4399
    %v4401 = vrot.slane %v4352, 4
    %v4402 = vadd.f32 %v4352, %v4401
    %v4403 = vrot.slane %v4402, 2
    %v4404 = vadd.f32 %v4402, %v4403
    %v4405 = vrot.slane %v4404, 1
    %v4406 = vadd.f32 %v4404, %v4405
    %v4407 = vrot.slane %v4353, 4
    %v4408 = vadd.f32 %v4353, %v4407
    %v4409 = vrot.slane %v4408, 2
    %v4410 = vadd.f32 %v4408, %v4409
    %v4411 = vrot.slane %v4410, 1
    %v4412 = vadd.f32 %v4410, %v4411
    %v4413 = vrot.slane %v4354, 4
    %v4414 = vadd.f32 %v4354, %v4413
    %v4415 = vrot.slane %v4414, 2
    %v4416 = vadd.f32 %v4414, %v4415
    %v4417 = vrot.slane %v4416, 1
    %v4418 = vadd.f32 %v4416, %v4417
    %v4419 = vrot.slane %v4355, 4
    %v4420 = vadd.f32 %v4355, %v4419
    %v4421 = vrot.slane %v4420, 2
    %v4422 = vadd.f32 %v4420, %v4421
    %v4423 = vrot.slane %v4422, 1
    %v4424 = vadd.f32 %v4422, %v4423
    %v4425 = vrot.slane %v4356, 4
    %v4426 = vadd.f32 %v4356, %v4425
    %v4427 = vrot.slane %v4426, 2
    %v4428 = vadd.f32 %v4426, %v4427
    %v4429 = vrot.slane %v4428, 1
    %v4430 = vadd.f32 %v4428, %v4429
    %v4431 = vrot.slane %v4357, 4
    %v4432 = vadd.f32 %v4357, %v4431
    %v4433 = vrot.slane %v4432, 2
    %v4434 = vadd.f32 %v4432, %v4433
    %v4435 = vrot.slane %v4434, 1
    %v4436 = vadd.f32 %v4434, %v4435
    %v4437 = vrot.slane %v4358, 4
    %v4438 = vadd.f32 %v4358, %v4437
    %v4439 = vrot.slane %v4438, 2
    %v4440 = vadd.f32 %v4438, %v4439
    %v4441 = vrot.slane %v4440, 1
    %v4442 = vadd.f32 %v4440, %v4441
    %v4443 = vrot.slane %v4359, 4
    %v4444 = vadd.f32 %v4359, %v4443
    %v4445 = vrot.slane %v4444, 2
    %v4446 = vadd.f32 %v4444, %v4445
    %v4447 = vrot.slane %v4446, 1
    %v4448 = vadd.f32 %v4446, %v4447
    %v4449 = vrot.slane %v4360, 4
    %v4450 = vadd.f32 %v4360, %v4449
    %v4451 = vrot.slane %v4450, 2
    %v4452 = vadd.f32 %v4450, %v4451
    %v4453 = vrot.slane %v4452, 1
    %v4454 = vadd.f32 %v4452, %v4453
    %v4455 = vrot.slane %v4361, 4
    %v4456 = vadd.f32 %v4361, %v4455
    %v4457 = vrot.slane %v4456, 2
    %v4458 = vadd.f32 %v4456, %v4457
    %v4459 = vrot.slane %v4458, 1
    %v4460 = vadd.f32 %v4458, %v4459
    %v4461 = vrot.slane %v4362, 4
    %v4462 = vadd.f32 %v4362, %v4461
    %v4463 = vrot.slane %v4462, 2
    %v4464 = vadd.f32 %v4462, %v4463
    %v4465 = vrot.slane %v4464, 1
    %v4466 = vadd.f32 %v4464, %v4465
    %v4467 = vrot.slane %v4363, 4
    %v4468 = vadd.f32 %v4363, %v4467
    %v4469 = vrot.slane %v4468, 2
    %v4470 = vadd.f32 %v4468, %v4469
    %v4471 = vrot.slane %v4470, 1
    %v4472 = vadd.f32 %v4470, %v4471
    %v4473 = vrot.slane %v4364, 4
    %v4474 = vadd.f32 %v4364, %v4473
    %v4475 = vrot.slane %v4474, 2
    %v4476 = vadd.f32 %v4474, %v4475
    %v4477 = vrot.slane %v4476, 1
    %v4478 = vadd.f32 %v4476, %v4477
    %v4479 = vrot.slane %v4365, 4
    %v4480 = vadd.f32 %v4365, %v4479
    %v4481 = vrot.slane %v4480, 2
    %v4482 = vadd.f32 %v4480, %v4481
    %v4483 = vrot.slane %v4482, 1
    %v4484 = vadd.f32 %v4482, %v4483
    %v4485 = vrot.slane %v4366, 4
    %v4486 = vadd.f32 %v4366, %v4485
    %v4487 = vrot.slane %v4486, 2
    %v4488 = vadd.f32 %v4486, %v4487
    %v4489 = vrot.slane %v4488, 1
    %v4490 = vadd.f32 %v4488, %v4489
    %v4491 = vrot.slane %v4367, 4
    %v4492 = vadd.f32 %v4367, %v4491
    %v4493 = vrot.slane %v4492, 2
    %v4494 = vadd.f32 %v4492, %v4493
    %v4495 = vrot.slane %v4494, 1
    %v4496 = vadd.f32 %v4494, %v4495
    %v4497 = vrot.slane %v4368, 4
    %v4498 = vadd.f32 %v4368, %v4497
    %v4499 = vrot.slane %v4498, 2
    %v4500 = vadd.f32 %v4498, %v4499
    %v4501 = vrot.slane %v4500, 1
    %v4502 = vadd.f32 %v4500, %v4501
    %v4503 = vrot.slane %v4369, 4
    %v4504 = vadd.f32 %v4369, %v4503
    %v4505 = vrot.slane %v4504, 2
    %v4506 = vadd.f32 %v4504, %v4505
    %v4507 = vrot.slane %v4506, 1
    %v4508 = vadd.f32 %v4506, %v4507
    %v4509 = vrot.slane %v4370, 4
    %v4510 = vadd.f32 %v4370, %v4509
    %v4511 = vrot.slane %v4510, 2
    %v4512 = vadd.f32 %v4510, %v4511
    %v4513 = vrot.slane %v4512, 1
    %v4514 = vadd.f32 %v4512, %v4513
    %v4539 = vcombine.low %v4376, %v4382
    %v4540 = vcombine.low %v4388, %v4394
    %v4541 = vcombine.low %v4400, %v4406
    %v4542 = vcombine.low %v4412, %v4418
    %v4544 = vunpack.c.l.s4 1966171168
    %v4545 = vunpack.c.0.s8 %v4544
    %v4546 = vlaneseq
    %v4547 = vshrl.u32 %v4546, 7
    %v4548 = vsub.s32 %v4545, %v4547
    %v4549 = vrot.slane %v4539, %v4548
    %v4551 = vunpack.c.l.s4 1966171168
    %v4552 = vunpack.c.0.s8 %v4551
    %v4553 = vlaneseq
    %v4554 = vshrl.u32 %v4553, 7
    %v4555 = vsub.s32 %v4552, %v4554
    %v4556 = vrot.slane %v4540, %v4555
    %v4558 = vunpack.c.l.s4 1966171168
    %v4559 = vunpack.c.0.s8 %v4558
    %v4560 = vlaneseq
    %v4561 = vshrl.u32 %v4560, 7
    %v4562 = vsub.s32 %v4559, %v4561
    %v4563 = vrot.slane %v4541, %v4562
    %v4565 = vunpack.c.l.s4 1966171168
    %v4566 = vunpack.c.0.s8 %v4565
    %v4567 = vlaneseq
    %v4568 = vshrl.u32 %v4567, 7
    %v4569 = vsub.s32 %v4566, %v4568
    %v4570 = vrot.slane %v4542, %v4569
    %v4571 = vcombine.low %v4549, %v4556
    %v4572 = vcombine.low %v4563, %v4570
    %v4574 = vunpack.c.l.s4 1966171168
    %v4575 = vunpack.c.0.s8 %v4574
    %v4576 = vlaneseq
    %v4577 = vshrl.u32 %v4576, 7
    %v4578 = vsub.s32 %v4575, %v4577
    %v4579 = vrot.slane %v4571, %v4578
    %v4581 = vunpack.c.l.s4 1966171168
    %v4582 = vunpack.c.0.s8 %v4581
    %v4583 = vlaneseq
    %v4584 = vshrl.u32 %v4583, 7
    %v4585 = vsub.s32 %v4582, %v4584
    %v4586 = vrot.slane %v4572, %v4585
    %v4587 = vcombine.low %v4579, %v4586
    %v4588 = vcombine.low %v4424, %v4430
    %v4589 = vcombine.low %v4436, %v4442
    %v4590 = vcombine.low %v4448, %v4454
    %v4591 = vcombine.low %v4460, %v4466
    %v4593 = vunpack.c.l.s4 1966171168
    %v4594 = vunpack.c.0.s8 %v4593
    %v4595 = vlaneseq
    %v4596 = vshrl.u32 %v4595, 7
    %v4597 = vsub.s32 %v4594, %v4596
    %v4598 = vrot.slane %v4588, %v4597
    %v4600 = vunpack.c.l.s4 1966171168
    %v4601 = vunpack.c.0.s8 %v4600
    %v4602 = vlaneseq
    %v4603 = vshrl.u32 %v4602, 7
    %v4604 = vsub.s32 %v4601, %v4603
    %v4605 = vrot.slane %v4589, %v4604
    %v4607 = vunpack.c.l.s4 1966171168
    %v4608 = vunpack.c.0.s8 %v4607
    %v4609 = vlaneseq
    %v4610 = vshrl.u32 %v4609, 7
    %v4611 = vsub.s32 %v4608, %v4610
    %v4612 = vrot.slane %v4590, %v4611
    %v4614 = vunpack.c.l.s4 1966171168
    %v4615 = vunpack.c.0.s8 %v4614
    %v4616 = vlaneseq
    %v4617 = vshrl.u32 %v4616, 7
    %v4618 = vsub.s32 %v4615, %v4617
    %v4619 = vrot.slane %v4591, %v4618
    %v4620 = vcombine.low %v4598, %v4605
    %v4621 = vcombine.low %v4612, %v4619
    %v4623 = vunpack.c.l.s4 1966171168
    %v4624 = vunpack.c.0.s8 %v4623
    %v4625 = vlaneseq
    %v4626 = vshrl.u32 %v4625, 7
    %v4627 = vsub.s32 %v4624, %v4626
    %v4628 = vrot.slane %v4620, %v4627
    %v4630 = vunpack.c.l.s4 1966171168
    %v4631 = vunpack.c.0.s8 %v4630
    %v4632 = vlaneseq
    %v4633 = vshrl.u32 %v4632, 7
    %v4634 = vsub.s32 %v4631, %v4633
    %v4635 = vrot.slane %v4621, %v4634
    %v4636 = vcombine.low %v4628, %v4635
    %v4637 = vcombine.low %v4472, %v4478
    %v4638 = vcombine.low %v4484, %v4490
    %v4639 = vcombine.low %v4496, %v4502
    %v4640 = vcombine.low %v4508, %v4514
    %v4642 = vunpack.c.l.s4 1966171168
    %v4643 = vunpack.c.0.s8 %v4642
    %v4644 = vlaneseq
    %v4645 = vshrl.u32 %v4644, 7
    %v4646 = vsub.s32 %v4643, %v4645
    %v4647 = vrot.slane %v4637, %v4646
    %v4649 = vunpack.c.l.s4 1966171168
    %v4650 = vunpack.c.0.s8 %v4649
    %v4651 = vlaneseq
    %v4652 = vshrl.u32 %v4651, 7
    %v4653 = vsub.s32 %v4650, %v4652
    %v4654 = vrot.slane %v4638, %v4653
    %v4656 = vunpack.c.l.s4 1966171168
    %v4657 = vunpack.c.0.s8 %v4656
    %v4658 = vlaneseq
    %v4659 = vshrl.u32 %v4658, 7
    %v4660 = vsub.s32 %v4657, %v4659
    %v4661 = vrot.slane %v4639, %v4660
    %v4663 = vunpack.c.l.s4 1966171168
    %v4664 = vunpack.c.0.s8 %v4663
    %v4665 = vlaneseq
    %v4666 = vshrl.u32 %v4665, 7
    %v4667 = vsub.s32 %v4664, %v4666
    %v4668 = vrot.slane %v4640, %v4667
    %v4669 = vcombine.low %v4647, %v4654
    %v4670 = vcombine.low %v4661, %v4668
    %v4672 = vunpack.c.l.s4 1966171168
    %v4673 = vunpack.c.0.s8 %v4672
    %v4674 = vlaneseq
    %v4675 = vshrl.u32 %v4674, 7
    %v4676 = vsub.s32 %v4673, %v4675
    %v4677 = vrot.slane %v4669, %v4676
    %v4679 = vunpack.c.l.s4 1966171168
    %v4680 = vunpack.c.0.s8 %v4679
    %v4681 = vlaneseq
    %v4682 = vshrl.u32 %v4681, 7
    %v4683 = vsub.s32 %v4680, %v4682
    %v4684 = vrot.slane %v4670, %v4683
    %v4685 = vcombine.low %v4677, %v4684
    %v4689 = vadd.f32 %v4344, %v4587
    %v4690 = vadd.f32 %v4345, %v4636
    %v4691 = vadd.f32 %v4346, %v4685
    %4692 = vst [vmem:[#allocation2] sm:$0xff] %v4689
    %4693 = vst [vmem:[#allocation2 + $0x8] sm:$0xff] %v4690
    %4694 = vst [vmem:[#allocation2 + $0x10] sm:$0xff] %v4691
    %v4695 = vld [vmem:[#allocation3] sm:$0xff]
    %v4696 = vld [vmem:[#allocation3 + $0x8] sm:$0xff]
    %v4697 = vld [vmem:[#allocation3 + $0x10] sm:$0xff]
    %v4698 = vmul.f32 %v4297, %v4297
    %v4699 = vmul.f32 %v4299, %v4299
    %v4700 = vmul.f32 %v4301, %v4301
    %v4701 = vmul.f32 %v4303, %v4303
    %v4702 = vmul.f32 %v4305, %v4305
    %v4703 = vmul.f32 %v4307, %v4307
    %v4704 = vmul.f32 %v4309, %v4309
    %v4705 = vmul.f32 %v4311, %v4311
    %v4706 = vmul.f32 %v4313, %v4313
    %v4707 = vmul.f32 %v4315, %v4315
    %v4708 = vmul.f32 %v4317, %v4317
    %v4709 = vmul.f32 %v4319, %v4319
    %v4710 = vmul.f32 %v4321, %v4321
    %v4711 = vmul.f32 %v4323, %v4323
    %v4712 = vmul.f32 %v4325, %v4325
    %v4713 = vmul.f32 %v4327, %v4327
    %v4714 = vmul.f32 %v4329, %v4329
    %v4715 = vmul.f32 %v4331, %v4331
    %v4716 = vmul.f32 %v4333, %v4333
    %v4717 = vmul.f32 %v4335, %v4335
    %v4718 = vmul.f32 %v4337, %v4337
    %v4719 = vmul.f32 %v4339, %v4339
    %v4720 = vmul.f32 %v4341, %v4341
    %v4721 = vmul.f32 %v4343, %v4343
    %v4722 = vrot.slane %v4698, 4
    %v4723 = vadd.f32 %v4698, %v4722
    %v4724 = vrot.slane %v4723, 2
    %v4725 = vadd.f32 %v4723, %v4724
    %v4726 = vrot.slane %v4725, 1
    %v4727 = vadd.f32 %v4725, %v4726
    %v4728 = vrot.slane %v4699, 4
    %v4729 = vadd.f32 %v4699, %v4728
    %v4730 = vrot.slane %v4729, 2
    %v4731 = vadd.f32 %v4729, %v4730
    %v4732 = vrot.slane %v4731, 1
    %v4733 = vadd.f32 %v4731, %v4732
    %v4734 = vrot.slane %v4700, 4
    %v4735 = vadd.f32 %v4700, %v4734
    %v4736 = vrot.slane %v4735, 2
    %v4737 = vadd.f32 %v4735, %v4736
    %v4738 = vrot.slane %v4737, 1
    %v4739 = vadd.f32 %v4737, %v4738
    %v4740 = vrot.slane %v4701, 4
    %v4741 = vadd.f32 %v4701, %v4740
    %v4742 = vrot.slane %v4741, 2
    %v4743 = vadd.f32 %v4741, %v4742
    %v4744 = vrot.slane %v4743, 1
    %v4745 = vadd.f32 %v4743, %v4744
    %v4746 = vrot.slane %v4702, 4
    %v4747 = vadd.f32 %v4702, %v4746
    %v4748 = vrot.slane %v4747, 2
    %v4749 = vadd.f32 %v4747, %v4748
    %v4750 = vrot.slane %v4749, 1
    %v4751 = vadd.f32 %v4749, %v4750
    %v4752 = vrot.slane %v4703, 4
    %v4753 = vadd.f32 %v4703, %v4752
    %v4754 = vrot.slane %v4753, 2
    %v4755 = vadd.f32 %v4753, %v4754
    %v4756 = vrot.slane %v4755, 1
    %v4757 = vadd.f32 %v4755, %v4756
    %v4758 = vrot.slane %v4704, 4
    %v4759 = vadd.f32 %v4704, %v4758
    %v4760 = vrot.slane %v4759, 2
    %v4761 = vadd.f32 %v4759, %v4760
    %v4762 = vrot.slane %v4761, 1
    %v4763 = vadd.f32 %v4761, %v4762
    %v4764 = vrot.slane %v4705, 4
    %v4765 = vadd.f32 %v4705, %v4764
    %v4766 = vrot.slane %v4765, 2
    %v4767 = vadd.f32 %v4765, %v4766
    %v4768 = vrot.slane %v4767, 1
    %v4769 = vadd.f32 %v4767, %v4768
    %v4770 = vrot.slane %v4706, 4
    %v4771 = vadd.f32 %v4706, %v4770
    %v4772 = vrot.slane %v4771, 2
    %v4773 = vadd.f32 %v4771, %v4772
    %v4774 = vrot.slane %v4773, 1
    %v4775 = vadd.f32 %v4773, %v4774
    %v4776 = vrot.slane %v4707, 4
    %v4777 = vadd.f32 %v4707, %v4776
    %v4778 = vrot.slane %v4777, 2
    %v4779 = vadd.f32 %v4777, %v4778
    %v4780 = vrot.slane %v4779, 1
    %v4781 = vadd.f32 %v4779, %v4780
    %v4782 = vrot.slane %v4708, 4
    %v4783 = vadd.f32 %v4708, %v4782
    %v4784 = vrot.slane %v4783, 2
    %v4785 = vadd.f32 %v4783, %v4784
    %v4786 = vrot.slane %v4785, 1
    %v4787 = vadd.f32 %v4785, %v4786
    %v4788 = vrot.slane %v4709, 4
    %v4789 = vadd.f32 %v4709, %v4788
    %v4790 = vrot.slane %v4789, 2
    %v4791 = vadd.f32 %v4789, %v4790
    %v4792 = vrot.slane %v4791, 1
    %v4793 = vadd.f32 %v4791, %v4792
    %v4794 = vrot.slane %v4710, 4
    %v4795 = vadd.f32 %v4710, %v4794
    %v4796 = vrot.slane %v4795, 2
    %v4797 = vadd.f32 %v4795, %v4796
    %v4798 = vrot.slane %v4797, 1
    %v4799 = vadd.f32 %v4797, %v4798
    %v4800 = vrot.slane %v4711, 4
    %v4801 = vadd.f32 %v4711, %v4800
    %v4802 = vrot.slane %v4801, 2
    %v4803 = vadd.f32 %v4801, %v4802
    %v4804 = vrot.slane %v4803, 1
    %v4805 = vadd.f32 %v4803, %v4804
    %v4806 = vrot.slane %v4712, 4
    %v4807 = vadd.f32 %v4712, %v4806
    %v4808 = vrot.slane %v4807, 2
    %v4809 = vadd.f32 %v4807, %v4808
    %v4810 = vrot.slane %v4809, 1
    %v4811 = vadd.f32 %v4809, %v4810
    %v4812 = vrot.slane %v4713, 4
    %v4813 = vadd.f32 %v4713, %v4812
    %v4814 = vrot.slane %v4813, 2
    %v4815 = vadd.f32 %v4813, %v4814
    %v4816 = vrot.slane %v4815, 1
    %v4817 = vadd.f32 %v4815, %v4816
    %v4818 = vrot.slane %v4714, 4
    %v4819 = vadd.f32 %v4714, %v4818
    %v4820 = vrot.slane %v4819, 2
    %v4821 = vadd.f32 %v4819, %v4820
    %v4822 = vrot.slane %v4821, 1
    %v4823 = vadd.f32 %v4821, %v4822
    %v4824 = vrot.slane %v4715, 4
    %v4825 = vadd.f32 %v4715, %v4824
    %v4826 = vrot.slane %v4825, 2
    %v4827 = vadd.f32 %v4825, %v4826
    %v4828 = vrot.slane %v4827, 1
    %v4829 = vadd.f32 %v4827, %v4828
    %v4830 = vrot.slane %v4716, 4
    %v4831 = vadd.f32 %v4716, %v4830
    %v4832 = vrot.slane %v4831, 2
    %v4833 = vadd.f32 %v4831, %v4832
    %v4834 = vrot.slane %v4833, 1
    %v4835 = vadd.f32 %v4833, %v4834
    %v4836 = vrot.slane %v4717, 4
    %v4837 = vadd.f32 %v4717, %v4836
    %v4838 = vrot.slane %v4837, 2
    %v4839 = vadd.f32 %v4837, %v4838
    %v4840 = vrot.slane %v4839, 1
    %v4841 = vadd.f32 %v4839, %v4840
    %v4842 = vrot.slane %v4718, 4
    %v4843 = vadd.f32 %v4718, %v4842
    %v4844 = vrot.slane %v4843, 2
    %v4845 = vadd.f32 %v4843, %v4844
    %v4846 = vrot.slane %v4845, 1
    %v4847 = vadd.f32 %v4845, %v4846
    %v4848 = vrot.slane %v4719, 4
    %v4849 = vadd.f32 %v4719, %v4848
    %v4850 = vrot.slane %v4849, 2
    %v4851 = vadd.f32 %v4849, %v4850
    %v4852 = vrot.slane %v4851, 1
    %v4853 = vadd.f32 %v4851, %v4852
    %v4854 = vrot.slane %v4720, 4
    %v4855 = vadd.f32 %v4720, %v4854
    %v4856 = vrot.slane %v4855, 2
    %v4857 = vadd.f32 %v4855, %v4856
    %v4858 = vrot.slane %v4857, 1
    %v4859 = vadd.f32 %v4857, %v4858
    %v4860 = vrot.slane %v4721, 4
    %v4861 = vadd.f32 %v4721, %v4860
    %v4862 = vrot.slane %v4861, 2
    %v4863 = vadd.f32 %v4861, %v4862
    %v4864 = vrot.slane %v4863, 1
    %v4865 = vadd.f32 %v4863, %v4864
    %v4890 = vcombine.low %v4727, %v4733
    %v4891 = vcombine.low %v4739, %v4745
    %v4892 = vcombine.low %v4751, %v4757
    %v4893 = vcombine.low %v4763, %v4769
    %v4895 = vunpack.c.l.s4 1966171168
    %v4896 = vunpack.c.0.s8 %v4895
    %v4897 = vlaneseq
    %v4898 = vshrl.u32 %v4897, 7
    %v4899 = vsub.s32 %v4896, %v4898
    %v4900 = vrot.slane %v4890, %v4899
    %v4902 = vunpack.c.l.s4 1966171168
    %v4903 = vunpack.c.0.s8 %v4902
    %v4904 = vlaneseq
    %v4905 = vshrl.u32 %v4904, 7
    %v4906 = vsub.s32 %v4903, %v4905
    %v4907 = vrot.slane %v4891, %v4906
    %v4909 = vunpack.c.l.s4 1966171168
    %v4910 = vunpack.c.0.s8 %v4909
    %v4911 = vlaneseq
    %v4912 = vshrl.u32 %v4911, 7
    %v4913 = vsub.s32 %v4910, %v4912
    %v4914 = vrot.slane %v4892, %v4913
    %v4916 = vunpack.c.l.s4 1966171168
    %v4917 = vunpack.c.0.s8 %v4916
    %v4918 = vlaneseq
    %v4919 = vshrl.u32 %v4918, 7
    %v4920 = vsub.s32 %v4917, %v4919
    %v4921 = vrot.slane %v4893, %v4920
    %v4922 = vcombine.low %v4900, %v4907
    %v4923 = vcombine.low %v4914, %v4921
    %v4925 = vunpack.c.l.s4 1966171168
    %v4926 = vunpack.c.0.s8 %v4925
    %v4927 = vlaneseq
    %v4928 = vshrl.u32 %v4927, 7
    %v4929 = vsub.s32 %v4926, %v4928
    %v4930 = vrot.slane %v4922, %v4929
    %v4932 = vunpack.c.l.s4 1966171168
    %v4933 = vunpack.c.0.s8 %v4932
    %v4934 = vlaneseq
    %v4935 = vshrl.u32 %v4934, 7
    %v4936 = vsub.s32 %v4933, %v4935
    %v4937 = vrot.slane %v4923, %v4936
    %v4938 = vcombine.low %v4930, %v4937
    %v4939 = vcombine.low %v4775, %v4781
    %v4940 = vcombine.low %v4787, %v4793
    %v4941 = vcombine.low %v4799, %v4805
    %v4942 = vcombine.low %v4811, %v4817
    %v4944 = vunpack.c.l.s4 1966171168
    %v4945 = vunpack.c.0.s8 %v4944
    %v4946 = vlaneseq
    %v4947 = vshrl.u32 %v4946, 7
    %v4948 = vsub.s32 %v4945, %v4947
    %v4949 = vrot.slane %v4939, %v4948
    %v4951 = vunpack.c.l.s4 1966171168
    %v4952 = vunpack.c.0.s8 %v4951
    %v4953 = vlaneseq
    %v4954 = vshrl.u32 %v4953, 7
    %v4955 = vsub.s32 %v4952, %v4954
    %v4956 = vrot.slane %v4940, %v4955
    %v4958 = vunpack.c.l.s4 1966171168
    %v4959 = vunpack.c.0.s8 %v4958
    %v4960 = vlaneseq
    %v4961 = vshrl.u32 %v4960, 7
    %v4962 = vsub.s32 %v4959, %v4961
    %v4963 = vrot.slane %v4941, %v4962
    %v4965 = vunpack.c.l.s4 1966171168
    %v4966 = vunpack.c.0.s8 %v4965
    %v4967 = vlaneseq
    %v4968 = vshrl.u32 %v4967, 7
    %v4969 = vsub.s32 %v4966, %v4968
    %v4970 = vrot.slane %v4942, %v4969
    %v4971 = vcombine.low %v4949, %v4956
    %v4972 = vcombine.low %v4963, %v4970
    %v4974 = vunpack.c.l.s4 1966171168
    %v4975 = vunpack.c.0.s8 %v4974
    %v4976 = vlaneseq
    %v4977 = vshrl.u32 %v4976, 7
    %v4978 = vsub.s32 %v4975, %v4977
    %v4979 = vrot.slane %v4971, %v4978
    %v4981 = vunpack.c.l.s4 1966171168
    %v4982 = vunpack.c.0.s8 %v4981
    %v4983 = vlaneseq
    %v4984 = vshrl.u32 %v4983, 7
    %v4985 = vsub.s32 %v4982, %v4984
    %v4986 = vrot.slane %v4972, %v4985
    %v4987 = vcombine.low %v4979, %v4986
    %v4988 = vcombine.low %v4823, %v4829
    %v4989 = vcombine.low %v4835, %v4841
    %v4990 = vcombine.low %v4847, %v4853
    %v4991 = vcombine.low %v4859, %v4865
    %v4993 = vunpack.c.l.s4 1966171168
    %v4994 = vunpack.c.0.s8 %v4993
    %v4995 = vlaneseq
    %v4996 = vshrl.u32 %v4995, 7
    %v4997 = vsub.s32 %v4994, %v4996
    %v4998 = vrot.slane %v4988, %v4997
    %v5000 = vunpack.c.l.s4 1966171168
    %v5001 = vunpack.c.0.s8 %v5000
    %v5002 = vlaneseq
    %v5003 = vshrl.u32 %v5002, 7
    %v5004 = vsub.s32 %v5001, %v5003
    %v5005 = vrot.slane %v4989, %v5004
    %v5007 = vunpack.c.l.s4 1966171168
    %v5008 = vunpack.c.0.s8 %v5007
    %v5009 = vlaneseq
    %v5010 = vshrl.u32 %v5009, 7
    %v5011 = vsub.s32 %v5008, %v5010
    %v5012 = vrot.slane %v4990, %v5011
    %v5014 = vunpack.c.l.s4 1966171168
    %v5015 = vunpack.c.0.s8 %v5014
    %v5016 = vlaneseq
    %v5017 = vshrl.u32 %v5016, 7
    %v5018 = vsub.s32 %v5015, %v5017
    %v5019 = vrot.slane %v4991, %v5018
    %v5020 = vcombine.low %v4998, %v5005
    %v5021 = vcombine.low %v5012, %v5019
    %v5023 = vunpack.c.l.s4 1966171168
    %v5024 = vunpack.c.0.s8 %v5023
    %v5025 = vlaneseq
    %v5026 = vshrl.u32 %v5025, 7
    %v5027 = vsub.s32 %v5024, %v5026
    %v5028 = vrot.slane %v5020, %v5027
    %v5030 = vunpack.c.l.s4 1966171168
    %v5031 = vunpack.c.0.s8 %v5030
    %v5032 = vlaneseq
    %v5033 = vshrl.u32 %v5032, 7
    %v5034 = vsub.s32 %v5031, %v5033
    %v5035 = vrot.slane %v5021, %v5034
    %v5036 = vcombine.low %v5028, %v5035
    %v5040 = vadd.f32 %v4695, %v4938
    %v5041 = vadd.f32 %v4696, %v4987
    %v5042 = vadd.f32 %v4697, %v5036
    %5043 = vst [vmem:[#allocation3] sm:$0xff] %v5040
    %5044 = vst [vmem:[#allocation3 + $0x8] sm:$0xff] %v5041
    %5045 = vst [vmem:[#allocation3 + $0x10] sm:$0xff] %v5042
    %v5046 = vld [vmem:[#allocation4] sm:$0xff]
    %v5047 = vld [vmem:[#allocation4 + $0x8] sm:$0xff]
    %v5048 = vld [vmem:[#allocation4 + $0x10] sm:$0xff]
    %v5049 = vmul.f32 %v131, %v131
    %v5050 = vmul.f32 %v132, %v132
    %v5051 = vmul.f32 %v133, %v133
    %v5052 = vmul.f32 %v134, %v134
    %v5053 = vmul.f32 %v135, %v135
    %v5054 = vmul.f32 %v136, %v136
    %v5055 = vmul.f32 %v137, %v137
    %v5056 = vmul.f32 %v138, %v138
    %v5057 = vmul.f32 %v139, %v139
    %v5058 = vmul.f32 %v140, %v140
    %v5059 = vmul.f32 %v141, %v141
    %v5060 = vmul.f32 %v142, %v142
    %v5061 = vmul.f32 %v143, %v143
    %v5062 = vmul.f32 %v144, %v144
    %v5063 = vmul.f32 %v145, %v145
    %v5064 = vmul.f32 %v146, %v146
    %v5065 = vmul.f32 %v147, %v147
    %v5066 = vmul.f32 %v148, %v148
    %v5067 = vmul.f32 %v149, %v149
    %v5068 = vmul.f32 %v150, %v150
    %v5069 = vmul.f32 %v151, %v151
    %v5070 = vmul.f32 %v152, %v152
    %v5071 = vmul.f32 %v153, %v153
    %v5072 = vmul.f32 %v154, %v154
    %v5073 = vrot.slane %v5049, 4
    %v5074 = vadd.f32 %v5049, %v5073
    %v5075 = vrot.slane %v5074, 2
    %v5076 = vadd.f32 %v5074, %v5075
    %v5077 = vrot.slane %v5076, 1
    %v5078 = vadd.f32 %v5076, %v5077
    %v5079 = vrot.slane %v5050, 4
    %v5080 = vadd.f32 %v5050, %v5079
    %v5081 = vrot.slane %v5080, 2
    %v5082 = vadd.f32 %v5080, %v5081
    %v5083 = vrot.slane %v5082, 1
    %v5084 = vadd.f32 %v5082, %v5083
    %v5085 = vrot.slane %v5051, 4
    %v5086 = vadd.f32 %v5051, %v5085
    %v5087 = vrot.slane %v5086, 2
    %v5088 = vadd.f32 %v5086, %v5087
    %v5089 = vrot.slane %v5088, 1
    %v5090 = vadd.f32 %v5088, %v5089
    %v5091 = vrot.slane %v5052, 4
    %v5092 = vadd.f32 %v5052, %v5091
    %v5093 = vrot.slane %v5092, 2
    %v5094 = vadd.f32 %v5092, %v5093
    %v5095 = vrot.slane %v5094, 1
    %v5096 = vadd.f32 %v5094, %v5095
    %v5097 = vrot.slane %v5053, 4
    %v5098 = vadd.f32 %v5053, %v5097
    %v5099 = vrot.slane %v5098, 2
    %v5100 = vadd.f32 %v5098, %v5099
    %v5101 = vrot.slane %v5100, 1
    %v5102 = vadd.f32 %v5100, %v5101
    %v5103 = vrot.slane %v5054, 4
    %v5104 = vadd.f32 %v5054, %v5103
    %v5105 = vrot.slane %v5104, 2
    %v5106 = vadd.f32 %v5104, %v5105
    %v5107 = vrot.slane %v5106, 1
    %v5108 = vadd.f32 %v5106, %v5107
    %v5109 = vrot.slane %v5055, 4
    %v5110 = vadd.f32 %v5055, %v5109
    %v5111 = vrot.slane %v5110, 2
    %v5112 = vadd.f32 %v5110, %v5111
    %v5113 = vrot.slane %v5112, 1
    %v5114 = vadd.f32 %v5112, %v5113
    %v5115 = vrot.slane %v5056, 4
    %v5116 = vadd.f32 %v5056, %v5115
    %v5117 = vrot.slane %v5116, 2
    %v5118 = vadd.f32 %v5116, %v5117
    %v5119 = vrot.slane %v5118, 1
    %v5120 = vadd.f32 %v5118, %v5119
    %v5121 = vrot.slane %v5057, 4
    %v5122 = vadd.f32 %v5057, %v5121
    %v5123 = vrot.slane %v5122, 2
    %v5124 = vadd.f32 %v5122, %v5123
    %v5125 = vrot.slane %v5124, 1
    %v5126 = vadd.f32 %v5124, %v5125
    %v5127 = vrot.slane %v5058, 4
    %v5128 = vadd.f32 %v5058, %v5127
    %v5129 = vrot.slane %v5128, 2
    %v5130 = vadd.f32 %v5128, %v5129
    %v5131 = vrot.slane %v5130, 1
    %v5132 = vadd.f32 %v5130, %v5131
    %v5133 = vrot.slane %v5059, 4
    %v5134 = vadd.f32 %v5059, %v5133
    %v5135 = vrot.slane %v5134, 2
    %v5136 = vadd.f32 %v5134, %v5135
    %v5137 = vrot.slane %v5136, 1
    %v5138 = vadd.f32 %v5136, %v5137
    %v5139 = vrot.slane %v5060, 4
    %v5140 = vadd.f32 %v5060, %v5139
    %v5141 = vrot.slane %v5140, 2
    %v5142 = vadd.f32 %v5140, %v5141
    %v5143 = vrot.slane %v5142, 1
    %v5144 = vadd.f32 %v5142, %v5143
    %v5145 = vrot.slane %v5061, 4
    %v5146 = vadd.f32 %v5061, %v5145
    %v5147 = vrot.slane %v5146, 2
    %v5148 = vadd.f32 %v5146, %v5147
    %v5149 = vrot.slane %v5148, 1
    %v5150 = vadd.f32 %v5148, %v5149
    %v5151 = vrot.slane %v5062, 4
    %v5152 = vadd.f32 %v5062, %v5151
    %v5153 = vrot.slane %v5152, 2
    %v5154 = vadd.f32 %v5152, %v5153
    %v5155 = vrot.slane %v5154, 1
    %v5156 = vadd.f32 %v5154, %v5155
    %v5157 = vrot.slane %v5063, 4
    %v5158 = vadd.f32 %v5063, %v5157
    %v5159 = vrot.slane %v5158, 2
    %v5160 = vadd.f32 %v5158, %v5159
    %v5161 = vrot.slane %v5160, 1
    %v5162 = vadd.f32 %v5160, %v5161
    %v5163 = vrot.slane %v5064, 4
    %v5164 = vadd.f32 %v5064, %v5163
    %v5165 = vrot.slane %v5164, 2
    %v5166 = vadd.f32 %v5164, %v5165
    %v5167 = vrot.slane %v5166, 1
    %v5168 = vadd.f32 %v5166, %v5167
    %v5169 = vrot.slane %v5065, 4
    %v5170 = vadd.f32 %v5065, %v5169
    %v5171 = vrot.slane %v5170, 2
    %v5172 = vadd.f32 %v5170, %v5171
    %v5173 = vrot.slane %v5172, 1
    %v5174 = vadd.f32 %v5172, %v5173
    %v5175 = vrot.slane %v5066, 4
    %v5176 = vadd.f32 %v5066, %v5175
    %v5177 = vrot.slane %v5176, 2
    %v5178 = vadd.f32 %v5176, %v5177
    %v5179 = vrot.slane %v5178, 1
    %v5180 = vadd.f32 %v5178, %v5179
    %v5181 = vrot.slane %v5067, 4
    %v5182 = vadd.f32 %v5067, %v5181
    %v5183 = vrot.slane %v5182, 2
    %v5184 = vadd.f32 %v5182, %v5183
    %v5185 = vrot.slane %v5184, 1
    %v5186 = vadd.f32 %v5184, %v5185
    %v5187 = vrot.slane %v5068, 4
    %v5188 = vadd.f32 %v5068, %v5187
    %v5189 = vrot.slane %v5188, 2
    %v5190 = vadd.f32 %v5188, %v5189
    %v5191 = vrot.slane %v5190, 1
    %v5192 = vadd.f32 %v5190, %v5191
    %v5193 = vrot.slane %v5069, 4
    %v5194 = vadd.f32 %v5069, %v5193
    %v5195 = vrot.slane %v5194, 2
    %v5196 = vadd.f32 %v5194, %v5195
    %v5197 = vrot.slane %v5196, 1
    %v5198 = vadd.f32 %v5196, %v5197
    %v5199 = vrot.slane %v5070, 4
    %v5200 = vadd.f32 %v5070, %v5199
    %v5201 = vrot.slane %v5200, 2
    %v5202 = vadd.f32 %v5200, %v5201
    %v5203 = vrot.slane %v5202, 1
    %v5204 = vadd.f32 %v5202, %v5203
    %v5205 = vrot.slane %v5071, 4
    %v5206 = vadd.f32 %v5071, %v5205
    %v5207 = vrot.slane %v5206, 2
    %v5208 = vadd.f32 %v5206, %v5207
    %v5209 = vrot.slane %v5208, 1
    %v5210 = vadd.f32 %v5208, %v5209
    %v5211 = vrot.slane %v5072, 4
    %v5212 = vadd.f32 %v5072, %v5211
    %v5213 = vrot.slane %v5212, 2
    %v5214 = vadd.f32 %v5212, %v5213
    %v5215 = vrot.slane %v5214, 1
    %v5216 = vadd.f32 %v5214, %v5215
    %v5241 = vcombine.low %v5078, %v5084
    %v5242 = vcombine.low %v5090, %v5096
    %v5243 = vcombine.low %v5102, %v5108
    %v5244 = vcombine.low %v5114, %v5120
    %v5246 = vunpack.c.l.s4 1966171168
    %v5247 = vunpack.c.0.s8 %v5246
    %v5248 = vlaneseq
    %v5249 = vshrl.u32 %v5248, 7
    %v5250 = vsub.s32 %v5247, %v5249
    %v5251 = vrot.slane %v5241, %v5250
    %v5253 = vunpack.c.l.s4 1966171168
    %v5254 = vunpack.c.0.s8 %v5253
    %v5255 = vlaneseq
    %v5256 = vshrl.u32 %v5255, 7
    %v5257 = vsub.s32 %v5254, %v5256
    %v5258 = vrot.slane %v5242, %v5257
    %v5260 = vunpack.c.l.s4 1966171168
    %v5261 = vunpack.c.0.s8 %v5260
    %v5262 = vlaneseq
    %v5263 = vshrl.u32 %v5262, 7
    %v5264 = vsub.s32 %v5261, %v5263
    %v5265 = vrot.slane %v5243, %v5264
    %v5267 = vunpack.c.l.s4 1966171168
    %v5268 = vunpack.c.0.s8 %v5267
    %v5269 = vlaneseq
    %v5270 = vshrl.u32 %v5269, 7
    %v5271 = vsub.s32 %v5268, %v5270
    %v5272 = vrot.slane %v5244, %v5271
    %v5273 = vcombine.low %v5251, %v5258
    %v5274 = vcombine.low %v5265, %v5272
    %v5276 = vunpack.c.l.s4 1966171168
    %v5277 = vunpack.c.0.s8 %v5276
    %v5278 = vlaneseq
    %v5279 = vshrl.u32 %v5278, 7
    %v5280 = vsub.s32 %v5277, %v5279
    %v5281 = vrot.slane %v5273, %v5280
    %v5283 = vunpack.c.l.s4 1966171168
    %v5284 = vunpack.c.0.s8 %v5283
    %v5285 = vlaneseq
    %v5286 = vshrl.u32 %v5285, 7
    %v5287 = vsub.s32 %v5284, %v5286
    %v5288 = vrot.slane %v5274, %v5287
    %v5289 = vcombine.low %v5281, %v5288
    %v5290 = vcombine.low %v5126, %v5132
    %v5291 = vcombine.low %v5138, %v5144
    %v5292 = vcombine.low %v5150, %v5156
    %v5293 = vcombine.low %v5162, %v5168
    %v5295 = vunpack.c.l.s4 1966171168
    %v5296 = vunpack.c.0.s8 %v5295
    %v5297 = vlaneseq
    %v5298 = vshrl.u32 %v5297, 7
    %v5299 = vsub.s32 %v5296, %v5298
    %v5300 = vrot.slane %v5290, %v5299
    %v5302 = vunpack.c.l.s4 1966171168
    %v5303 = vunpack.c.0.s8 %v5302
    %v5304 = vlaneseq
    %v5305 = vshrl.u32 %v5304, 7
    %v5306 = vsub.s32 %v5303, %v5305
    %v5307 = vrot.slane %v5291, %v5306
    %v5309 = vunpack.c.l.s4 1966171168
    %v5310 = vunpack.c.0.s8 %v5309
    %v5311 = vlaneseq
    %v5312 = vshrl.u32 %v5311, 7
    %v5313 = vsub.s32 %v5310, %v5312
    %v5314 = vrot.slane %v5292, %v5313
    %v5316 = vunpack.c.l.s4 1966171168
    %v5317 = vunpack.c.0.s8 %v5316
    %v5318 = vlaneseq
    %v5319 = vshrl.u32 %v5318, 7
    %v5320 = vsub.s32 %v5317, %v5319
    %v5321 = vrot.slane %v5293, %v5320
    %v5322 = vcombine.low %v5300, %v5307
    %v5323 = vcombine.low %v5314, %v5321
    %v5325 = vunpack.c.l.s4 1966171168
    %v5326 = vunpack.c.0.s8 %v5325
    %v5327 = vlaneseq
    %v5328 = vshrl.u32 %v5327, 7
    %v5329 = vsub.s32 %v5326, %v5328
    %v5330 = vrot.slane %v5322, %v5329
    %v5332 = vunpack.c.l.s4 1966171168
    %v5333 = vunpack.c.0.s8 %v5332
    %v5334 = vlaneseq
    %v5335 = vshrl.u32 %v5334, 7
    %v5336 = vsub.s32 %v5333, %v5335
    %v5337 = vrot.slane %v5323, %v5336
    %v5338 = vcombine.low %v5330, %v5337
    %v5339 = vcombine.low %v5174, %v5180
    %v5340 = vcombine.low %v5186, %v5192
    %v5341 = vcombine.low %v5198, %v5204
    %v5342 = vcombine.low %v5210, %v5216
    %v5344 = vunpack.c.l.s4 1966171168
    %v5345 = vunpack.c.0.s8 %v5344
    %v5346 = vlaneseq
    %v5347 = vshrl.u32 %v5346, 7
    %v5348 = vsub.s32 %v5345, %v5347
    %v5349 = vrot.slane %v5339, %v5348
    %v5351 = vunpack.c.l.s4 1966171168
    %v5352 = vunpack.c.0.s8 %v5351
    %v5353 = vlaneseq
    %v5354 = vshrl.u32 %v5353, 7
    %v5355 = vsub.s32 %v5352, %v5354
    %v5356 = vrot.slane %v5340, %v5355
    %v5358 = vunpack.c.l.s4 1966171168
    %v5359 = vunpack.c.0.s8 %v5358
    %v5360 = vlaneseq
    %v5361 = vshrl.u32 %v5360, 7
    %v5362 = vsub.s32 %v5359, %v5361
    %v5363 = vrot.slane %v5341, %v5362
    %v5365 = vunpack.c.l.s4 1966171168
    %v5366 = vunpack.c.0.s8 %v5365
    %v5367 = vlaneseq
    %v5368 = vshrl.u32 %v5367, 7
    %v5369 = vsub.s32 %v5366, %v5368
    %v5370 = vrot.slane %v5342, %v5369
    %v5371 = vcombine.low %v5349, %v5356
    %v5372 = vcombine.low %v5363, %v5370
    %v5374 = vunpack.c.l.s4 1966171168
    %v5375 = vunpack.c.0.s8 %v5374
    %v5376 = vlaneseq
    %v5377 = vshrl.u32 %v5376, 7
    %v5378 = vsub.s32 %v5375, %v5377
    %v5379 = vrot.slane %v5371, %v5378
    %v5381 = vunpack.c.l.s4 1966171168
    %v5382 = vunpack.c.0.s8 %v5381
    %v5383 = vlaneseq
    %v5384 = vshrl.u32 %v5383, 7
    %v5385 = vsub.s32 %v5382, %v5384
    %v5386 = vrot.slane %v5372, %v5385
    %v5387 = vcombine.low %v5379, %v5386
    %v5391 = vadd.f32 %v5046, %v5289
    %v5392 = vadd.f32 %v5047, %v5338
    %v5393 = vadd.f32 %v5048, %v5387
    %5394 = vst [vmem:[#allocation4] sm:$0xff] %v5391
    %5395 = vst [vmem:[#allocation4 + $0x8] sm:$0xff] %v5392
    %5396 = vst [vmem:[#allocation4 + $0x10] sm:$0xff] %v5393
    %v5397 = vsub.f32 %v4297, %v131
    %v5398 = vsub.f32 %v4299, %v132
    %v5399 = vsub.f32 %v4301, %v133
    %v5400 = vsub.f32 %v4303, %v134
    %v5401 = vsub.f32 %v4305, %v135
    %v5402 = vsub.f32 %v4307, %v136
    %v5403 = vsub.f32 %v4309, %v137
    %v5404 = vsub.f32 %v4311, %v138
    %v5405 = vsub.f32 %v4313, %v139
    %v5406 = vsub.f32 %v4315, %v140
    %v5407 = vsub.f32 %v4317, %v141
    %v5408 = vsub.f32 %v4319, %v142
    %v5409 = vsub.f32 %v4321, %v143
    %v5410 = vsub.f32 %v4323, %v144
    %v5411 = vsub.f32 %v4325, %v145
    %v5412 = vsub.f32 %v4327, %v146
    %v5413 = vsub.f32 %v4329, %v147
    %v5414 = vsub.f32 %v4331, %v148
    %v5415 = vsub.f32 %v4333, %v149
    %v5416 = vsub.f32 %v4335, %v150
    %v5417 = vsub.f32 %v4337, %v151
    %v5418 = vsub.f32 %v4339, %v152
    %v5419 = vsub.f32 %v4341, %v153
    %v5420 = vsub.f32 %v4343, %v154
    %v5421 = vld [vmem:[#allocation5] sm:$0xff]
    %v5422 = vld [vmem:[#allocation5 + $0x8] sm:$0xff]
    %v5423 = vld [vmem:[#allocation5 + $0x10] sm:$0xff]
    %v5424 = vmul.f32 %v5397, %v5397
    %v5425 = vmul.f32 %v5398, %v5398
    %v5426 = vmul.f32 %v5399, %v5399
    %v5427 = vmul.f32 %v5400, %v5400
    %v5428 = vmul.f32 %v5401, %v5401
    %v5429 = vmul.f32 %v5402, %v5402
    %v5430 = vmul.f32 %v5403, %v5403
    %v5431 = vmul.f32 %v5404, %v5404
    %v5432 = vmul.f32 %v5405, %v5405
    %v5433 = vmul.f32 %v5406, %v5406
    %v5434 = vmul.f32 %v5407, %v5407
    %v5435 = vmul.f32 %v5408, %v5408
    %v5436 = vmul.f32 %v5409, %v5409
    %v5437 = vmul.f32 %v5410, %v5410
    %v5438 = vmul.f32 %v5411, %v5411
    %v5439 = vmul.f32 %v5412, %v5412
    %v5440 = vmul.f32 %v5413, %v5413
    %v5441 = vmul.f32 %v5414, %v5414
    %v5442 = vmul.f32 %v5415, %v5415
    %v5443 = vmul.f32 %v5416, %v5416
    %v5444 = vmul.f32 %v5417, %v5417
    %v5445 = vmul.f32 %v5418, %v5418
    %v5446 = vmul.f32 %v5419, %v5419
    %v5447 = vmul.f32 %v5420, %v5420
    %v5448 = vrot.slane %v5424, 4
    %v5449 = vadd.f32 %v5424, %v5448
    %v5450 = vrot.slane %v5449, 2
    %v5451 = vadd.f32 %v5449, %v5450
    %v5452 = vrot.slane %v5451, 1
    %v5453 = vadd.f32 %v5451, %v5452
    %v5454 = vrot.slane %v5425, 4
    %v5455 = vadd.f32 %v5425, %v5454
    %v5456 = vrot.slane %v5455, 2
    %v5457 = vadd.f32 %v5455, %v5456
    %v5458 = vrot.slane %v5457, 1
    %v5459 = vadd.f32 %v5457, %v5458
    %v5460 = vrot.slane %v5426, 4
    %v5461 = vadd.f32 %v5426, %v5460
    %v5462 = vrot.slane %v5461, 2
    %v5463 = vadd.f32 %v5461, %v5462
    %v5464 = vrot.slane %v5463, 1
    %v5465 = vadd.f32 %v5463, %v5464
    %v5466 = vrot.slane %v5427, 4
    %v5467 = vadd.f32 %v5427, %v5466
    %v5468 = vrot.slane %v5467, 2
    %v5469 = vadd.f32 %v5467, %v5468
    %v5470 = vrot.slane %v5469, 1
    %v5471 = vadd.f32 %v5469, %v5470
    %v5472 = vrot.slane %v5428, 4
    %v5473 = vadd.f32 %v5428, %v5472
    %v5474 = vrot.slane %v5473, 2
    %v5475 = vadd.f32 %v5473, %v5474
    %v5476 = vrot.slane %v5475, 1
    %v5477 = vadd.f32 %v5475, %v5476
    %v5478 = vrot.slane %v5429, 4
    %v5479 = vadd.f32 %v5429, %v5478
    %v5480 = vrot.slane %v5479, 2
    %v5481 = vadd.f32 %v5479, %v5480
    %v5482 = vrot.slane %v5481, 1
    %v5483 = vadd.f32 %v5481, %v5482
    %v5484 = vrot.slane %v5430, 4
    %v5485 = vadd.f32 %v5430, %v5484
    %v5486 = vrot.slane %v5485, 2
    %v5487 = vadd.f32 %v5485, %v5486
    %v5488 = vrot.slane %v5487, 1
    %v5489 = vadd.f32 %v5487, %v5488
    %v5490 = vrot.slane %v5431, 4
    %v5491 = vadd.f32 %v5431, %v5490
    %v5492 = vrot.slane %v5491, 2
    %v5493 = vadd.f32 %v5491, %v5492
    %v5494 = vrot.slane %v5493, 1
    %v5495 = vadd.f32 %v5493, %v5494
    %v5496 = vrot.slane %v5432, 4
    %v5497 = vadd.f32 %v5432, %v5496
    %v5498 = vrot.slane %v5497, 2
    %v5499 = vadd.f32 %v5497, %v5498
    %v5500 = vrot.slane %v5499, 1
    %v5501 = vadd.f32 %v5499, %v5500
    %v5502 = vrot.slane %v5433, 4
    %v5503 = vadd.f32 %v5433, %v5502
    %v5504 = vrot.slane %v5503, 2
    %v5505 = vadd.f32 %v5503, %v5504
    %v5506 = vrot.slane %v5505, 1
    %v5507 = vadd.f32 %v5505, %v5506
    %v5508 = vrot.slane %v5434, 4
    %v5509 = vadd.f32 %v5434, %v5508
    %v5510 = vrot.slane %v5509, 2
    %v5511 = vadd.f32 %v5509, %v5510
    %v5512 = vrot.slane %v5511, 1
    %v5513 = vadd.f32 %v5511, %v5512
    %v5514 = vrot.slane %v5435, 4
    %v5515 = vadd.f32 %v5435, %v5514
    %v5516 = vrot.slane %v5515, 2
    %v5517 = vadd.f32 %v5515, %v5516
    %v5518 = vrot.slane %v5517, 1
    %v5519 = vadd.f32 %v5517, %v5518
    %v5520 = vrot.slane %v5436, 4
    %v5521 = vadd.f32 %v5436, %v5520
    %v5522 = vrot.slane %v5521, 2
    %v5523 = vadd.f32 %v5521, %v5522
    %v5524 = vrot.slane %v5523, 1
    %v5525 = vadd.f32 %v5523, %v5524
    %v5526 = vrot.slane %v5437, 4
    %v5527 = vadd.f32 %v5437, %v5526
    %v5528 = vrot.slane %v5527, 2
    %v5529 = vadd.f32 %v5527, %v5528
    %v5530 = vrot.slane %v5529, 1
    %v5531 = vadd.f32 %v5529, %v5530
    %v5532 = vrot.slane %v5438, 4
    %v5533 = vadd.f32 %v5438, %v5532
    %v5534 = vrot.slane %v5533, 2
    %v5535 = vadd.f32 %v5533, %v5534
    %v5536 = vrot.slane %v5535, 1
    %v5537 = vadd.f32 %v5535, %v5536
    %v5538 = vrot.slane %v5439, 4
    %v5539 = vadd.f32 %v5439, %v5538
    %v5540 = vrot.slane %v5539, 2
    %v5541 = vadd.f32 %v5539, %v5540
    %v5542 = vrot.slane %v5541, 1
    %v5543 = vadd.f32 %v5541, %v5542
    %v5544 = vrot.slane %v5440, 4
    %v5545 = vadd.f32 %v5440, %v5544
    %v5546 = vrot.slane %v5545, 2
    %v5547 = vadd.f32 %v5545, %v5546
    %v5548 = vrot.slane %v5547, 1
    %v5549 = vadd.f32 %v5547, %v5548
    %v5550 = vrot.slane %v5441, 4
    %v5551 = vadd.f32 %v5441, %v5550
    %v5552 = vrot.slane %v5551, 2
    %v5553 = vadd.f32 %v5551, %v5552
    %v5554 = vrot.slane %v5553, 1
    %v5555 = vadd.f32 %v5553, %v5554
    %v5556 = vrot.slane %v5442, 4
    %v5557 = vadd.f32 %v5442, %v5556
    %v5558 = vrot.slane %v5557, 2
    %v5559 = vadd.f32 %v5557, %v5558
    %v5560 = vrot.slane %v5559, 1
    %v5561 = vadd.f32 %v5559, %v5560
    %v5562 = vrot.slane %v5443, 4
    %v5563 = vadd.f32 %v5443, %v5562
    %v5564 = vrot.slane %v5563, 2
    %v5565 = vadd.f32 %v5563, %v5564
    %v5566 = vrot.slane %v5565, 1
    %v5567 = vadd.f32 %v5565, %v5566
    %v5568 = vrot.slane %v5444, 4
    %v5569 = vadd.f32 %v5444, %v5568
    %v5570 = vrot.slane %v5569, 2
    %v5571 = vadd.f32 %v5569, %v5570
    %v5572 = vrot.slane %v5571, 1
    %v5573 = vadd.f32 %v5571, %v5572
    %v5574 = vrot.slane %v5445, 4
    %v5575 = vadd.f32 %v5445, %v5574
    %v5576 = vrot.slane %v5575, 2
    %v5577 = vadd.f32 %v5575, %v5576
    %v5578 = vrot.slane %v5577, 1
    %v5579 = vadd.f32 %v5577, %v5578
    %v5580 = vrot.slane %v5446, 4
    %v5581 = vadd.f32 %v5446, %v5580
    %v5582 = vrot.slane %v5581, 2
    %v5583 = vadd.f32 %v5581, %v5582
    %v5584 = vrot.slane %v5583, 1
    %v5585 = vadd.f32 %v5583, %v5584
    %v5586 = vrot.slane %v5447, 4
    %v5587 = vadd.f32 %v5447, %v5586
    %v5588 = vrot.slane %v5587, 2
    %v5589 = vadd.f32 %v5587, %v5588
    %v5590 = vrot.slane %v5589, 1
    %v5591 = vadd.f32 %v5589, %v5590
    %v5616 = vcombine.low %v5453, %v5459
    %v5617 = vcombine.low %v5465, %v5471
    %v5618 = vcombine.low %v5477, %v5483
    %v5619 = vcombine.low %v5489, %v5495
    %v5621 = vunpack.c.l.s4 1966171168
    %v5622 = vunpack.c.0.s8 %v5621
    %v5623 = vlaneseq
    %v5624 = vshrl.u32 %v5623, 7
    %v5625 = vsub.s32 %v5622, %v5624
    %v5626 = vrot.slane %v5616, %v5625
    %v5628 = vunpack.c.l.s4 1966171168
    %v5629 = vunpack.c.0.s8 %v5628
    %v5630 = vlaneseq
    %v5631 = vshrl.u32 %v5630, 7
    %v5632 = vsub.s32 %v5629, %v5631
    %v5633 = vrot.slane %v5617, %v5632
    %v5635 = vunpack.c.l.s4 1966171168
    %v5636 = vunpack.c.0.s8 %v5635
    %v5637 = vlaneseq
    %v5638 = vshrl.u32 %v5637, 7
    %v5639 = vsub.s32 %v5636, %v5638
    %v5640 = vrot.slane %v5618, %v5639
    %v5642 = vunpack.c.l.s4 1966171168
    %v5643 = vunpack.c.0.s8 %v5642
    %v5644 = vlaneseq
    %v5645 = vshrl.u32 %v5644, 7
    %v5646 = vsub.s32 %v5643, %v5645
    %v5647 = vrot.slane %v5619, %v5646
    %v5648 = vcombine.low %v5626, %v5633
    %v5649 = vcombine.low %v5640, %v5647
    %v5651 = vunpack.c.l.s4 1966171168
    %v5652 = vunpack.c.0.s8 %v5651
    %v5653 = vlaneseq
    %v5654 = vshrl.u32 %v5653, 7
    %v5655 = vsub.s32 %v5652, %v5654
    %v5656 = vrot.slane %v5648, %v5655
    %v5658 = vunpack.c.l.s4 1966171168
    %v5659 = vunpack.c.0.s8 %v5658
    %v5660 = vlaneseq
    %v5661 = vshrl.u32 %v5660, 7
    %v5662 = vsub.s32 %v5659, %v5661
    %v5663 = vrot.slane %v5649, %v5662
    %v5664 = vcombine.low %v5656, %v5663
    %v5665 = vcombine.low %v5501, %v5507
    %v5666 = vcombine.low %v5513, %v5519
    %v5667 = vcombine.low %v5525, %v5531
    %v5668 = vcombine.low %v5537, %v5543
    %v5670 = vunpack.c.l.s4 1966171168
    %v5671 = vunpack.c.0.s8 %v5670
    %v5672 = vlaneseq
    %v5673 = vshrl.u32 %v5672, 7
    %v5674 = vsub.s32 %v5671, %v5673
    %v5675 = vrot.slane %v5665, %v5674
    %v5677 = vunpack.c.l.s4 1966171168
    %v5678 = vunpack.c.0.s8 %v5677
    %v5679 = vlaneseq
    %v5680 = vshrl.u32 %v5679, 7
    %v5681 = vsub.s32 %v5678, %v5680
    %v5682 = vrot.slane %v5666, %v5681
    %v5684 = vunpack.c.l.s4 1966171168
    %v5685 = vunpack.c.0.s8 %v5684
    %v5686 = vlaneseq
    %v5687 = vshrl.u32 %v5686, 7
    %v5688 = vsub.s32 %v5685, %v5687
    %v5689 = vrot.slane %v5667, %v5688
    %v5691 = vunpack.c.l.s4 1966171168
    %v5692 = vunpack.c.0.s8 %v5691
    %v5693 = vlaneseq
    %v5694 = vshrl.u32 %v5693, 7
    %v5695 = vsub.s32 %v5692, %v5694
    %v5696 = vrot.slane %v5668, %v5695
    %v5697 = vcombine.low %v5675, %v5682
    %v5698 = vcombine.low %v5689, %v5696
    %v5700 = vunpack.c.l.s4 1966171168
    %v5701 = vunpack.c.0.s8 %v5700
    %v5702 = vlaneseq
    %v5703 = vshrl.u32 %v5702, 7
    %v5704 = vsub.s32 %v5701, %v5703
    %v5705 = vrot.slane %v5697, %v5704
    %v5707 = vunpack.c.l.s4 1966171168
    %v5708 = vunpack.c.0.s8 %v5707
    %v5709 = vlaneseq
    %v5710 = vshrl.u32 %v5709, 7
    %v5711 = vsub.s32 %v5708, %v5710
    %v5712 = vrot.slane %v5698, %v5711
    %v5713 = vcombine.low %v5705, %v5712
    %v5714 = vcombine.low %v5549, %v5555
    %v5715 = vcombine.low %v5561, %v5567
    %v5716 = vcombine.low %v5573, %v5579
    %v5717 = vcombine.low %v5585, %v5591
    %v5719 = vunpack.c.l.s4 1966171168
    %v5720 = vunpack.c.0.s8 %v5719
    %v5721 = vlaneseq
    %v5722 = vshrl.u32 %v5721, 7
    %v5723 = vsub.s32 %v5720, %v5722
    %v5724 = vrot.slane %v5714, %v5723
    %v5726 = vunpack.c.l.s4 1966171168
    %v5727 = vunpack.c.0.s8 %v5726
    %v5728 = vlaneseq
    %v5729 = vshrl.u32 %v5728, 7
    %v5730 = vsub.s32 %v5727, %v5729
    %v5731 = vrot.slane %v5715, %v5730
    %v5733 = vunpack.c.l.s4 1966171168
    %v5734 = vunpack.c.0.s8 %v5733
    %v5735 = vlaneseq
    %v5736 = vshrl.u32 %v5735, 7
    %v5737 = vsub.s32 %v5734, %v5736
    %v5738 = vrot.slane %v5716, %v5737
    %v5740 = vunpack.c.l.s4 1966171168
    %v5741 = vunpack.c.0.s8 %v5740
    %v5742 = vlaneseq
    %v5743 = vshrl.u32 %v5742, 7
    %v5744 = vsub.s32 %v5741, %v5743
    %v5745 = vrot.slane %v5717, %v5744
    %v5746 = vcombine.low %v5724, %v5731
    %v5747 = vcombine.low %v5738, %v5745
    %v5749 = vunpack.c.l.s4 1966171168
    %v5750 = vunpack.c.0.s8 %v5749
    %v5751 = vlaneseq
    %v5752 = vshrl.u32 %v5751, 7
    %v5753 = vsub.s32 %v5750, %v5752
    %v5754 = vrot.slane %v5746, %v5753
    %v5756 = vunpack.c.l.s4 1966171168
    %v5757 = vunpack.c.0.s8 %v5756
    %v5758 = vlaneseq
    %v5759 = vshrl.u32 %v5758, 7
    %v5760 = vsub.s32 %v5757, %v5759
    %v5761 = vrot.slane %v5747, %v5760
    %v5762 = vcombine.low %v5754, %v5761
    %v5766 = vadd.f32 %v5421, %v5664
    %v5767 = vadd.f32 %v5422, %v5713
    %v5768 = vadd.f32 %v5423, %v5762
    %5769 = vst [vmem:[#allocation5] sm:$0xff] %v5766
    %5770 = vst [vmem:[#allocation5 + $0x8] sm:$0xff] %v5767
    %5771 = vst [vmem:[#allocation5 + $0x10] sm:$0xff] %v5768
    // Predicated region
    $region66: #{train_forward.1} parent=1 // pred_check
      %p5772 = pneg %p115
    $region67: #{train_forward.1} parent=1 // pred_check_branch
      %5774 = sbr.rel (%p5772) target = $region69
    $region68: #{train_forward.1} parent=1 // pred_region
      %v5775 = vld [vmem:[#allocation3] sm:$0xff]
      %v5776 = vld [vmem:[#allocation3 + $0x8] sm:$0xff]
      %v5777 = vld [vmem:[#allocation3 + $0x10] sm:$0xff]
      %v5778 = vrsqrt.pop %v5775
      %v5779 = vmul.f32 %v5775, %v5778
      %vm5780 = vcmp.eq.f32.partialorder %v5775, inf
      %v5781 = vsel %vm5780, %v5775, %v5779
      %vm5782 = vcmp.eq.f32.partialorder %v5775, 0.0
      %v5783 = vand.u32 %v5775, 2147483648
      %v5784 = vsel %vm5782, %v5783, %v5781
      %v5785 = vrsqrt.pop %v5776
      %v5786 = vmul.f32 %v5776, %v5785
      %vm5787 = vcmp.eq.f32.partialorder %v5776, inf
      %v5788 = vsel %vm5787, %v5776, %v5786
      %vm5789 = vcmp.eq.f32.partialorder %v5776, 0.0
      %v5790 = vand.u32 %v5776, 2147483648
      %v5791 = vsel %vm5789, %v5790, %v5788
      %v5792 = vrsqrt.pop %v5777
      %v5793 = vmul.f32 %v5777, %v5792
      %vm5794 = vcmp.eq.f32.partialorder %v5777, inf
      %v5795 = vsel %vm5794, %v5777, %v5793
      %vm5796 = vcmp.eq.f32.partialorder %v5777, 0.0
      %v5797 = vand.u32 %v5777, 2147483648
      %v5798 = vsel %vm5796, %v5797, %v5795
      %v5799 = vmax.f32 %v5784, 1e-08
      %v5800 = vmax.f32 %v5791, 1e-08
      %v5801 = vmax.f32 %v5798, 1e-08
      %v5802 = vld [vmem:[#allocation4] sm:$0xff]
      %v5803 = vld [vmem:[#allocation4 + $0x8] sm:$0xff]
      %v5804 = vld [vmem:[#allocation4 + $0x10] sm:$0xff]
      %v5805 = vrsqrt.pop %v5802
      %v5806 = vmul.f32 %v5802, %v5805
      %vm5807 = vcmp.eq.f32.partialorder %v5802, inf
      %v5808 = vsel %vm5807, %v5802, %v5806
      %vm5809 = vcmp.eq.f32.partialorder %v5802, 0.0
      %v5810 = vand.u32 %v5802, 2147483648
      %v5811 = vsel %vm5809, %v5810, %v5808
      %v5812 = vrsqrt.pop %v5803
      %v5813 = vmul.f32 %v5803, %v5812
      %vm5814 = vcmp.eq.f32.partialorder %v5803, inf
      %v5815 = vsel %vm5814, %v5803, %v5813
      %vm5816 = vcmp.eq.f32.partialorder %v5803, 0.0
      %v5817 = vand.u32 %v5803, 2147483648
      %v5818 = vsel %vm5816, %v5817, %v5815
      %v5819 = vrsqrt.pop %v5804
      %v5820 = vmul.f32 %v5804, %v5819
      %vm5821 = vcmp.eq.f32.partialorder %v5804, inf
      %v5822 = vsel %vm5821, %v5804, %v5820
      %vm5823 = vcmp.eq.f32.partialorder %v5804, 0.0
      %v5824 = vand.u32 %v5804, 2147483648
      %v5825 = vsel %vm5823, %v5824, %v5822
      %v5826 = vmax.f32 %v5811, 1e-08
      %v5827 = vmax.f32 %v5818, 1e-08
      %v5828 = vmax.f32 %v5825, 1e-08
      %v5829 = vld [vmem:[#allocation2] sm:$0xff]
      %v5830 = vld [vmem:[#allocation2 + $0x8] sm:$0xff]
      %v5831 = vld [vmem:[#allocation2 + $0x10] sm:$0xff]
      %v5832 = vmul.f32 %v5799, %v5826
      %v5833 = vmul.f32 %v5800, %v5827
      %v5834 = vmul.f32 %v5801, %v5828
      %v5835 = vrcp.pop %v5832
      %v5836 = vmul.f32 %v5829, %v5835
      %v5837 = vrcp.pop %v5833
      %v5838 = vmul.f32 %v5830, %v5837
      %v5839 = vrcp.pop %v5834
      %v5840 = vmul.f32 %v5831, %v5839
      %v5841 = vsub.f32 1.0, %v5836
      %v5842 = vsub.f32 1.0, %v5838
      %v5843 = vsub.f32 1.0, %v5840
      %5844 = vst [vmem:[#allocation18] sm:$0xff] %v5841
      %5845 = vst [vmem:[#allocation18 + $0x8] sm:$0xff] %v5842
      %5846 = vst [vmem:[#allocation18 + $0x10] sm:$0xff] %v5843
      %v5847 = vld [vmem:[#allocation5] sm:$0xff]
      %v5848 = vld [vmem:[#allocation5 + $0x8] sm:$0xff]
      %v5849 = vld [vmem:[#allocation5 + $0x10] sm:$0xff]
      %v5853 = vlaneseq
      %v5854 = vshrl.u32 %v5853, 7
      %v5855 = vsub.s32 0, %v5854
      %v5856 = vrot.slane %v5847, %v5855
      %v5857 = vlaneseq
      %v5858 = vshrl.u32 %v5857, 7
      %v5859 = vsub.s32 1, %v5858
      %v5860 = vrot.slane %v5847, %v5859
      %v5861 = vlaneseq
      %v5862 = vshrl.u32 %v5861, 7
      %v5863 = vsub.s32 2, %v5862
      %v5864 = vrot.slane %v5847, %v5863
      %v5865 = vlaneseq
      %v5866 = vshrl.u32 %v5865, 7
      %v5867 = vsub.s32 3, %v5866
      %v5868 = vrot.slane %v5847, %v5867
      %v5869 = vlaneseq
      %v5870 = vshrl.u32 %v5869, 7
      %v5871 = vsub.s32 4, %v5870
      %v5872 = vrot.slane %v5847, %v5871
      %v5873 = vlaneseq
      %v5874 = vshrl.u32 %v5873, 7
      %v5875 = vsub.s32 5, %v5874
      %v5876 = vrot.slane %v5847, %v5875
      %v5877 = vlaneseq
      %v5878 = vshrl.u32 %v5877, 7
      %v5879 = vsub.s32 6, %v5878
      %v5880 = vrot.slane %v5847, %v5879
      %v5881 = vlaneseq
      %v5882 = vshrl.u32 %v5881, 7
      %v5883 = vsub.s32 7, %v5882
      %v5884 = vrot.slane %v5847, %v5883
      %v5885 = vlaneseq
      %v5886 = vshrl.u32 %v5885, 7
      %v5887 = vsub.s32 0, %v5886
      %v5888 = vrot.slane %v5848, %v5887
      %v5889 = vlaneseq
      %v5890 = vshrl.u32 %v5889, 7
      %v5891 = vsub.s32 1, %v5890
      %v5892 = vrot.slane %v5848, %v5891
      %v5893 = vlaneseq
      %v5894 = vshrl.u32 %v5893, 7
      %v5895 = vsub.s32 2, %v5894
      %v5896 = vrot.slane %v5848, %v5895
      %v5897 = vlaneseq
      %v5898 = vshrl.u32 %v5897, 7
      %v5899 = vsub.s32 3, %v5898
      %v5900 = vrot.slane %v5848, %v5899
      %v5901 = vlaneseq
      %v5902 = vshrl.u32 %v5901, 7
      %v5903 = vsub.s32 4, %v5902
      %v5904 = vrot.slane %v5848, %v5903
      %v5905 = vlaneseq
      %v5906 = vshrl.u32 %v5905, 7
      %v5907 = vsub.s32 5, %v5906
      %v5908 = vrot.slane %v5848, %v5907
      %v5909 = vlaneseq
      %v5910 = vshrl.u32 %v5909, 7
      %v5911 = vsub.s32 6, %v5910
      %v5912 = vrot.slane %v5848, %v5911
      %v5913 = vlaneseq
      %v5914 = vshrl.u32 %v5913, 7
      %v5915 = vsub.s32 7, %v5914
      %v5916 = vrot.slane %v5848, %v5915
      %v5917 = vlaneseq
      %v5918 = vshrl.u32 %v5917, 7
      %v5919 = vsub.s32 0, %v5918
      %v5920 = vrot.slane %v5849, %v5919
      %v5921 = vlaneseq
      %v5922 = vshrl.u32 %v5921, 7
      %v5923 = vsub.s32 1, %v5922
      %v5924 = vrot.slane %v5849, %v5923
      %v5925 = vlaneseq
      %v5926 = vshrl.u32 %v5925, 7
      %v5927 = vsub.s32 2, %v5926
      %v5928 = vrot.slane %v5849, %v5927
      %v5929 = vlaneseq
      %v5930 = vshrl.u32 %v5929, 7
      %v5931 = vsub.s32 3, %v5930
      %v5932 = vrot.slane %v5849, %v5931
      %v5933 = vlaneseq
      %v5934 = vshrl.u32 %v5933, 7
      %v5935 = vsub.s32 4, %v5934
      %v5936 = vrot.slane %v5849, %v5935
      %v5937 = vlaneseq
      %v5938 = vshrl.u32 %v5937, 7
      %v5939 = vsub.s32 5, %v5938
      %v5940 = vrot.slane %v5849, %v5939
      %v5941 = vlaneseq
      %v5942 = vshrl.u32 %v5941, 7
      %v5943 = vsub.s32 6, %v5942
      %v5944 = vrot.slane %v5849, %v5943
      %v5945 = vlaneseq
      %v5946 = vshrl.u32 %v5945, 7
      %v5947 = vsub.s32 7, %v5946
      %v5948 = vrot.slane %v5849, %v5947
      %vm5973 = vcmask 1040384
      %v5974 = vsel %vm5973, %v5856, 0.0
      %v5975 = vsel %vm5973, %v5860, 0.0
      %v5976 = vadd.f32 %v5974, %v5975
      %v5977 = vsel %vm5973, %v5864, 0.0
      %v5978 = vadd.f32 %v5976, %v5977
      %v5979 = vsel %vm5973, %v5868, 0.0
      %v5980 = vadd.f32 %v5978, %v5979
      %v5981 = vsel %vm5973, %v5872, 0.0
      %v5982 = vadd.f32 %v5980, %v5981
      %v5983 = vsel %vm5973, %v5876, 0.0
      %v5984 = vadd.f32 %v5982, %v5983
      %v5985 = vsel %vm5973, %v5880, 0.0
      %v5986 = vadd.f32 %v5984, %v5985
      %v5987 = vsel %vm5973, %v5884, 0.0
      %v5988 = vadd.f32 %v5986, %v5987
      %v5989 = vsel %vm5973, %v5888, 0.0
      %v5990 = vadd.f32 %v5988, %v5989
      %v5991 = vsel %vm5973, %v5892, 0.0
      %v5992 = vadd.f32 %v5990, %v5991
      %v5993 = vsel %vm5973, %v5896, 0.0
      %v5994 = vadd.f32 %v5992, %v5993
      %v5995 = vsel %vm5973, %v5900, 0.0
      %v5996 = vadd.f32 %v5994, %v5995
      %v5997 = vsel %vm5973, %v5904, 0.0
      %v5998 = vadd.f32 %v5996, %v5997
      %v5999 = vsel %vm5973, %v5908, 0.0
      %v6000 = vadd.f32 %v5998, %v5999
      %v6001 = vsel %vm5973, %v5912, 0.0
      %v6002 = vadd.f32 %v6000, %v6001
      %v6003 = vsel %vm5973, %v5916, 0.0
      %v6004 = vadd.f32 %v6002, %v6003
      %v6005 = vsel %vm5973, %v5920, 0.0
      %v6006 = vadd.f32 %v6004, %v6005
      %v6007 = vsel %vm5973, %v5924, 0.0
      %v6008 = vadd.f32 %v6006, %v6007
      %v6009 = vsel %vm5973, %v5928, 0.0
      %v6010 = vadd.f32 %v6008, %v6009
      %v6011 = vsel %vm5973, %v5932, 0.0
      %v6012 = vadd.f32 %v6010, %v6011
      %v6013 = vsel %vm5973, %v5936, 0.0
      %v6014 = vadd.f32 %v6012, %v6013
      %v6015 = vsel %vm5973, %v5940, 0.0
      %v6016 = vadd.f32 %v6014, %v6015
      %v6017 = vsel %vm5973, %v5944, 0.0
      %v6018 = vadd.f32 %v6016, %v6017
      %v6019 = vsel %vm5973, %v5948, 0.0
      %v6020 = vadd.f32 %v6018, %v6019
      %6021 = vadd.xlane.f32.xlu0 %v6020
      %v6022 = vpop.xlane.xlu0 %6021
      %s6023 = vtos %v6022
      %s6024 = smul.f32 %s6023, 4.0690105e-05
      %s6025 = scalar_lea.smem [#allocation19], 0
      %6026 = sst [smem:[%s6025]] %s6024
    $region69: #{train_forward.1} parent=1 // pred_fallthru
      _
    // Predicated region
    $region70: #{train_forward.1} parent=1 // pred_check
      _
    $region71: #{train_forward.1} parent=1 // pred_check_branch
      %6028 = sbr.rel (0) target = $region73
    $region72: #{train_forward.1} parent=1 // pred_region
      %s6030 = ssub.s32 384, 384
      %6031 = vsyncadd [#allocation8], %s6030
      %s6033 = sshll.u32 [#allocation18], 4
      %s6034 = int_to_ptr.vmem [resolvable:$true] %s6033
      %6036 = dma.vmem_to_hbm [thread:$0]  %s6034, 384, %s9, [#allocation8]
    $region73: #{train_forward.1} parent=1 // pred_fallthru
      _
    // Predicated region
    $region74: #{train_forward.1} parent=1 // pred_check
      _
    $region75: #{train_forward.1} parent=1 // pred_check_branch
      %6038 = sbr.rel (0) target = $region77
    $region76: #{train_forward.1} parent=1 // pred_region
      %s6040 = ssub.s32 16, 16
      %6041 = vsyncadd [#allocation9], %s6040
      %6044 = dma.smem_to_hbm [#allocation19], 16, %s10, [#allocation9]
    $region77: #{train_forward.1} parent=1 // pred_fallthru
      _
    // Predicated region
    $region78: #{train_forward.1} parent=1 // pred_check
      _
    $region79: #{train_forward.1} parent=1 // pred_check_branch
      %6046 = sbr.rel (0) target = $region81
    $region80: #{train_forward.1} parent=1 // pred_region
      %6047 = dma.done [#allocation8], 384
    $region81: #{train_forward.1} parent=1 // pred_fallthru
      _
    // Predicated region
    $region82: #{train_forward.1} parent=1 // pred_check
      _
    $region83: #{train_forward.1} parent=1 // pred_check_branch
      %6049 = sbr.rel (0) target = $region85
    $region84: #{train_forward.1} parent=1 // pred_region
      %6050 = dma.done [#allocation9], 16
    $region85: #{train_forward.1} parent=1 // pred_fallthru
      _
    %6051 = sfence
    %6052 = vsyncpa [#allocation7], 1
    %6053 = vsyncpa [#allocation11], 1
    %6054 = vsyncpa [#allocation14], 1
    %6055 = vsyncpa [#allocation17], 1
    %6056 = vsyncpa [#allocation8], 1
    %6057 = vsyncpa [#allocation9], 1

</llo_original>
